<compile_context>
chip_gen: v6e
topology: v6e:2x2x1
jax: 0.10.0
libtpu: 0.0.40
codegen_flags: <defaults>
</compile_context>

<pallas_src>
import jax
import jax.numpy as jnp
from jax.experimental import pallas as pl
from jax.experimental.pallas import tpu as pltpu
import numpy as np


# ----------------------------------------------------------------------------
# Pallas kernel: entire decoder recurrence in one invocation (no grid).
# ----------------------------------------------------------------------------
def decoder_kernel(ep_ref, encg_ref, mg_ref, embg_ref,
                   wdec_ref, vw_ref, whh_ref, bg_ref, wfc_ref, bfc_ref,
                   out_ref):
    T = embg_ref.shape[0]
    B = mg_ref.shape[0]
    H = wdec_ref.shape[0]

    h = jnp.zeros((B, H), jnp.float32)
    c = jnp.zeros((B, H), jnp.float32)
    hs = []

    # T is small & static -> fully unroll; the t == 0 mean-context special
    # case is resolved at trace time.
    for t in range(T):
        if t == 0:
            # hidden is None -> context = encoder_out.mean(1); its gate
            # contribution (mean_ctx @ W_ih[E:]) is precomputed in the wrapper.
            ctx_g = mg_ref[...]                                        # (B, 4H)
        else:
            # additive attention against the previous hidden state
            dp = jnp.dot(h, wdec_ref[...],
                         preferred_element_type=jnp.float32)           # (B, H)
            tv = jnp.tanh(ep_ref[...] + dp[:, None, :])                # (B, S, H)
            scores = jnp.sum(tv * vw_ref[...][None, :, :], axis=-1)    # (B, S)
            scores = scores - jnp.max(scores, axis=-1, keepdims=True)
            e = jnp.exp(scores)
            attn = e * pl.reciprocal(jnp.sum(e, axis=-1, keepdims=True))
            # context contribution to the gates, re-associated:
            #   attn @ (encoder_out @ W_ih[E:])  -- S-deep MXU contraction.
            cg3 = jnp.einsum("bqs,bsg->bqg", attn[:, None, :], encg_ref[...],
                             preferred_element_type=jnp.float32)       # (B, 1, 4H)
            ctx_g = jnp.sum(cg3, axis=1)     # layout-safe squeeze of unit dim

        # LSTM gates: embedding contribution precomputed per step outside the
        # kernel; recurrent term is a small (B,H)x(H,4H) dot.
        gates = (embg_ref[t] + ctx_g
                 + jnp.dot(h, whh_ref[...], preferred_element_type=jnp.float32)
                 + bg_ref[...])                                        # (B, 4H)
        sig = jax.nn.sigmoid(gates)              # full-width EUP op
        g_g = jnp.tanh(gates[:, 2 * H:3 * H])
        i_g = sig[:, 0 * H:1 * H]
        f_g = sig[:, 1 * H:2 * H]
        o_g = sig[:, 3 * H:4 * H]
        c = f_g * c + i_g * g_g
        h = o_g * jnp.tanh(c)
        hs.append(h)

    # Batched vocab projection: one (T*B, H) x (H, V) dot + one store,
    # pulled off the serial recurrence.
    hs2 = jnp.concatenate(hs, axis=0)                                  # (T*B, H)
    out_ref[...] = (jnp.dot(hs2, wfc_ref[...],
                            preferred_element_type=jnp.float32) + bfc_ref[...])


# ----------------------------------------------------------------------------
# Wrapper: hoist one-time (non-recurrent) work into XLA, recurrence in Pallas.
# ----------------------------------------------------------------------------
def enhanced_rnn_forward(params, encoder_out, captions):
    B, S, D = encoder_out.shape
    T = captions.shape[1]
    V, E = params["embedding"].shape
    H = params["w_hh"].shape[0]

    # Embedding lookup (gather) + dropout(identity in eval) — glue, stays in JAX.
    embedded = params["embedding"][captions]                           # (B, T, E)
    # Embedding part of the LSTM input projection, hoisted out of the recurrence.
    emb_g = jnp.einsum("bte,eg->tbg", embedded, params["w_ih"][:E, :])  # (T, B, 4H)
    # Attention encoder projection with both additive biases folded in.
    ep = encoder_out @ params["w_enc"] + params["b_enc"] + params["b_dec"]  # (B, S, H)
    # Re-associated context path: encoder rows projected straight to gate space.
    w_ctx = params["w_ih"][E:, :]                                      # (D, 4H)
    enc_g = jnp.einsum("bsd,dg->bsg", encoder_out, w_ctx)              # (B, S, 4H)
    # Step-0 (hidden is None) mean-context gate contribution.
    mean_g = encoder_out.mean(axis=1) @ w_ctx                          # (B, 4H)
    # Fused LSTM biases.
    b_g = (params["b_ih"] + params["b_hh"]).reshape(1, 4 * H)

    vmem = pl.BlockSpec(memory_space=pltpu.MemorySpace.VMEM)
    out_2d = pl.pallas_call(
        decoder_kernel,
        out_shape=jax.ShapeDtypeStruct((T * B, V), jnp.float32),
        in_specs=[vmem] * 10,
        out_specs=vmem,
    )(
        ep, enc_g, mean_g, emb_g,
        params["w_dec"], params["v_w"].reshape(1, H),
        params["w_hh"], b_g,
        params["w_fc"], params["b_fc"].reshape(1, V),
    )
    return jnp.transpose(out_2d.reshape(T, B, V), (1, 0, 2))           # (B, T, V)


# ----------------------------------------------------------------------------
# Pure-JAX reference (same math as the PyTorch module in eval mode).
# ----------------------------------------------------------------------------
def reference_forward(params, encoder_out, captions):
    B, S, D = encoder_out.shape
    T = captions.shape[1]
    H = params["w_hh"].shape[0]
    emb = params["embedding"][captions]
    h = jnp.zeros((B, H), jnp.float32)
    c = jnp.zeros((B, H), jnp.float32)
    ep = encoder_out @ params["w_enc"] + params["b_enc"]
    outs = []
    for i in range(T):
        if i == 0:
            ctx = encoder_out.mean(axis=1)
        else:
            dp = h @ params["w_dec"] + params["b_dec"]
            tv = jnp.tanh(ep + dp[:, None, :])
            scores = tv @ params["v_w"] + params["v_b"]
            attn = jax.nn.softmax(scores, axis=1)
            ctx = jnp.einsum("bs,bsd->bd", attn, encoder_out)
        x = jnp.concatenate([emb[:, i, :], ctx], axis=-1)
        gates = x @ params["w_ih"] + params["b_ih"] + h @ params["w_hh"] + params["b_hh"]
        i_g, f_g, g_g, o_g = jnp.split(gates, 4, axis=-1)
        c = jax.nn.sigmoid(f_g) * c + jax.nn.sigmoid(i_g) * jnp.tanh(g_g)
        h = jax.nn.sigmoid(o_g) * jnp.tanh(c)
        outs.append(h @ params["w_fc"] + params["b_fc"])
    return jnp.stack(outs, axis=1)


# ----------------------------------------------------------------------------
def init_params(key, D, H, V, E):
    ks = jax.random.split(key, 12)
    s = 0.05
    return {
        "embedding": jax.random.normal(ks[0], (V, E), jnp.float32) * s,
        "w_enc": jax.random.normal(ks[1], (D, H), jnp.float32) * s,
        "b_enc": jax.random.normal(ks[2], (H,), jnp.float32) * s,
        "w_dec": jax.random.normal(ks[3], (H, H), jnp.float32) * s,
        "b_dec": jax.random.normal(ks[4], (H,), jnp.float32) * s,
        "v_w": jax.random.normal(ks[5], (H,), jnp.float32) * s,
        "v_b": jax.random.normal(ks[6], (), jnp.float32) * s,
        "w_ih": jax.random.normal(ks[7], (E + D, 4 * H), jnp.float32) * s,
        "b_ih": jax.random.normal(ks[8], (4 * H,), jnp.float32) * s,
        "w_hh": jax.random.normal(ks[9], (H, 4 * H), jnp.float32) * s,
        "b_hh": jax.random.normal(ks[10], (4 * H,), jnp.float32) * s,
        "w_fc": jax.random.normal(ks[11], (H, V), jnp.float32) * s,
        "b_fc": jnp.zeros((V,), jnp.float32),
    }


if __name__ == "__main__":
    # Small shapes.  D=512 is fixed by Attention's nn.Linear(512, hidden_dim)
    # (encoder feature dim == input_dim == 512 is required by the module).
    B, S, D = 2, 16, 512          # encoder_out: (B, S, 512)
    H, V, E = 32, 64, 32          # hidden_dim, vocab_size, embedding_dim
    T = 8                         # caption length

    key = jax.random.PRNGKey(0)
    kp, ke, kc = jax.random.split(key, 3)
    params = init_params(kp, D, H, V, E)
    encoder_out = jax.random.normal(ke, (B, S, D), jnp.float32)
    captions = jax.random.randint(kc, (B, T), 0, V, dtype=jnp.int32)

    out = enhanced_rnn_forward(params, encoder_out, captions)
    out = jax.block_until_ready(out)

    ref = reference_forward(params, encoder_out, captions)
    np.testing.assert_allclose(np.asarray(out), np.asarray(ref),
                               rtol=1e-4, atol=1e-4)
    assert out.shape == (B, T, V)
    print("KERNEL_OK")
</pallas_src>

<mosaic_0001>
module attributes {stable_mosaic.version = 11 : i64} {
  func.func @decoder_kernel(%arg0: memref<2x16x32xf32, #tpu.memory_space<vmem>>, %arg1: memref<2x16x128xf32, #tpu.memory_space<vmem>>, %arg2: memref<2x128xf32, #tpu.memory_space<vmem>>, %arg3: memref<8x2x128xf32, #tpu.memory_space<vmem>>, %arg4: memref<32x32xf32, #tpu.memory_space<vmem>>, %arg5: memref<1x32xf32, #tpu.memory_space<vmem>>, %arg6: memref<32x128xf32, #tpu.memory_space<vmem>>, %arg7: memref<1x128xf32, #tpu.memory_space<vmem>>, %arg8: memref<32x64xf32, #tpu.memory_space<vmem>>, %arg9: memref<1x64xf32, #tpu.memory_space<vmem>>, %arg10: memref<16x64xf32, #tpu.memory_space<vmem>>) attributes {dimension_semantics = [], scalar_prefetch = 0 : i64, scratch_operands = 0 : i64, tpu.core_type = #tpu.core_type<tc>} {
    %cst = arith.constant 0.000000e+00 : f32
    %0 = vector.broadcast %cst : f32 to vector<2x32xf32>
    %cst_0 = arith.constant 0.000000e+00 : f32
    %1 = vector.broadcast %cst_0 : f32 to vector<2x32xf32>
    %c0 = arith.constant 0 : index
    %c0_1 = arith.constant 0 : index
    %2 = vector.load %arg2[%c0, %c0_1] : memref<2x128xf32, #tpu.memory_space<vmem>>, vector<2x128xf32>
    %c0_2 = arith.constant 0 : index
    %c0_3 = arith.constant 0 : index
    %c0_4 = arith.constant 0 : index
    %3 = vector.load %arg3[%c0_2, %c0_3, %c0_4] : memref<8x2x128xf32, #tpu.memory_space<vmem>>, vector<1x2x128xf32>
    %4 = vector.shape_cast %3 : vector<1x2x128xf32> to vector<2x128xf32>
    %5 = arith.addf %4, %2 : vector<2x128xf32>
    %c0_5 = arith.constant 0 : index
    %c0_6 = arith.constant 0 : index
    %6 = vector.load %arg6[%c0_5, %c0_6] : memref<32x128xf32, #tpu.memory_space<vmem>>, vector<32x128xf32>
    %cst_7 = arith.constant dense<0.000000e+00> : vector<2x128xf32>
    %7 = tpu.matmul %0, %6, %cst_7 {dimension_numbers = #tpu.dot_dimension_numbers<[1], [0], [0], [1], [0, 0, 1, 1], [], []>} : vector<2x32xf32>, vector<32x128xf32>, vector<2x128xf32> -> vector<2x128xf32>
    %8 = arith.addf %5, %7 : vector<2x128xf32>
    %c0_8 = arith.constant 0 : index
    %c0_9 = arith.constant 0 : index
    %9 = vector.load %arg7[%c0_8, %c0_9] : memref<1x128xf32, #tpu.memory_space<vmem>>, vector<1x128xf32>
    %10 = vector.broadcast %9 : vector<1x128xf32> to vector<2x128xf32>
    %11 = arith.addf %8, %10 : vector<2x128xf32>
    %12 = arith.negf %11 : vector<2x128xf32>
    %13 = math.exp %12 : vector<2x128xf32>
    %cst_10 = arith.constant 1.000000e+00 : f32
    %14 = vector.broadcast %cst_10 : f32 to vector<2x128xf32>
    %15 = arith.addf %14, %13 : vector<2x128xf32>
    %16 = arith.divf %14, %15 : vector<2x128xf32>
    %17 = vector.extract_strided_slice %11 {offsets = [0, 64], sizes = [2, 32], strides = [1, 1]} : vector<2x128xf32> to vector<2x32xf32>
    %18 = math.tanh %17 : vector<2x32xf32>
    %19 = vector.extract_strided_slice %16 {offsets = [0, 0], sizes = [2, 32], strides = [1, 1]} : vector<2x128xf32> to vector<2x32xf32>
    %20 = vector.extract_strided_slice %16 {offsets = [0, 32], sizes = [2, 32], strides = [1, 1]} : vector<2x128xf32> to vector<2x32xf32>
    %21 = vector.extract_strided_slice %16 {offsets = [0, 96], sizes = [2, 32], strides = [1, 1]} : vector<2x128xf32> to vector<2x32xf32>
    %22 = arith.mulf %20, %1 : vector<2x32xf32>
    %23 = arith.mulf %19, %18 : vector<2x32xf32>
    %24 = arith.addf %22, %23 : vector<2x32xf32>
    %25 = math.tanh %24 : vector<2x32xf32>
    %26 = arith.mulf %21, %25 : vector<2x32xf32>
    %c0_11 = arith.constant 0 : index
    %c0_12 = arith.constant 0 : index
    %27 = vector.load %arg4[%c0_11, %c0_12] : memref<32x32xf32, #tpu.memory_space<vmem>>, vector<32x32xf32>
    %cst_13 = arith.constant dense<0.000000e+00> : vector<2x32xf32>
    %28 = tpu.matmul %26, %27, %cst_13 {dimension_numbers = #tpu.dot_dimension_numbers<[1], [0], [0], [1], [0, 0, 1, 1], [], []>} : vector<2x32xf32>, vector<32x32xf32>, vector<2x32xf32> -> vector<2x32xf32>
    %c0_14 = arith.constant 0 : index
    %c0_15 = arith.constant 0 : index
    %c0_16 = arith.constant 0 : index
    %29 = vector.load %arg0[%c0_14, %c0_15, %c0_16] : memref<2x16x32xf32, #tpu.memory_space<vmem>>, vector<2x16x32xf32>
    %30 = vector.shape_cast %28 : vector<2x32xf32> to vector<2x1x32xf32>
    %31 = vector.broadcast %30 : vector<2x1x32xf32> to vector<2x16x32xf32>
    %32 = arith.addf %29, %31 : vector<2x16x32xf32>
    %33 = math.tanh %32 : vector<2x16x32xf32>
    %c0_17 = arith.constant 0 : index
    %c0_18 = arith.constant 0 : index
    %34 = vector.load %arg5[%c0_17, %c0_18] : memref<1x32xf32, #tpu.memory_space<vmem>>, vector<1x32xf32>
    %35 = vector.shape_cast %34 : vector<1x32xf32> to vector<1x1x32xf32>
    %36 = vector.broadcast %35 : vector<1x1x32xf32> to vector<2x16x32xf32>
    %37 = arith.mulf %33, %36 : vector<2x16x32xf32>
    %cst_19 = arith.constant dense<0.000000e+00> : vector<2x16xf32>
    %38 = vector.multi_reduction <add>, %37, %cst_19 [2] : vector<2x16x32xf32> to vector<2x16xf32>
    %cst_20 = arith.constant dense<0xFF800000> : vector<2xf32>
    %39 = vector.multi_reduction <maximumf>, %38, %cst_20 [1] : vector<2x16xf32> to vector<2xf32>
    %40 = vector.shape_cast %39 : vector<2xf32> to vector<2x1xf32>
    %41 = vector.broadcast %40 : vector<2x1xf32> to vector<2x16xf32>
    %42 = arith.subf %38, %41 : vector<2x16xf32>
    %43 = math.exp %42 : vector<2x16xf32>
    %cst_21 = arith.constant dense<0.000000e+00> : vector<2xf32>
    %44 = vector.multi_reduction <add>, %43, %cst_21 [1] : vector<2x16xf32> to vector<2xf32>
    %45 = vector.shape_cast %44 : vector<2xf32> to vector<2x1xf32>
    %46 = tpu.reciprocal %45 : vector<2x1xf32> -> vector<2x1xf32>
    %47 = vector.broadcast %46 : vector<2x1xf32> to vector<2x16xf32>
    %48 = arith.mulf %43, %47 : vector<2x16xf32>
    %49 = vector.shape_cast %48 : vector<2x16xf32> to vector<2x1x16xf32>
    %c0_22 = arith.constant 0 : index
    %c0_23 = arith.constant 0 : index
    %c0_24 = arith.constant 0 : index
    %50 = vector.load %arg1[%c0_22, %c0_23, %c0_24] : memref<2x16x128xf32, #tpu.memory_space<vmem>>, vector<2x16x128xf32>
    "tpu.trace_start"() <{level = 10 : i32, message = "bqs,bsg->bqg"}> : () -> ()
    %cst_25 = arith.constant dense<0.000000e+00> : vector<2x1x128xf32>
    %51 = tpu.matmul %49, %50, %cst_25 {dimension_numbers = #tpu.dot_dimension_numbers<[2], [1], [1], [2], [0, 0, 0, 1, 1, 2], [0], [0]>} : vector<2x1x16xf32>, vector<2x16x128xf32>, vector<2x1x128xf32> -> vector<2x1x128xf32>
    "tpu.trace_stop"() : () -> ()
    %cst_26 = arith.constant dense<0.000000e+00> : vector<2x128xf32>
    %52 = vector.multi_reduction <add>, %51, %cst_26 [1] : vector<2x1x128xf32> to vector<2x128xf32>
    %c1 = arith.constant 1 : index
    %c0_27 = arith.constant 0 : index
    %c0_28 = arith.constant 0 : index
    %53 = vector.load %arg3[%c1, %c0_27, %c0_28] : memref<8x2x128xf32, #tpu.memory_space<vmem>>, vector<1x2x128xf32>
    %54 = vector.shape_cast %53 : vector<1x2x128xf32> to vector<2x128xf32>
    %55 = arith.addf %54, %52 : vector<2x128xf32>
    %c0_29 = arith.constant 0 : index
    %c0_30 = arith.constant 0 : index
    %56 = vector.load %arg6[%c0_29, %c0_30] : memref<32x128xf32, #tpu.memory_space<vmem>>, vector<32x128xf32>
    %cst_31 = arith.constant dense<0.000000e+00> : vector<2x128xf32>
    %57 = tpu.matmul %26, %56, %cst_31 {dimension_numbers = #tpu.dot_dimension_numbers<[1], [0], [0], [1], [0, 0, 1, 1], [], []>} : vector<2x32xf32>, vector<32x128xf32>, vector<2x128xf32> -> vector<2x128xf32>
    %58 = arith.addf %55, %57 : vector<2x128xf32>
    %c0_32 = arith.constant 0 : index
    %c0_33 = arith.constant 0 : index
    %59 = vector.load %arg7[%c0_32, %c0_33] : memref<1x128xf32, #tpu.memory_space<vmem>>, vector<1x128xf32>
    %60 = vector.broadcast %59 : vector<1x128xf32> to vector<2x128xf32>
    %61 = arith.addf %58, %60 : vector<2x128xf32>
    %62 = arith.negf %61 : vector<2x128xf32>
    %63 = math.exp %62 : vector<2x128xf32>
    %cst_34 = arith.constant 1.000000e+00 : f32
    %64 = vector.broadcast %cst_34 : f32 to vector<2x128xf32>
    %65 = arith.addf %64, %63 : vector<2x128xf32>
    %66 = arith.divf %64, %65 : vector<2x128xf32>
    %67 = vector.extract_strided_slice %61 {offsets = [0, 64], sizes = [2, 32], strides = [1, 1]} : vector<2x128xf32> to vector<2x32xf32>
    %68 = math.tanh %67 : vector<2x32xf32>
    %69 = vector.extract_strided_slice %66 {offsets = [0, 0], sizes = [2, 32], strides = [1, 1]} : vector<2x128xf32> to vector<2x32xf32>
    %70 = vector.extract_strided_slice %66 {offsets = [0, 32], sizes = [2, 32], strides = [1, 1]} : vector<2x128xf32> to vector<2x32xf32>
    %71 = vector.extract_strided_slice %66 {offsets = [0, 96], sizes = [2, 32], strides = [1, 1]} : vector<2x128xf32> to vector<2x32xf32>
    %72 = arith.mulf %70, %24 : vector<2x32xf32>
    %73 = arith.mulf %69, %68 : vector<2x32xf32>
    %74 = arith.addf %72, %73 : vector<2x32xf32>
    %75 = math.tanh %74 : vector<2x32xf32>
    %76 = arith.mulf %71, %75 : vector<2x32xf32>
    %c0_35 = arith.constant 0 : index
    %c0_36 = arith.constant 0 : index
    %77 = vector.load %arg4[%c0_35, %c0_36] : memref<32x32xf32, #tpu.memory_space<vmem>>, vector<32x32xf32>
    %cst_37 = arith.constant dense<0.000000e+00> : vector<2x32xf32>
    %78 = tpu.matmul %76, %77, %cst_37 {dimension_numbers = #tpu.dot_dimension_numbers<[1], [0], [0], [1], [0, 0, 1, 1], [], []>} : vector<2x32xf32>, vector<32x32xf32>, vector<2x32xf32> -> vector<2x32xf32>
    %c0_38 = arith.constant 0 : index
    %c0_39 = arith.constant 0 : index
    %c0_40 = arith.constant 0 : index
    %79 = vector.load %arg0[%c0_38, %c0_39, %c0_40] : memref<2x16x32xf32, #tpu.memory_space<vmem>>, vector<2x16x32xf32>
    %80 = vector.shape_cast %78 : vector<2x32xf32> to vector<2x1x32xf32>
    %81 = vector.broadcast %80 : vector<2x1x32xf32> to vector<2x16x32xf32>
    %82 = arith.addf %79, %81 : vector<2x16x32xf32>
    %83 = math.tanh %82 : vector<2x16x32xf32>
    %c0_41 = arith.constant 0 : index
    %c0_42 = arith.constant 0 : index
    %84 = vector.load %arg5[%c0_41, %c0_42] : memref<1x32xf32, #tpu.memory_space<vmem>>, vector<1x32xf32>
    %85 = vector.shape_cast %84 : vector<1x32xf32> to vector<1x1x32xf32>
    %86 = vector.broadcast %85 : vector<1x1x32xf32> to vector<2x16x32xf32>
    %87 = arith.mulf %83, %86 : vector<2x16x32xf32>
    %cst_43 = arith.constant dense<0.000000e+00> : vector<2x16xf32>
    %88 = vector.multi_reduction <add>, %87, %cst_43 [2] : vector<2x16x32xf32> to vector<2x16xf32>
    %cst_44 = arith.constant dense<0xFF800000> : vector<2xf32>
    %89 = vector.multi_reduction <maximumf>, %88, %cst_44 [1] : vector<2x16xf32> to vector<2xf32>
    %90 = vector.shape_cast %89 : vector<2xf32> to vector<2x1xf32>
    %91 = vector.broadcast %90 : vector<2x1xf32> to vector<2x16xf32>
    %92 = arith.subf %88, %91 : vector<2x16xf32>
    %93 = math.exp %92 : vector<2x16xf32>
    %cst_45 = arith.constant dense<0.000000e+00> : vector<2xf32>
    %94 = vector.multi_reduction <add>, %93, %cst_45 [1] : vector<2x16xf32> to vector<2xf32>
    %95 = vector.shape_cast %94 : vector<2xf32> to vector<2x1xf32>
    %96 = tpu.reciprocal %95 : vector<2x1xf32> -> vector<2x1xf32>
    %97 = vector.broadcast %96 : vector<2x1xf32> to vector<2x16xf32>
    %98 = arith.mulf %93, %97 : vector<2x16xf32>
    %99 = vector.shape_cast %98 : vector<2x16xf32> to vector<2x1x16xf32>
    %c0_46 = arith.constant 0 : index
    %c0_47 = arith.constant 0 : index
    %c0_48 = arith.constant 0 : index
    %100 = vector.load %arg1[%c0_46, %c0_47, %c0_48] : memref<2x16x128xf32, #tpu.memory_space<vmem>>, vector<2x16x128xf32>
    "tpu.trace_start"() <{level = 10 : i32, message = "bqs,bsg->bqg"}> : () -> ()
    %cst_49 = arith.constant dense<0.000000e+00> : vector<2x1x128xf32>
    %101 = tpu.matmul %99, %100, %cst_49 {dimension_numbers = #tpu.dot_dimension_numbers<[2], [1], [1], [2], [0, 0, 0, 1, 1, 2], [0], [0]>} : vector<2x1x16xf32>, vector<2x16x128xf32>, vector<2x1x128xf32> -> vector<2x1x128xf32>
    "tpu.trace_stop"() : () -> ()
    %cst_50 = arith.constant dense<0.000000e+00> : vector<2x128xf32>
    %102 = vector.multi_reduction <add>, %101, %cst_50 [1] : vector<2x1x128xf32> to vector<2x128xf32>
    %c2 = arith.constant 2 : index
    %c0_51 = arith.constant 0 : index
    %c0_52 = arith.constant 0 : index
    %103 = vector.load %arg3[%c2, %c0_51, %c0_52] : memref<8x2x128xf32, #tpu.memory_space<vmem>>, vector<1x2x128xf32>
    %104 = vector.shape_cast %103 : vector<1x2x128xf32> to vector<2x128xf32>
    %105 = arith.addf %104, %102 : vector<2x128xf32>
    %c0_53 = arith.constant 0 : index
    %c0_54 = arith.constant 0 : index
    %106 = vector.load %arg6[%c0_53, %c0_54] : memref<32x128xf32, #tpu.memory_space<vmem>>, vector<32x128xf32>
    %cst_55 = arith.constant dense<0.000000e+00> : vector<2x128xf32>
    %107 = tpu.matmul %76, %106, %cst_55 {dimension_numbers = #tpu.dot_dimension_numbers<[1], [0], [0], [1], [0, 0, 1, 1], [], []>} : vector<2x32xf32>, vector<32x128xf32>, vector<2x128xf32> -> vector<2x128xf32>
    %108 = arith.addf %105, %107 : vector<2x128xf32>
    %c0_56 = arith.constant 0 : index
    %c0_57 = arith.constant 0 : index
    %109 = vector.load %arg7[%c0_56, %c0_57] : memref<1x128xf32, #tpu.memory_space<vmem>>, vector<1x128xf32>
    %110 = vector.broadcast %109 : vector<1x128xf32> to vector<2x128xf32>
    %111 = arith.addf %108, %110 : vector<2x128xf32>
    %112 = arith.negf %111 : vector<2x128xf32>
    %113 = math.exp %112 : vector<2x128xf32>
    %cst_58 = arith.constant 1.000000e+00 : f32
    %114 = vector.broadcast %cst_58 : f32 to vector<2x128xf32>
    %115 = arith.addf %114, %113 : vector<2x128xf32>
    %116 = arith.divf %114, %115 : vector<2x128xf32>
    %117 = vector.extract_strided_slice %111 {offsets = [0, 64], sizes = [2, 32], strides = [1, 1]} : vector<2x128xf32> to vector<2x32xf32>
    %118 = math.tanh %117 : vector<2x32xf32>
    %119 = vector.extract_strided_slice %116 {offsets = [0, 0], sizes = [2, 32], strides = [1, 1]} : vector<2x128xf32> to vector<2x32xf32>
    %120 = vector.extract_strided_slice %116 {offsets = [0, 32], sizes = [2, 32], strides = [1, 1]} : vector<2x128xf32> to vector<2x32xf32>
    %121 = vector.extract_strided_slice %116 {offsets = [0, 96], sizes = [2, 32], strides = [1, 1]} : vector<2x128xf32> to vector<2x32xf32>
    %122 = arith.mulf %120, %74 : vector<2x32xf32>
    %123 = arith.mulf %119, %118 : vector<2x32xf32>
    %124 = arith.addf %122, %123 : vector<2x32xf32>
    %125 = math.tanh %124 : vector<2x32xf32>
    %126 = arith.mulf %121, %125 : vector<2x32xf32>
    %c0_59 = arith.constant 0 : index
    %c0_60 = arith.constant 0 : index
    %127 = vector.load %arg4[%c0_59, %c0_60] : memref<32x32xf32, #tpu.memory_space<vmem>>, vector<32x32xf32>
    %cst_61 = arith.constant dense<0.000000e+00> : vector<2x32xf32>
    %128 = tpu.matmul %126, %127, %cst_61 {dimension_numbers = #tpu.dot_dimension_numbers<[1], [0], [0], [1], [0, 0, 1, 1], [], []>} : vector<2x32xf32>, vector<32x32xf32>, vector<2x32xf32> -> vector<2x32xf32>
    %c0_62 = arith.constant 0 : index
    %c0_63 = arith.constant 0 : index
    %c0_64 = arith.constant 0 : index
    %129 = vector.load %arg0[%c0_62, %c0_63, %c0_64] : memref<2x16x32xf32, #tpu.memory_space<vmem>>, vector<2x16x32xf32>
    %130 = vector.shape_cast %128 : vector<2x32xf32> to vector<2x1x32xf32>
    %131 = vector.broadcast %130 : vector<2x1x32xf32> to vector<2x16x32xf32>
    %132 = arith.addf %129, %131 : vector<2x16x32xf32>
    %133 = math.tanh %132 : vector<2x16x32xf32>
    %c0_65 = arith.constant 0 : index
    %c0_66 = arith.constant 0 : index
    %134 = vector.load %arg5[%c0_65, %c0_66] : memref<1x32xf32, #tpu.memory_space<vmem>>, vector<1x32xf32>
    %135 = vector.shape_cast %134 : vector<1x32xf32> to vector<1x1x32xf32>
    %136 = vector.broadcast %135 : vector<1x1x32xf32> to vector<2x16x32xf32>
    %137 = arith.mulf %133, %136 : vector<2x16x32xf32>
    %cst_67 = arith.constant dense<0.000000e+00> : vector<2x16xf32>
    %138 = vector.multi_reduction <add>, %137, %cst_67 [2] : vector<2x16x32xf32> to vector<2x16xf32>
    %cst_68 = arith.constant dense<0xFF800000> : vector<2xf32>
    %139 = vector.multi_reduction <maximumf>, %138, %cst_68 [1] : vector<2x16xf32> to vector<2xf32>
    %140 = vector.shape_cast %139 : vector<2xf32> to vector<2x1xf32>
    %141 = vector.broadcast %140 : vector<2x1xf32> to vector<2x16xf32>
    %142 = arith.subf %138, %141 : vector<2x16xf32>
    %143 = math.exp %142 : vector<2x16xf32>
    %cst_69 = arith.constant dense<0.000000e+00> : vector<2xf32>
    %144 = vector.multi_reduction <add>, %143, %cst_69 [1] : vector<2x16xf32> to vector<2xf32>
    %145 = vector.shape_cast %144 : vector<2xf32> to vector<2x1xf32>
    %146 = tpu.reciprocal %145 : vector<2x1xf32> -> vector<2x1xf32>
    %147 = vector.broadcast %146 : vector<2x1xf32> to vector<2x16xf32>
    %148 = arith.mulf %143, %147 : vector<2x16xf32>
    %149 = vector.shape_cast %148 : vector<2x16xf32> to vector<2x1x16xf32>
    %c0_70 = arith.constant 0 : index
    %c0_71 = arith.constant 0 : index
    %c0_72 = arith.constant 0 : index
    %150 = vector.load %arg1[%c0_70, %c0_71, %c0_72] : memref<2x16x128xf32, #tpu.memory_space<vmem>>, vector<2x16x128xf32>
    "tpu.trace_start"() <{level = 10 : i32, message = "bqs,bsg->bqg"}> : () -> ()
    %cst_73 = arith.constant dense<0.000000e+00> : vector<2x1x128xf32>
    %151 = tpu.matmul %149, %150, %cst_73 {dimension_numbers = #tpu.dot_dimension_numbers<[2], [1], [1], [2], [0, 0, 0, 1, 1, 2], [0], [0]>} : vector<2x1x16xf32>, vector<2x16x128xf32>, vector<2x1x128xf32> -> vector<2x1x128xf32>
    "tpu.trace_stop"() : () -> ()
    %cst_74 = arith.constant dense<0.000000e+00> : vector<2x128xf32>
    %152 = vector.multi_reduction <add>, %151, %cst_74 [1] : vector<2x1x128xf32> to vector<2x128xf32>
    %c3 = arith.constant 3 : index
    %c0_75 = arith.constant 0 : index
    %c0_76 = arith.constant 0 : index
    %153 = vector.load %arg3[%c3, %c0_75, %c0_76] : memref<8x2x128xf32, #tpu.memory_space<vmem>>, vector<1x2x128xf32>
    %154 = vector.shape_cast %153 : vector<1x2x128xf32> to vector<2x128xf32>
    %155 = arith.addf %154, %152 : vector<2x128xf32>
    %c0_77 = arith.constant 0 : index
    %c0_78 = arith.constant 0 : index
    %156 = vector.load %arg6[%c0_77, %c0_78] : memref<32x128xf32, #tpu.memory_space<vmem>>, vector<32x128xf32>
    %cst_79 = arith.constant dense<0.000000e+00> : vector<2x128xf32>
    %157 = tpu.matmul %126, %156, %cst_79 {dimension_numbers = #tpu.dot_dimension_numbers<[1], [0], [0], [1], [0, 0, 1, 1], [], []>} : vector<2x32xf32>, vector<32x128xf32>, vector<2x128xf32> -> vector<2x128xf32>
    %158 = arith.addf %155, %157 : vector<2x128xf32>
    %c0_80 = arith.constant 0 : index
    %c0_81 = arith.constant 0 : index
    %159 = vector.load %arg7[%c0_80, %c0_81] : memref<1x128xf32, #tpu.memory_space<vmem>>, vector<1x128xf32>
    %160 = vector.broadcast %159 : vector<1x128xf32> to vector<2x128xf32>
    %161 = arith.addf %158, %160 : vector<2x128xf32>
    %162 = arith.negf %161 : vector<2x128xf32>
    %163 = math.exp %162 : vector<2x128xf32>
    %cst_82 = arith.constant 1.000000e+00 : f32
    %164 = vector.broadcast %cst_82 : f32 to vector<2x128xf32>
    %165 = arith.addf %164, %163 : vector<2x128xf32>
    %166 = arith.divf %164, %165 : vector<2x128xf32>
    %167 = vector.extract_strided_slice %161 {offsets = [0, 64], sizes = [2, 32], strides = [1, 1]} : vector<2x128xf32> to vector<2x32xf32>
    %168 = math.tanh %167 : vector<2x32xf32>
    %169 = vector.extract_strided_slice %166 {offsets = [0, 0], sizes = [2, 32], strides = [1, 1]} : vector<2x128xf32> to vector<2x32xf32>
    %170 = vector.extract_strided_slice %166 {offsets = [0, 32], sizes = [2, 32], strides = [1, 1]} : vector<2x128xf32> to vector<2x32xf32>
    %171 = vector.extract_strided_slice %166 {offsets = [0, 96], sizes = [2, 32], strides = [1, 1]} : vector<2x128xf32> to vector<2x32xf32>
    %172 = arith.mulf %170, %124 : vector<2x32xf32>
    %173 = arith.mulf %169, %168 : vector<2x32xf32>
    %174 = arith.addf %172, %173 : vector<2x32xf32>
    %175 = math.tanh %174 : vector<2x32xf32>
    %176 = arith.mulf %171, %175 : vector<2x32xf32>
    %c0_83 = arith.constant 0 : index
    %c0_84 = arith.constant 0 : index
    %177 = vector.load %arg4[%c0_83, %c0_84] : memref<32x32xf32, #tpu.memory_space<vmem>>, vector<32x32xf32>
    %cst_85 = arith.constant dense<0.000000e+00> : vector<2x32xf32>
    %178 = tpu.matmul %176, %177, %cst_85 {dimension_numbers = #tpu.dot_dimension_numbers<[1], [0], [0], [1], [0, 0, 1, 1], [], []>} : vector<2x32xf32>, vector<32x32xf32>, vector<2x32xf32> -> vector<2x32xf32>
    %c0_86 = arith.constant 0 : index
    %c0_87 = arith.constant 0 : index
    %c0_88 = arith.constant 0 : index
    %179 = vector.load %arg0[%c0_86, %c0_87, %c0_88] : memref<2x16x32xf32, #tpu.memory_space<vmem>>, vector<2x16x32xf32>
    %180 = vector.shape_cast %178 : vector<2x32xf32> to vector<2x1x32xf32>
    %181 = vector.broadcast %180 : vector<2x1x32xf32> to vector<2x16x32xf32>
    %182 = arith.addf %179, %181 : vector<2x16x32xf32>
    %183 = math.tanh %182 : vector<2x16x32xf32>
    %c0_89 = arith.constant 0 : index
    %c0_90 = arith.constant 0 : index
    %184 = vector.load %arg5[%c0_89, %c0_90] : memref<1x32xf32, #tpu.memory_space<vmem>>, vector<1x32xf32>
    %185 = vector.shape_cast %184 : vector<1x32xf32> to vector<1x1x32xf32>
    %186 = vector.broadcast %185 : vector<1x1x32xf32> to vector<2x16x32xf32>
    %187 = arith.mulf %183, %186 : vector<2x16x32xf32>
    %cst_91 = arith.constant dense<0.000000e+00> : vector<2x16xf32>
    %188 = vector.multi_reduction <add>, %187, %cst_91 [2] : vector<2x16x32xf32> to vector<2x16xf32>
    %cst_92 = arith.constant dense<0xFF800000> : vector<2xf32>
    %189 = vector.multi_reduction <maximumf>, %188, %cst_92 [1] : vector<2x16xf32> to vector<2xf32>
    %190 = vector.shape_cast %189 : vector<2xf32> to vector<2x1xf32>
    %191 = vector.broadcast %190 : vector<2x1xf32> to vector<2x16xf32>
    %192 = arith.subf %188, %191 : vector<2x16xf32>
    %193 = math.exp %192 : vector<2x16xf32>
    %cst_93 = arith.constant dense<0.000000e+00> : vector<2xf32>
    %194 = vector.multi_reduction <add>, %193, %cst_93 [1] : vector<2x16xf32> to vector<2xf32>
    %195 = vector.shape_cast %194 : vector<2xf32> to vector<2x1xf32>
    %196 = tpu.reciprocal %195 : vector<2x1xf32> -> vector<2x1xf32>
    %197 = vector.broadcast %196 : vector<2x1xf32> to vector<2x16xf32>
    %198 = arith.mulf %193, %197 : vector<2x16xf32>
    %199 = vector.shape_cast %198 : vector<2x16xf32> to vector<2x1x16xf32>
    %c0_94 = arith.constant 0 : index
    %c0_95 = arith.constant 0 : index
    %c0_96 = arith.constant 0 : index
    %200 = vector.load %arg1[%c0_94, %c0_95, %c0_96] : memref<2x16x128xf32, #tpu.memory_space<vmem>>, vector<2x16x128xf32>
    "tpu.trace_start"() <{level = 10 : i32, message = "bqs,bsg->bqg"}> : () -> ()
    %cst_97 = arith.constant dense<0.000000e+00> : vector<2x1x128xf32>
    %201 = tpu.matmul %199, %200, %cst_97 {dimension_numbers = #tpu.dot_dimension_numbers<[2], [1], [1], [2], [0, 0, 0, 1, 1, 2], [0], [0]>} : vector<2x1x16xf32>, vector<2x16x128xf32>, vector<2x1x128xf32> -> vector<2x1x128xf32>
    "tpu.trace_stop"() : () -> ()
    %cst_98 = arith.constant dense<0.000000e+00> : vector<2x128xf32>
    %202 = vector.multi_reduction <add>, %201, %cst_98 [1] : vector<2x1x128xf32> to vector<2x128xf32>
    %c4 = arith.constant 4 : index
    %c0_99 = arith.constant 0 : index
    %c0_100 = arith.constant 0 : index
    %203 = vector.load %arg3[%c4, %c0_99, %c0_100] : memref<8x2x128xf32, #tpu.memory_space<vmem>>, vector<1x2x128xf32>
    %204 = vector.shape_cast %203 : vector<1x2x128xf32> to vector<2x128xf32>
    %205 = arith.addf %204, %202 : vector<2x128xf32>
    %c0_101 = arith.constant 0 : index
    %c0_102 = arith.constant 0 : index
    %206 = vector.load %arg6[%c0_101, %c0_102] : memref<32x128xf32, #tpu.memory_space<vmem>>, vector<32x128xf32>
    %cst_103 = arith.constant dense<0.000000e+00> : vector<2x128xf32>
    %207 = tpu.matmul %176, %206, %cst_103 {dimension_numbers = #tpu.dot_dimension_numbers<[1], [0], [0], [1], [0, 0, 1, 1], [], []>} : vector<2x32xf32>, vector<32x128xf32>, vector<2x128xf32> -> vector<2x128xf32>
    %208 = arith.addf %205, %207 : vector<2x128xf32>
    %c0_104 = arith.constant 0 : index
    %c0_105 = arith.constant 0 : index
    %209 = vector.load %arg7[%c0_104, %c0_105] : memref<1x128xf32, #tpu.memory_space<vmem>>, vector<1x128xf32>
    %210 = vector.broadcast %209 : vector<1x128xf32> to vector<2x128xf32>
    %211 = arith.addf %208, %210 : vector<2x128xf32>
    %212 = arith.negf %211 : vector<2x128xf32>
    %213 = math.exp %212 : vector<2x128xf32>
    %cst_106 = arith.constant 1.000000e+00 : f32
    %214 = vector.broadcast %cst_106 : f32 to vector<2x128xf32>
    %215 = arith.addf %214, %213 : vector<2x128xf32>
    %216 = arith.divf %214, %215 : vector<2x128xf32>
    %217 = vector.extract_strided_slice %211 {offsets = [0, 64], sizes = [2, 32], strides = [1, 1]} : vector<2x128xf32> to vector<2x32xf32>
    %218 = math.tanh %217 : vector<2x32xf32>
    %219 = vector.extract_strided_slice %216 {offsets = [0, 0], sizes = [2, 32], strides = [1, 1]} : vector<2x128xf32> to vector<2x32xf32>
    %220 = vector.extract_strided_slice %216 {offsets = [0, 32], sizes = [2, 32], strides = [1, 1]} : vector<2x128xf32> to vector<2x32xf32>
    %221 = vector.extract_strided_slice %216 {offsets = [0, 96], sizes = [2, 32], strides = [1, 1]} : vector<2x128xf32> to vector<2x32xf32>
    %222 = arith.mulf %220, %174 : vector<2x32xf32>
    %223 = arith.mulf %219, %218 : vector<2x32xf32>
    %224 = arith.addf %222, %223 : vector<2x32xf32>
    %225 = math.tanh %224 : vector<2x32xf32>
    %226 = arith.mulf %221, %225 : vector<2x32xf32>
    %c0_107 = arith.constant 0 : index
    %c0_108 = arith.constant 0 : index
    %227 = vector.load %arg4[%c0_107, %c0_108] : memref<32x32xf32, #tpu.memory_space<vmem>>, vector<32x32xf32>
    %cst_109 = arith.constant dense<0.000000e+00> : vector<2x32xf32>
    %228 = tpu.matmul %226, %227, %cst_109 {dimension_numbers = #tpu.dot_dimension_numbers<[1], [0], [0], [1], [0, 0, 1, 1], [], []>} : vector<2x32xf32>, vector<32x32xf32>, vector<2x32xf32> -> vector<2x32xf32>
    %c0_110 = arith.constant 0 : index
    %c0_111 = arith.constant 0 : index
    %c0_112 = arith.constant 0 : index
    %229 = vector.load %arg0[%c0_110, %c0_111, %c0_112] : memref<2x16x32xf32, #tpu.memory_space<vmem>>, vector<2x16x32xf32>
    %230 = vector.shape_cast %228 : vector<2x32xf32> to vector<2x1x32xf32>
    %231 = vector.broadcast %230 : vector<2x1x32xf32> to vector<2x16x32xf32>
    %232 = arith.addf %229, %231 : vector<2x16x32xf32>
    %233 = math.tanh %232 : vector<2x16x32xf32>
    %c0_113 = arith.constant 0 : index
    %c0_114 = arith.constant 0 : index
    %234 = vector.load %arg5[%c0_113, %c0_114] : memref<1x32xf32, #tpu.memory_space<vmem>>, vector<1x32xf32>
    %235 = vector.shape_cast %234 : vector<1x32xf32> to vector<1x1x32xf32>
    %236 = vector.broadcast %235 : vector<1x1x32xf32> to vector<2x16x32xf32>
    %237 = arith.mulf %233, %236 : vector<2x16x32xf32>
    %cst_115 = arith.constant dense<0.000000e+00> : vector<2x16xf32>
    %238 = vector.multi_reduction <add>, %237, %cst_115 [2] : vector<2x16x32xf32> to vector<2x16xf32>
    %cst_116 = arith.constant dense<0xFF800000> : vector<2xf32>
    %239 = vector.multi_reduction <maximumf>, %238, %cst_116 [1] : vector<2x16xf32> to vector<2xf32>
    %240 = vector.shape_cast %239 : vector<2xf32> to vector<2x1xf32>
    %241 = vector.broadcast %240 : vector<2x1xf32> to vector<2x16xf32>
    %242 = arith.subf %238, %241 : vector<2x16xf32>
    %243 = math.exp %242 : vector<2x16xf32>
    %cst_117 = arith.constant dense<0.000000e+00> : vector<2xf32>
    %244 = vector.multi_reduction <add>, %243, %cst_117 [1] : vector<2x16xf32> to vector<2xf32>
    %245 = vector.shape_cast %244 : vector<2xf32> to vector<2x1xf32>
    %246 = tpu.reciprocal %245 : vector<2x1xf32> -> vector<2x1xf32>
    %247 = vector.broadcast %246 : vector<2x1xf32> to vector<2x16xf32>
    %248 = arith.mulf %243, %247 : vector<2x16xf32>
    %249 = vector.shape_cast %248 : vector<2x16xf32> to vector<2x1x16xf32>
    %c0_118 = arith.constant 0 : index
    %c0_119 = arith.constant 0 : index
    %c0_120 = arith.constant 0 : index
    %250 = vector.load %arg1[%c0_118, %c0_119, %c0_120] : memref<2x16x128xf32, #tpu.memory_space<vmem>>, vector<2x16x128xf32>
    "tpu.trace_start"() <{level = 10 : i32, message = "bqs,bsg->bqg"}> : () -> ()
    %cst_121 = arith.constant dense<0.000000e+00> : vector<2x1x128xf32>
    %251 = tpu.matmul %249, %250, %cst_121 {dimension_numbers = #tpu.dot_dimension_numbers<[2], [1], [1], [2], [0, 0, 0, 1, 1, 2], [0], [0]>} : vector<2x1x16xf32>, vector<2x16x128xf32>, vector<2x1x128xf32> -> vector<2x1x128xf32>
    "tpu.trace_stop"() : () -> ()
    %cst_122 = arith.constant dense<0.000000e+00> : vector<2x128xf32>
    %252 = vector.multi_reduction <add>, %251, %cst_122 [1] : vector<2x1x128xf32> to vector<2x128xf32>
    %c5 = arith.constant 5 : index
    %c0_123 = arith.constant 0 : index
    %c0_124 = arith.constant 0 : index
    %253 = vector.load %arg3[%c5, %c0_123, %c0_124] : memref<8x2x128xf32, #tpu.memory_space<vmem>>, vector<1x2x128xf32>
    %254 = vector.shape_cast %253 : vector<1x2x128xf32> to vector<2x128xf32>
    %255 = arith.addf %254, %252 : vector<2x128xf32>
    %c0_125 = arith.constant 0 : index
    %c0_126 = arith.constant 0 : index
    %256 = vector.load %arg6[%c0_125, %c0_126] : memref<32x128xf32, #tpu.memory_space<vmem>>, vector<32x128xf32>
    %cst_127 = arith.constant dense<0.000000e+00> : vector<2x128xf32>
    %257 = tpu.matmul %226, %256, %cst_127 {dimension_numbers = #tpu.dot_dimension_numbers<[1], [0], [0], [1], [0, 0, 1, 1], [], []>} : vector<2x32xf32>, vector<32x128xf32>, vector<2x128xf32> -> vector<2x128xf32>
    %258 = arith.addf %255, %257 : vector<2x128xf32>
    %c0_128 = arith.constant 0 : index
    %c0_129 = arith.constant 0 : index
    %259 = vector.load %arg7[%c0_128, %c0_129] : memref<1x128xf32, #tpu.memory_space<vmem>>, vector<1x128xf32>
    %260 = vector.broadcast %259 : vector<1x128xf32> to vector<2x128xf32>
    %261 = arith.addf %258, %260 : vector<2x128xf32>
    %262 = arith.negf %261 : vector<2x128xf32>
    %263 = math.exp %262 : vector<2x128xf32>
    %cst_130 = arith.constant 1.000000e+00 : f32
    %264 = vector.broadcast %cst_130 : f32 to vector<2x128xf32>
    %265 = arith.addf %264, %263 : vector<2x128xf32>
    %266 = arith.divf %264, %265 : vector<2x128xf32>
    %267 = vector.extract_strided_slice %261 {offsets = [0, 64], sizes = [2, 32], strides = [1, 1]} : vector<2x128xf32> to vector<2x32xf32>
    %268 = math.tanh %267 : vector<2x32xf32>
    %269 = vector.extract_strided_slice %266 {offsets = [0, 0], sizes = [2, 32], strides = [1, 1]} : vector<2x128xf32> to vector<2x32xf32>
    %270 = vector.extract_strided_slice %266 {offsets = [0, 32], sizes = [2, 32], strides = [1, 1]} : vector<2x128xf32> to vector<2x32xf32>
    %271 = vector.extract_strided_slice %266 {offsets = [0, 96], sizes = [2, 32], strides = [1, 1]} : vector<2x128xf32> to vector<2x32xf32>
    %272 = arith.mulf %270, %224 : vector<2x32xf32>
    %273 = arith.mulf %269, %268 : vector<2x32xf32>
    %274 = arith.addf %272, %273 : vector<2x32xf32>
    %275 = math.tanh %274 : vector<2x32xf32>
    %276 = arith.mulf %271, %275 : vector<2x32xf32>
    %c0_131 = arith.constant 0 : index
    %c0_132 = arith.constant 0 : index
    %277 = vector.load %arg4[%c0_131, %c0_132] : memref<32x32xf32, #tpu.memory_space<vmem>>, vector<32x32xf32>
    %cst_133 = arith.constant dense<0.000000e+00> : vector<2x32xf32>
    %278 = tpu.matmul %276, %277, %cst_133 {dimension_numbers = #tpu.dot_dimension_numbers<[1], [0], [0], [1], [0, 0, 1, 1], [], []>} : vector<2x32xf32>, vector<32x32xf32>, vector<2x32xf32> -> vector<2x32xf32>
    %c0_134 = arith.constant 0 : index
    %c0_135 = arith.constant 0 : index
    %c0_136 = arith.constant 0 : index
    %279 = vector.load %arg0[%c0_134, %c0_135, %c0_136] : memref<2x16x32xf32, #tpu.memory_space<vmem>>, vector<2x16x32xf32>
    %280 = vector.shape_cast %278 : vector<2x32xf32> to vector<2x1x32xf32>
    %281 = vector.broadcast %280 : vector<2x1x32xf32> to vector<2x16x32xf32>
    %282 = arith.addf %279, %281 : vector<2x16x32xf32>
    %283 = math.tanh %282 : vector<2x16x32xf32>
    %c0_137 = arith.constant 0 : index
    %c0_138 = arith.constant 0 : index
    %284 = vector.load %arg5[%c0_137, %c0_138] : memref<1x32xf32, #tpu.memory_space<vmem>>, vector<1x32xf32>
    %285 = vector.shape_cast %284 : vector<1x32xf32> to vector<1x1x32xf32>
    %286 = vector.broadcast %285 : vector<1x1x32xf32> to vector<2x16x32xf32>
    %287 = arith.mulf %283, %286 : vector<2x16x32xf32>
    %cst_139 = arith.constant dense<0.000000e+00> : vector<2x16xf32>
    %288 = vector.multi_reduction <add>, %287, %cst_139 [2] : vector<2x16x32xf32> to vector<2x16xf32>
    %cst_140 = arith.constant dense<0xFF800000> : vector<2xf32>
    %289 = vector.multi_reduction <maximumf>, %288, %cst_140 [1] : vector<2x16xf32> to vector<2xf32>
    %290 = vector.shape_cast %289 : vector<2xf32> to vector<2x1xf32>
    %291 = vector.broadcast %290 : vector<2x1xf32> to vector<2x16xf32>
    %292 = arith.subf %288, %291 : vector<2x16xf32>
    %293 = math.exp %292 : vector<2x16xf32>
    %cst_141 = arith.constant dense<0.000000e+00> : vector<2xf32>
    %294 = vector.multi_reduction <add>, %293, %cst_141 [1] : vector<2x16xf32> to vector<2xf32>
    %295 = vector.shape_cast %294 : vector<2xf32> to vector<2x1xf32>
    %296 = tpu.reciprocal %295 : vector<2x1xf32> -> vector<2x1xf32>
    %297 = vector.broadcast %296 : vector<2x1xf32> to vector<2x16xf32>
    %298 = arith.mulf %293, %297 : vector<2x16xf32>
    %299 = vector.shape_cast %298 : vector<2x16xf32> to vector<2x1x16xf32>
    %c0_142 = arith.constant 0 : index
    %c0_143 = arith.constant 0 : index
    %c0_144 = arith.constant 0 : index
    %300 = vector.load %arg1[%c0_142, %c0_143, %c0_144] : memref<2x16x128xf32, #tpu.memory_space<vmem>>, vector<2x16x128xf32>
    "tpu.trace_start"() <{level = 10 : i32, message = "bqs,bsg->bqg"}> : () -> ()
    %cst_145 = arith.constant dense<0.000000e+00> : vector<2x1x128xf32>
    %301 = tpu.matmul %299, %300, %cst_145 {dimension_numbers = #tpu.dot_dimension_numbers<[2], [1], [1], [2], [0, 0, 0, 1, 1, 2], [0], [0]>} : vector<2x1x16xf32>, vector<2x16x128xf32>, vector<2x1x128xf32> -> vector<2x1x128xf32>
    "tpu.trace_stop"() : () -> ()
    %cst_146 = arith.constant dense<0.000000e+00> : vector<2x128xf32>
    %302 = vector.multi_reduction <add>, %301, %cst_146 [1] : vector<2x1x128xf32> to vector<2x128xf32>
    %c6 = arith.constant 6 : index
    %c0_147 = arith.constant 0 : index
    %c0_148 = arith.constant 0 : index
    %303 = vector.load %arg3[%c6, %c0_147, %c0_148] : memref<8x2x128xf32, #tpu.memory_space<vmem>>, vector<1x2x128xf32>
    %304 = vector.shape_cast %303 : vector<1x2x128xf32> to vector<2x128xf32>
    %305 = arith.addf %304, %302 : vector<2x128xf32>
    %c0_149 = arith.constant 0 : index
    %c0_150 = arith.constant 0 : index
    %306 = vector.load %arg6[%c0_149, %c0_150] : memref<32x128xf32, #tpu.memory_space<vmem>>, vector<32x128xf32>
    %cst_151 = arith.constant dense<0.000000e+00> : vector<2x128xf32>
    %307 = tpu.matmul %276, %306, %cst_151 {dimension_numbers = #tpu.dot_dimension_numbers<[1], [0], [0], [1], [0, 0, 1, 1], [], []>} : vector<2x32xf32>, vector<32x128xf32>, vector<2x128xf32> -> vector<2x128xf32>
    %308 = arith.addf %305, %307 : vector<2x128xf32>
    %c0_152 = arith.constant 0 : index
    %c0_153 = arith.constant 0 : index
    %309 = vector.load %arg7[%c0_152, %c0_153] : memref<1x128xf32, #tpu.memory_space<vmem>>, vector<1x128xf32>
    %310 = vector.broadcast %309 : vector<1x128xf32> to vector<2x128xf32>
    %311 = arith.addf %308, %310 : vector<2x128xf32>
    %312 = arith.negf %311 : vector<2x128xf32>
    %313 = math.exp %312 : vector<2x128xf32>
    %cst_154 = arith.constant 1.000000e+00 : f32
    %314 = vector.broadcast %cst_154 : f32 to vector<2x128xf32>
    %315 = arith.addf %314, %313 : vector<2x128xf32>
    %316 = arith.divf %314, %315 : vector<2x128xf32>
    %317 = vector.extract_strided_slice %311 {offsets = [0, 64], sizes = [2, 32], strides = [1, 1]} : vector<2x128xf32> to vector<2x32xf32>
    %318 = math.tanh %317 : vector<2x32xf32>
    %319 = vector.extract_strided_slice %316 {offsets = [0, 0], sizes = [2, 32], strides = [1, 1]} : vector<2x128xf32> to vector<2x32xf32>
    %320 = vector.extract_strided_slice %316 {offsets = [0, 32], sizes = [2, 32], strides = [1, 1]} : vector<2x128xf32> to vector<2x32xf32>
    %321 = vector.extract_strided_slice %316 {offsets = [0, 96], sizes = [2, 32], strides = [1, 1]} : vector<2x128xf32> to vector<2x32xf32>
    %322 = arith.mulf %320, %274 : vector<2x32xf32>
    %323 = arith.mulf %319, %318 : vector<2x32xf32>
    %324 = arith.addf %322, %323 : vector<2x32xf32>
    %325 = math.tanh %324 : vector<2x32xf32>
    %326 = arith.mulf %321, %325 : vector<2x32xf32>
    %c0_155 = arith.constant 0 : index
    %c0_156 = arith.constant 0 : index
    %327 = vector.load %arg4[%c0_155, %c0_156] : memref<32x32xf32, #tpu.memory_space<vmem>>, vector<32x32xf32>
    %cst_157 = arith.constant dense<0.000000e+00> : vector<2x32xf32>
    %328 = tpu.matmul %326, %327, %cst_157 {dimension_numbers = #tpu.dot_dimension_numbers<[1], [0], [0], [1], [0, 0, 1, 1], [], []>} : vector<2x32xf32>, vector<32x32xf32>, vector<2x32xf32> -> vector<2x32xf32>
    %c0_158 = arith.constant 0 : index
    %c0_159 = arith.constant 0 : index
    %c0_160 = arith.constant 0 : index
    %329 = vector.load %arg0[%c0_158, %c0_159, %c0_160] : memref<2x16x32xf32, #tpu.memory_space<vmem>>, vector<2x16x32xf32>
    %330 = vector.shape_cast %328 : vector<2x32xf32> to vector<2x1x32xf32>
    %331 = vector.broadcast %330 : vector<2x1x32xf32> to vector<2x16x32xf32>
    %332 = arith.addf %329, %331 : vector<2x16x32xf32>
    %333 = math.tanh %332 : vector<2x16x32xf32>
    %c0_161 = arith.constant 0 : index
    %c0_162 = arith.constant 0 : index
    %334 = vector.load %arg5[%c0_161, %c0_162] : memref<1x32xf32, #tpu.memory_space<vmem>>, vector<1x32xf32>
    %335 = vector.shape_cast %334 : vector<1x32xf32> to vector<1x1x32xf32>
    %336 = vector.broadcast %335 : vector<1x1x32xf32> to vector<2x16x32xf32>
    %337 = arith.mulf %333, %336 : vector<2x16x32xf32>
    %cst_163 = arith.constant dense<0.000000e+00> : vector<2x16xf32>
    %338 = vector.multi_reduction <add>, %337, %cst_163 [2] : vector<2x16x32xf32> to vector<2x16xf32>
    %cst_164 = arith.constant dense<0xFF800000> : vector<2xf32>
    %339 = vector.multi_reduction <maximumf>, %338, %cst_164 [1] : vector<2x16xf32> to vector<2xf32>
    %340 = vector.shape_cast %339 : vector<2xf32> to vector<2x1xf32>
    %341 = vector.broadcast %340 : vector<2x1xf32> to vector<2x16xf32>
    %342 = arith.subf %338, %341 : vector<2x16xf32>
    %343 = math.exp %342 : vector<2x16xf32>
    %cst_165 = arith.constant dense<0.000000e+00> : vector<2xf32>
    %344 = vector.multi_reduction <add>, %343, %cst_165 [1] : vector<2x16xf32> to vector<2xf32>
    %345 = vector.shape_cast %344 : vector<2xf32> to vector<2x1xf32>
    %346 = tpu.reciprocal %345 : vector<2x1xf32> -> vector<2x1xf32>
    %347 = vector.broadcast %346 : vector<2x1xf32> to vector<2x16xf32>
    %348 = arith.mulf %343, %347 : vector<2x16xf32>
    %349 = vector.shape_cast %348 : vector<2x16xf32> to vector<2x1x16xf32>
    %c0_166 = arith.constant 0 : index
    %c0_167 = arith.constant 0 : index
    %c0_168 = arith.constant 0 : index
    %350 = vector.load %arg1[%c0_166, %c0_167, %c0_168] : memref<2x16x128xf32, #tpu.memory_space<vmem>>, vector<2x16x128xf32>
    "tpu.trace_start"() <{level = 10 : i32, message = "bqs,bsg->bqg"}> : () -> ()
    %cst_169 = arith.constant dense<0.000000e+00> : vector<2x1x128xf32>
    %351 = tpu.matmul %349, %350, %cst_169 {dimension_numbers = #tpu.dot_dimension_numbers<[2], [1], [1], [2], [0, 0, 0, 1, 1, 2], [0], [0]>} : vector<2x1x16xf32>, vector<2x16x128xf32>, vector<2x1x128xf32> -> vector<2x1x128xf32>
    "tpu.trace_stop"() : () -> ()
    %cst_170 = arith.constant dense<0.000000e+00> : vector<2x128xf32>
    %352 = vector.multi_reduction <add>, %351, %cst_170 [1] : vector<2x1x128xf32> to vector<2x128xf32>
    %c7 = arith.constant 7 : index
    %c0_171 = arith.constant 0 : index
    %c0_172 = arith.constant 0 : index
    %353 = vector.load %arg3[%c7, %c0_171, %c0_172] : memref<8x2x128xf32, #tpu.memory_space<vmem>>, vector<1x2x128xf32>
    %354 = vector.shape_cast %353 : vector<1x2x128xf32> to vector<2x128xf32>
    %355 = arith.addf %354, %352 : vector<2x128xf32>
    %c0_173 = arith.constant 0 : index
    %c0_174 = arith.constant 0 : index
    %356 = vector.load %arg6[%c0_173, %c0_174] : memref<32x128xf32, #tpu.memory_space<vmem>>, vector<32x128xf32>
    %cst_175 = arith.constant dense<0.000000e+00> : vector<2x128xf32>
    %357 = tpu.matmul %326, %356, %cst_175 {dimension_numbers = #tpu.dot_dimension_numbers<[1], [0], [0], [1], [0, 0, 1, 1], [], []>} : vector<2x32xf32>, vector<32x128xf32>, vector<2x128xf32> -> vector<2x128xf32>
    %358 = arith.addf %355, %357 : vector<2x128xf32>
    %c0_176 = arith.constant 0 : index
    %c0_177 = arith.constant 0 : index
    %359 = vector.load %arg7[%c0_176, %c0_177] : memref<1x128xf32, #tpu.memory_space<vmem>>, vector<1x128xf32>
    %360 = vector.broadcast %359 : vector<1x128xf32> to vector<2x128xf32>
    %361 = arith.addf %358, %360 : vector<2x128xf32>
    %362 = arith.negf %361 : vector<2x128xf32>
    %363 = math.exp %362 : vector<2x128xf32>
    %cst_178 = arith.constant 1.000000e+00 : f32
    %364 = vector.broadcast %cst_178 : f32 to vector<2x128xf32>
    %365 = arith.addf %364, %363 : vector<2x128xf32>
    %366 = arith.divf %364, %365 : vector<2x128xf32>
    %367 = vector.extract_strided_slice %361 {offsets = [0, 64], sizes = [2, 32], strides = [1, 1]} : vector<2x128xf32> to vector<2x32xf32>
    %368 = math.tanh %367 : vector<2x32xf32>
    %369 = vector.extract_strided_slice %366 {offsets = [0, 0], sizes = [2, 32], strides = [1, 1]} : vector<2x128xf32> to vector<2x32xf32>
    %370 = vector.extract_strided_slice %366 {offsets = [0, 32], sizes = [2, 32], strides = [1, 1]} : vector<2x128xf32> to vector<2x32xf32>
    %371 = vector.extract_strided_slice %366 {offsets = [0, 96], sizes = [2, 32], strides = [1, 1]} : vector<2x128xf32> to vector<2x32xf32>
    %372 = arith.mulf %370, %324 : vector<2x32xf32>
    %373 = arith.mulf %369, %368 : vector<2x32xf32>
    %374 = arith.addf %372, %373 : vector<2x32xf32>
    %375 = math.tanh %374 : vector<2x32xf32>
    %376 = arith.mulf %371, %375 : vector<2x32xf32>
    %377 = tpu.concatenate %26, %76, %126, %176, %226, %276, %326, %376 in 0 : vector<2x32xf32>, vector<2x32xf32>, vector<2x32xf32>, vector<2x32xf32>, vector<2x32xf32>, vector<2x32xf32>, vector<2x32xf32>, vector<2x32xf32> -> vector<16x32xf32>
    %c0_179 = arith.constant 0 : index
    %c0_180 = arith.constant 0 : index
    %378 = vector.load %arg8[%c0_179, %c0_180] : memref<32x64xf32, #tpu.memory_space<vmem>>, vector<32x64xf32>
    %cst_181 = arith.constant dense<0.000000e+00> : vector<16x64xf32>
    %379 = tpu.matmul %377, %378, %cst_181 {dimension_numbers = #tpu.dot_dimension_numbers<[1], [0], [0], [1], [0, 0, 1, 1], [], []>} : vector<16x32xf32>, vector<32x64xf32>, vector<16x64xf32> -> vector<16x64xf32>
    %c0_182 = arith.constant 0 : index
    %c0_183 = arith.constant 0 : index
    %380 = vector.load %arg9[%c0_182, %c0_183] : memref<1x64xf32, #tpu.memory_space<vmem>>, vector<1x64xf32>
    %381 = vector.broadcast %380 : vector<1x64xf32> to vector<16x64xf32>
    %382 = arith.addf %379, %381 : vector<16x64xf32>
    %c0_184 = arith.constant 0 : index
    %c0_185 = arith.constant 0 : index
    %383 = vector.load %arg10[%c0_184, %c0_185] : memref<16x64xf32, #tpu.memory_space<vmem>>, vector<16x64xf32>
    tpu.vector_store %arg10[%c0_184, %c0_185], %382 {strides = array<i32>} : memref<16x64xf32, #tpu.memory_space<vmem>>, vector<16x64xf32>,
    return
  }
}

</mosaic_0001>

<llo_original>
// kernel: tpu_custom_call.1
$region0: #{tpu_custom_call.1}
  #allocation0 [shape = 'u32[]', space=smem, size = 0x4, offset = 0x4, fixed_abs, tag = 'smem constant byte address 0x4 - core index']
  #allocation1 [shape = 'u32[144,128]{1,0:T(1,128)}', space=vmem, size = 0x12000, scoped, tag = 'internal scratch']
  %s0 = inlined_call_operand.hbm [shape: f32[2,16,32], index: 0, kind: input, shape index: {}]
  %s1 = inlined_call_operand.hbm [shape: f32[2,16,128], index: 1, kind: input, shape index: {}]
  %s2 = inlined_call_operand.vmem [shape: f32[2,128], index: 2, kind: input, shape index: {}]
  %s3 = inlined_call_operand.hbm [shape: f32[8,2,128], index: 3, kind: input, shape index: {}]
  %s4 = inlined_call_operand.hbm [shape: f32[32,32], index: 4, kind: input, shape index: {}]
  %s5 = inlined_call_operand.vmem [shape: f32[1,32], index: 5, kind: input, shape index: {}]
  %s6 = inlined_call_operand.hbm [shape: f32[32,128], index: 6, kind: input, shape index: {}]
  %s7 = inlined_call_operand.vmem [shape: f32[1,128], index: 7, kind: input, shape index: {}]
  %s8 = inlined_call_operand.hbm [shape: f32[32,64], index: 8, kind: input, shape index: {}]
  %s9 = inlined_call_operand.vmem [shape: f32[1,64], index: 9, kind: input, shape index: {}]
  %s10 = inlined_call_operand.hbm [shape: f32[16,64], index: 10, kind: output, shape index: {}]
  %s11 = sld [smem:[#allocation0]]
  $region74: #{tpu_custom_call.1} parent=0
    _
  %s13 = ssub.s32 1, %s11
  %s14 = scalar_select 0, %s13, %s11
  $region1: #{tpu_custom_call.1} parent=0
    #allocation2 [shape = 'u8[16384]{0}', space=vmem, size = 0x4000, scoped, tag = 'input window, operand 0, single buffered']
    #allocation3 [shape = 's32[1]{0}', space=sflag, size = 0x4, scoped, tag = 'scoped memory for tpu_custom_call.1']
    #allocation4 [shape = 's32[1]{0}', space=sflag, size = 0x4, scoped, tag = 'scoped memory for tpu_custom_call.1']
    #allocation5 [shape = 'u8[16384]{0}', space=vmem, size = 0x4000, scoped, tag = 'input window, operand 1, single buffered']
    #allocation6 [shape = 's32[1]{0}', space=sflag, size = 0x4, scoped, tag = 'scoped memory for tpu_custom_call.1']
    #allocation7 [shape = 'u8[8192]{0}', space=vmem, size = 0x2000, scoped, tag = 'input window, operand 3, single buffered']
    #allocation8 [shape = 'u8[16384]{0}', space=vmem, size = 0x4000, scoped, tag = 'input window, operand 4, single buffered']
    #allocation9 [shape = 's32[1]{0}', space=sflag, size = 0x4, scoped, tag = 'scoped memory for tpu_custom_call.1']
    #allocation10 [shape = 'u8[16384]{0}', space=vmem, size = 0x4000, scoped, tag = 'input window, operand 6, single buffered']
    #allocation11 [shape = 'u8[16384]{0}', space=vmem, size = 0x4000, scoped, tag = 'input window, operand 8, single buffered']
    #allocation12 [shape = 's32[1]{0}', space=sflag, size = 0x4, scoped, tag = 'scoped memory for tpu_custom_call.1']
    #allocation13 [shape = 'u8[8192]{0}', space=vmem, size = 0x2000, scoped, tag = 'output window, operand 0, single buffered']
    %15 = vsyncpa [#allocation3], 0
    %16 = vsyncpa [#allocation6], 0
    %17 = vsyncpa [#allocation9], 0
    %18 = vsyncpa [#allocation12], 0
    %19 = vsyncpa [#allocation4], 0
    // Predicated region
    $region2: #{tpu_custom_call.1} parent=1 // pred_check
      _
    $region3: #{tpu_custom_call.1} parent=1 // pred_check_branch
      %21 = sbr.rel (0) target = $region5
    $region4: #{tpu_custom_call.1} parent=1 // pred_region
      %s23 = ssub.s32 512, 512
      %24 = vsyncadd [#allocation3], %s23
      %s25 = sshll.u32 [#allocation2], 4
      %s26 = int_to_ptr.vmem [resolvable:$true] %s25
      %31 = dma.hbm_to_vmem [thread:$0]  %s0, 512, %s26, [#allocation3], 128, 128, 8
    $region5: #{tpu_custom_call.1} parent=1 // pred_fallthru
      _
    // Predicated region
    $region6: #{tpu_custom_call.1} parent=1 // pred_check
      _
    $region7: #{tpu_custom_call.1} parent=1 // pred_check_branch
      %33 = sbr.rel (0) target = $region9
    $region8: #{tpu_custom_call.1} parent=1 // pred_region
      %s35 = ssub.s32 512, 512
      %36 = vsyncadd [#allocation6], %s35
      %s37 = sshll.u32 [#allocation5], 4
      %s38 = int_to_ptr.vmem [resolvable:$true] %s37
      %43 = dma.hbm_to_vmem [thread:$0]  %s1, 512, %s38, [#allocation6], 128, 128, 8
    $region9: #{tpu_custom_call.1} parent=1 // pred_fallthru
      _
    // Predicated region
    $region10: #{tpu_custom_call.1} parent=1 // pred_check
      _
    $region11: #{tpu_custom_call.1} parent=1 // pred_check_branch
      %45 = sbr.rel (0) target = $region13
    $region12: #{tpu_custom_call.1} parent=1 // pred_region
      _
    $region13: #{tpu_custom_call.1} parent=1 // pred_fallthru
      _
    // Predicated region
    $region14: #{tpu_custom_call.1} parent=1 // pred_check
      _
    $region15: #{tpu_custom_call.1} parent=1 // pred_check_branch
      %47 = sbr.rel (0) target = $region17
    $region16: #{tpu_custom_call.1} parent=1 // pred_region
      %s49 = ssub.s32 256, 256
      %50 = vsyncadd [#allocation6], %s49
      %s51 = sshll.u32 [#allocation7], 4
      %s52 = int_to_ptr.vmem [resolvable:$true] %s51
      %57 = dma.hbm_to_vmem [thread:$0]  %s3, 256, %s52, [#allocation6], 32, 32, 2
    $region17: #{tpu_custom_call.1} parent=1 // pred_fallthru
      _
    // Predicated region
    $region18: #{tpu_custom_call.1} parent=1 // pred_check
      _
    $region19: #{tpu_custom_call.1} parent=1 // pred_check_branch
      %59 = sbr.rel (0) target = $region21
    $region20: #{tpu_custom_call.1} parent=1 // pred_region
      %s61 = ssub.s32 512, 512
      %62 = vsyncadd [#allocation9], %s61
      %s63 = sshll.u32 [#allocation8], 4
      %s64 = int_to_ptr.vmem [resolvable:$true] %s63
      %69 = dma.hbm_to_vmem [thread:$0]  %s4, 512, %s64, [#allocation9], 128, 128, 8
    $region21: #{tpu_custom_call.1} parent=1 // pred_fallthru
      _
    // Predicated region
    $region22: #{tpu_custom_call.1} parent=1 // pred_check
      _
    $region23: #{tpu_custom_call.1} parent=1 // pred_check_branch
      %71 = sbr.rel (0) target = $region25
    $region24: #{tpu_custom_call.1} parent=1 // pred_region
      _
    $region25: #{tpu_custom_call.1} parent=1 // pred_fallthru
      _
    // Predicated region
    $region26: #{tpu_custom_call.1} parent=1 // pred_check
      _
    $region27: #{tpu_custom_call.1} parent=1 // pred_check_branch
      %73 = sbr.rel (0) target = $region29
    $region28: #{tpu_custom_call.1} parent=1 // pred_region
      %s75 = ssub.s32 512, 512
      %76 = vsyncadd [#allocation9], %s75
      %s77 = sshll.u32 [#allocation10], 4
      %s78 = int_to_ptr.vmem [resolvable:$true] %s77
      %83 = dma.hbm_to_vmem [thread:$0]  %s6, 512, %s78, [#allocation9], 128, 128, 8
    $region29: #{tpu_custom_call.1} parent=1 // pred_fallthru
      _
    // Predicated region
    $region30: #{tpu_custom_call.1} parent=1 // pred_check
      _
    $region31: #{tpu_custom_call.1} parent=1 // pred_check_branch
      %85 = sbr.rel (0) target = $region33
    $region32: #{tpu_custom_call.1} parent=1 // pred_region
      _
    $region33: #{tpu_custom_call.1} parent=1 // pred_fallthru
      _
    // Predicated region
    $region34: #{tpu_custom_call.1} parent=1 // pred_check
      _
    $region35: #{tpu_custom_call.1} parent=1 // pred_check_branch
      %87 = sbr.rel (0) target = $region37
    $region36: #{tpu_custom_call.1} parent=1 // pred_region
      %s89 = ssub.s32 512, 512
      %90 = vsyncadd [#allocation12], %s89
      %s91 = sshll.u32 [#allocation11], 4
      %s92 = int_to_ptr.vmem [resolvable:$true] %s91
      %97 = dma.hbm_to_vmem [thread:$0]  %s8, 512, %s92, [#allocation12], 128, 128, 8
    $region37: #{tpu_custom_call.1} parent=1 // pred_fallthru
      _
    // Predicated region
    $region38: #{tpu_custom_call.1} parent=1 // pred_check
      _
    $region39: #{tpu_custom_call.1} parent=1 // pred_check_branch
      %99 = sbr.rel (0) target = $region41
    $region40: #{tpu_custom_call.1} parent=1 // pred_region
      _
    $region41: #{tpu_custom_call.1} parent=1 // pred_fallthru
      _
    // Predicated region
    $region42: #{tpu_custom_call.1} parent=1 // pred_check
      _
    $region43: #{tpu_custom_call.1} parent=1 // pred_check_branch
      %101 = sbr.rel (0) target = $region45
    $region44: #{tpu_custom_call.1} parent=1 // pred_region
      %102 = dma.done [#allocation3], 512
    $region45: #{tpu_custom_call.1} parent=1 // pred_fallthru
      _
    // Predicated region
    $region46: #{tpu_custom_call.1} parent=1 // pred_check
      _
    $region47: #{tpu_custom_call.1} parent=1 // pred_check_branch
      %104 = sbr.rel (0) target = $region49
    $region48: #{tpu_custom_call.1} parent=1 // pred_region
      %105 = dma.done [#allocation6], 512
    $region49: #{tpu_custom_call.1} parent=1 // pred_fallthru
      _
    // Predicated region
    $region50: #{tpu_custom_call.1} parent=1 // pred_check
      _
    $region51: #{tpu_custom_call.1} parent=1 // pred_check_branch
      %107 = sbr.rel (0) target = $region53
    $region52: #{tpu_custom_call.1} parent=1 // pred_region
      %108 = dma.done [#allocation6], 256
    $region53: #{tpu_custom_call.1} parent=1 // pred_fallthru
      _
    // Predicated region
    $region54: #{tpu_custom_call.1} parent=1 // pred_check
      _
    $region55: #{tpu_custom_call.1} parent=1 // pred_check_branch
      %110 = sbr.rel (0) target = $region57
    $region56: #{tpu_custom_call.1} parent=1 // pred_region
      %111 = dma.done [#allocation9], 512
    $region57: #{tpu_custom_call.1} parent=1 // pred_fallthru
      _
    // Predicated region
    $region58: #{tpu_custom_call.1} parent=1 // pred_check
      _
    $region59: #{tpu_custom_call.1} parent=1 // pred_check_branch
      %113 = sbr.rel (0) target = $region61
    $region60: #{tpu_custom_call.1} parent=1 // pred_region
      %114 = dma.done [#allocation9], 512
    $region61: #{tpu_custom_call.1} parent=1 // pred_fallthru
      _
    // Predicated region
    $region62: #{tpu_custom_call.1} parent=1 // pred_check
      _
    $region63: #{tpu_custom_call.1} parent=1 // pred_check_branch
      %116 = sbr.rel (0) target = $region65
    $region64: #{tpu_custom_call.1} parent=1 // pred_region
      %117 = dma.done [#allocation12], 512
    $region65: #{tpu_custom_call.1} parent=1 // pred_fallthru
      _
    %v118 = vld [vmem:[%s2] sm:$0x3]
    %v119 = vld [vmem:[#allocation7] sm:$0x3]
    %v120 = vadd.f32 %v119, %v118
    %v121 = vld [vmem:[#allocation10] sm:$0xff]
    %v122 = vld [vmem:[#allocation10 + $0x8] sm:$0xff]
    %v123 = vld [vmem:[#allocation10 + $0x10] sm:$0xff]
    %v124 = vld [vmem:[#allocation10 + $0x18] sm:$0xff]
    %vm125 = vcmask 261120
    %v127 = vsel %vm125, 0.0, 0
    %129 = vmatprep.subr.mxu0 0.0
    %130 = vmatpush1.msra.mxu0 0.0
    %131 = vmatprep.subr.mxu0 0.0
    %132 = vmatpush1.msra.mxu0 0.0
    %133 = vmatprep.subr.mxu0 0.0
    %134 = vmatpush1.msra.mxu0 0.0
    %135 = vmatprep.subr.mxu0 0.0
    %136 = vmatpush1.msra.mxu0 0.0
    %137 = vmatprep.subr.mxu0 0.0
    %138 = vmatpush1.msra.mxu0 0.0
    %139 = vmatprep.subr.mxu0 0.0
    %140 = vmatpush1.msra.mxu0 0.0
    %141 = vmatprep.subr.mxu0 0.0
    %142 = vmatpush1.msra.mxu0 0.0
    %143 = vmatprep.subr.mxu0 0.0
    %144 = vmatpush1.msra.mxu0 0.0
    %145 = vmatprep.subr.mxu0 0.0
    %146 = vmatpush1.msra.mxu0 0.0
    %147 = vmatprep.subr.mxu0 0.0
    %148 = vmatpush1.msra.mxu0 0.0
    %149 = vmatprep.subr.mxu0 0.0
    %150 = vmatpush1.msra.mxu0 0.0
    %151 = vmatprep.subr.mxu0 0.0
    %152 = vmatpush1.msra.mxu0 0.0
    %153 = vmatprep.subr.mxu0 0.0
    %154 = vmatpush1.msra.mxu0 %v124
    %155 = vmatprep.subr.mxu0 0.0
    %156 = vmatpush1.msra.mxu0 %v123
    %157 = vmatprep.subr.mxu0 0.0
    %158 = vmatpush1.msra.mxu0 %v122
    %159 = vmatprep.subr.mxu0 0.0
    %160 = vmatpush1.msra.mxu0 %v121
    %161 = vmatprep.subr.mxu0 0.0
    %162 = vmatpush2.msra.mxu0 0.0
    %163 = vmatprep.subr.mxu0 0.0
    %164 = vmatpush2.msra.mxu0 0.0
    %165 = vmatprep.subr.mxu0 0.0
    %166 = vmatpush2.msra.mxu0 0.0
    %167 = vmatprep.subr.mxu0 0.0
    %168 = vmatpush2.msra.mxu0 0.0
    %169 = vmatprep.subr.mxu0 0.0
    %170 = vmatpush2.msra.mxu0 0.0
    %171 = vmatprep.subr.mxu0 0.0
    %172 = vmatpush2.msra.mxu0 0.0
    %173 = vmatprep.subr.mxu0 0.0
    %174 = vmatpush2.msra.mxu0 0.0
    %175 = vmatprep.subr.mxu0 0.0
    %176 = vmatpush2.msra.mxu0 0.0
    %177 = vmatprep.subr.mxu0 0.0
    %178 = vmatpush2.msra.mxu0 0.0
    %179 = vmatprep.subr.mxu0 0.0
    %180 = vmatpush2.msra.mxu0 0.0
    %181 = vmatprep.subr.mxu0 0.0
    %182 = vmatpush2.msra.mxu0 0.0
    %183 = vmatprep.subr.mxu0 0.0
    %184 = vmatpush2.msra.mxu0 0.0
    %185 = vmatprep.subr.mxu0 0.0
    %186 = vmatpush2.msra.mxu0 0.0
    %187 = vmatprep.subr.mxu0 0.0
    %188 = vmatpush2.msra.mxu0 0.0
    %189 = vmatprep.subr.mxu0 0.0
    %190 = vmatpush2.msra.mxu0 0.0
    %191 = vmatprep.subr.mxu0 0.0
    %192 = vmatpush2.msra.mxu0 0.0
    %193 = vmatprep.mubr.f32.mxu0 0.0
    %194 = vmatmul.mubr.f32.gmra.mxu0 %v127
    %v195 = vpop.f32.mrf.mxu0
    %v196 = vadd.f32 0.0, %v195
    %v197 = vpop.f32.mrf.mxu0
    %198 = vdwg.mxu0
    %v199 = vadd.f32 %v120, %v196
    %v200 = vld [vmem:[%s7] sm:$0x1]
    %v202 = vlaneseq
    %v203 = vshrl.u32 %v202, 7
    %v204 = vsub.s32 0, %v203
    %v205 = vrot.slane %v200, %v204
    %v207 = vadd.f32 %v199, %v205
    %v208 = vxor.u32 %v207, 2147483648
    %v209 = vmul.f32 %v208, 1.442695
    %v210 = vpow.pop %v209
    %v211 = vadd.f32 %v210, 1.0
    %v212 = vrcp.pop %v211
    %v213 = vmul.f32 1.0, %v212
    %v214 = vtanh.pop %v207
    %v215 = vmul.f32 %v213, 0.0
    %217 = vrot.lane.b32.xlu0 %v214, 64
    %v218 = vpop.permute.xlu0 %217
    %v220 = vmul.f32 %v213, %v218
    %222 = vrot.lane.b32.xlu0 %v220, 32
    %v223 = vpop.permute.xlu0 %222
    %v225 = vadd.f32 %v215, %v223
    %v226 = vtanh.pop %v225
    %228 = vrot.lane.b32.xlu0 %v226, 64
    %v229 = vpop.permute.xlu0 %228
    %v231 = vmul.f32 %v213, %v229
    %v232 = vld [vmem:[#allocation8] sm:$0xff]
    %v233 = vld [vmem:[#allocation8 + $0x8] sm:$0xff]
    %v234 = vld [vmem:[#allocation8 + $0x10] sm:$0xff]
    %v235 = vld [vmem:[#allocation8 + $0x18] sm:$0xff]
    %237 = vrot.lane.b32.xlu0 %v231, 32
    %v238 = vpop.permute.xlu0 %237
    %v239 = vsel %vm125, %v238, 0
    %241 = vmatprep.subr.mxu0 0.0
    %242 = vmatpush1.msra.mxu0 0.0
    %243 = vmatprep.subr.mxu0 0.0
    %244 = vmatpush1.msra.mxu0 0.0
    %245 = vmatprep.subr.mxu0 0.0
    %246 = vmatpush1.msra.mxu0 0.0
    %247 = vmatprep.subr.mxu0 0.0
    %248 = vmatpush1.msra.mxu0 0.0
    %249 = vmatprep.subr.mxu0 0.0
    %250 = vmatpush1.msra.mxu0 0.0
    %251 = vmatprep.subr.mxu0 0.0
    %252 = vmatpush1.msra.mxu0 0.0
    %253 = vmatprep.subr.mxu0 0.0
    %254 = vmatpush1.msra.mxu0 0.0
    %255 = vmatprep.subr.mxu0 0.0
    %256 = vmatpush1.msra.mxu0 0.0
    %257 = vmatprep.subr.mxu0 0.0
    %258 = vmatpush1.msra.mxu0 0.0
    %259 = vmatprep.subr.mxu0 0.0
    %260 = vmatpush1.msra.mxu0 0.0
    %261 = vmatprep.subr.mxu0 0.0
    %262 = vmatpush1.msra.mxu0 0.0
    %263 = vmatprep.subr.mxu0 0.0
    %264 = vmatpush1.msra.mxu0 0.0
    %265 = vmatprep.subr.mxu0 0.0
    %266 = vmatpush1.msra.mxu0 %v235
    %267 = vmatprep.subr.mxu0 0.0
    %268 = vmatpush1.msra.mxu0 %v234
    %269 = vmatprep.subr.mxu0 0.0
    %270 = vmatpush1.msra.mxu0 %v233
    %271 = vmatprep.subr.mxu0 0.0
    %272 = vmatpush1.msra.mxu0 %v232
    %273 = vmatprep.subr.mxu0 0.0
    %274 = vmatpush2.msra.mxu0 0.0
    %275 = vmatprep.subr.mxu0 0.0
    %276 = vmatpush2.msra.mxu0 0.0
    %277 = vmatprep.subr.mxu0 0.0
    %278 = vmatpush2.msra.mxu0 0.0
    %279 = vmatprep.subr.mxu0 0.0
    %280 = vmatpush2.msra.mxu0 0.0
    %281 = vmatprep.subr.mxu0 0.0
    %282 = vmatpush2.msra.mxu0 0.0
    %283 = vmatprep.subr.mxu0 0.0
    %284 = vmatpush2.msra.mxu0 0.0
    %285 = vmatprep.subr.mxu0 0.0
    %286 = vmatpush2.msra.mxu0 0.0
    %287 = vmatprep.subr.mxu0 0.0
    %288 = vmatpush2.msra.mxu0 0.0
    %289 = vmatprep.subr.mxu0 0.0
    %290 = vmatpush2.msra.mxu0 0.0
    %291 = vmatprep.subr.mxu0 0.0
    %292 = vmatpush2.msra.mxu0 0.0
    %293 = vmatprep.subr.mxu0 0.0
    %294 = vmatpush2.msra.mxu0 0.0
    %295 = vmatprep.subr.mxu0 0.0
    %296 = vmatpush2.msra.mxu0 0.0
    %297 = vmatprep.subr.mxu0 0.0
    %298 = vmatpush2.msra.mxu0 0.0
    %299 = vmatprep.subr.mxu0 0.0
    %300 = vmatpush2.msra.mxu0 0.0
    %301 = vmatprep.subr.mxu0 0.0
    %302 = vmatpush2.msra.mxu0 0.0
    %303 = vmatprep.subr.mxu0 0.0
    %304 = vmatpush2.msra.mxu0 0.0
    %305 = vmatprep.mubr.f32.mxu0 0.0
    %306 = vmatmul.mubr.f32.gmra.mxu0 %v239
    %v307 = vpop.f32.mrf.mxu0
    %v308 = vadd.f32 0.0, %v307
    %v309 = vpop.f32.mrf.mxu0
    %310 = vdwg.mxu0
    %v311 = vld [vmem:[#allocation2] sm:$0xff]
    %v312 = vld [vmem:[#allocation2 + $0x8] sm:$0xff]
    %v313 = vld [vmem:[#allocation2 + $0x10] sm:$0xff]
    %v314 = vld [vmem:[#allocation2 + $0x18] sm:$0xff]
    %v317 = vunpack.c.l.s4 1966171168
    %v318 = vunpack.c.0.s8 %v317
    %v319 = vlaneseq
    %v320 = vshrl.u32 %v319, 7
    %v321 = vsub.s32 %v318, %v320
    %v322 = vrot.slane %v308, %v321
    %v323 = vcombine.high %v322, %v322
    %v325 = vunpack.c.l.s4 1966171168
    %v326 = vunpack.c.0.s8 %v325
    %v327 = vlaneseq
    %v328 = vshrl.u32 %v327, 7
    %v329 = vsub.s32 %v326, %v328
    %v330 = vrot.slane %v322, %v329
    %v332 = vunpack.c.l.s4 1966171168
    %v333 = vunpack.c.0.s8 %v332
    %v334 = vlaneseq
    %v335 = vshrl.u32 %v334, 7
    %v336 = vsub.s32 %v333, %v335
    %v337 = vrot.slane %v323, %v336
    %v338 = vlaneseq
    %v339 = vshrl.u32 %v338, 7
    %v340 = vsub.s32 0, %v339
    %v341 = vrot.slane %v330, %v340
    %v342 = vlaneseq
    %v343 = vshrl.u32 %v342, 7
    %v344 = vsub.s32 0, %v343
    %v345 = vrot.slane %v337, %v344
    %v348 = vadd.f32 %v311, %v341
    %v349 = vadd.f32 %v312, %v341
    %v350 = vadd.f32 %v313, %v345
    %v351 = vadd.f32 %v314, %v345
    %v352 = vtanh.pop %v348
    %v353 = vtanh.pop %v349
    %v354 = vtanh.pop %v350
    %v355 = vtanh.pop %v351
    %v356 = vld [vmem:[%s5] sm:$0x1]
    %v358 = vlaneseq
    %v359 = vshrl.u32 %v358, 7
    %v360 = vsub.s32 0, %v359
    %v361 = vrot.slane %v356, %v360
    %v363 = vmul.f32 %v352, %v361
    %v364 = vmul.f32 %v353, %v361
    %v365 = vmul.f32 %v354, %v361
    %v366 = vmul.f32 %v355, %v361
    %v367 = vsel %vm125, %v363, 0.0
    %368 = vadd.xlane.f32.xlu0 %v367
    %v369 = vpop.xlane.xlu0 %368
    %v370 = vsel %vm125, %v364, 0.0
    %371 = vadd.xlane.f32.xlu0 %v370
    %v372 = vpop.xlane.xlu0 %371
    %v373 = vsel %vm125, %v365, 0.0
    %374 = vadd.xlane.f32.xlu0 %v373
    %v375 = vpop.xlane.xlu0 %374
    %v376 = vsel %vm125, %v366, 0.0
    %377 = vadd.xlane.f32.xlu0 %v376
    %v378 = vpop.xlane.xlu0 %377
    %v383 = vlaneseq
    %v384 = vand.u32 %v383, 127
    %v385 = vlaneseq
    %v386 = vshrl.u32 %v385, 7
    %v387 = vsub.s32 %v384, %v386
    %v388 = vrot.slane %v369, %v387
    %v389 = vadd.s32 %v384, 4294967288
    %v390 = vlaneseq
    %v391 = vshrl.u32 %v390, 7
    %v392 = vsub.s32 %v389, %v391
    %v393 = vrot.slane %v372, %v392
    %vm394 = vcmask 130112
    %v395 = vsel %vm394, %v393, %v388
    %v396 = vlaneseq
    %v397 = vshrl.u32 %v396, 7
    %v398 = vsub.s32 %v384, %v397
    %v399 = vrot.slane %v375, %v398
    %v400 = vlaneseq
    %v401 = vshrl.u32 %v400, 7
    %v402 = vsub.s32 %v389, %v401
    %v403 = vrot.slane %v378, %v402
    %v404 = vsel %vm394, %v403, %v399
    %vm405 = vcmask 1041409
    %v406 = vsel %vm405, %v404, %v395
    %vm408 = vcmask 123904
    %v409 = vsel %vm408, %v406, -inf
    %410 = vmax.xlane.f32.xlu0 %v409
    %v411 = vpop.xlane.xlu0 %410
    %v413 = vlaneseq
    %v414 = vshrl.u32 %v413, 7
    %v415 = vsub.s32 0, %v414
    %v416 = vrot.slane %v411, %v415
    %v417 = vlaneseq
    %v418 = vshrl.u32 %v417, 7
    %v419 = vsub.s32 1, %v418
    %v420 = vrot.slane %v411, %v419
    %v423 = vsub.f32 %v369, %v416
    %v424 = vsub.f32 %v372, %v416
    %v425 = vsub.f32 %v375, %v420
    %v426 = vsub.f32 %v378, %v420
    %v427 = vmul.f32 %v423, 1.442695
    %v428 = vpow.pop %v427
    %v429 = vmul.f32 %v424, 1.442695
    %v430 = vpow.pop %v429
    %v431 = vmul.f32 %v425, 1.442695
    %v432 = vpow.pop %v431
    %v433 = vmul.f32 %v426, 1.442695
    %v434 = vpow.pop %v433
    %439 = vset.pattern.permute.xlu0 0
    %440 = vperm.xlu0 %439, %v428
    %v441 = vpop.permute.xlu0 %440
    %442 = vset.pattern.permute.xlu0 0
    %443 = vperm.xlu0 %442, %v430
    %v444 = vpop.permute.xlu0 %443
    %445 = vset.pattern.permute.xlu0 0
    %446 = vperm.xlu0 %445, %v432
    %v447 = vpop.permute.xlu0 %446
    %448 = vset.pattern.permute.xlu0 0
    %449 = vperm.xlu0 %448, %v434
    %v450 = vpop.permute.xlu0 %449
    %v451 = vlaneseq
    %v452 = vshrl.u32 %v451, 7
    %v453 = vsub.s32 %v384, %v452
    %v454 = vrot.slane %v441, %v453
    %v455 = vlaneseq
    %v456 = vshrl.u32 %v455, 7
    %v457 = vsub.s32 %v389, %v456
    %v458 = vrot.slane %v444, %v457
    %v459 = vsel %vm394, %v458, %v454
    %v460 = vlaneseq
    %v461 = vshrl.u32 %v460, 7
    %v462 = vsub.s32 %v384, %v461
    %v463 = vrot.slane %v447, %v462
    %v464 = vlaneseq
    %v465 = vshrl.u32 %v464, 7
    %v466 = vsub.s32 %v389, %v465
    %v467 = vrot.slane %v450, %v466
    %v468 = vsel %vm394, %v467, %v463
    %v469 = vsel %vm405, %v468, %v459
    %v471 = vsel %vm408, %v469, 0.0
    %472 = vadd.xlane.f32.xlu0 %v471
    %v473 = vpop.xlane.xlu0 %472
    %v474 = vrcp.pop %v473
    %v476 = vlaneseq
    %v477 = vshrl.u32 %v476, 7
    %v478 = vsub.s32 0, %v477
    %v479 = vrot.slane %v474, %v478
    %v480 = vlaneseq
    %v481 = vshrl.u32 %v480, 7
    %v482 = vsub.s32 1, %v481
    %v483 = vrot.slane %v474, %v482
    %v486 = vmul.f32 %v428, %v479
    %v487 = vmul.f32 %v430, %v479
    %v488 = vmul.f32 %v432, %v483
    %v489 = vmul.f32 %v434, %v483
    %v490 = vld [vmem:[#allocation5] sm:$0xff]
    %v491 = vld [vmem:[#allocation5 + $0x8] sm:$0xff]
    %v492 = vld [vmem:[#allocation5 + $0x10] sm:$0xff]
    %v493 = vld [vmem:[#allocation5 + $0x18] sm:$0xff]
    %496 = vset.pattern.permute.xlu0 0
    %497 = vperm.xlu0 %496, %v486
    %v498 = vpop.permute.xlu0 %497
    %499 = vset.pattern.permute.xlu0 0
    %500 = vperm.xlu0 %499, %v487
    %v501 = vpop.permute.xlu0 %500
    %v502 = vlaneseq
    %v503 = vshrl.u32 %v502, 7
    %v504 = vsub.s32 %v384, %v503
    %v505 = vrot.slane %v498, %v504
    %v506 = vlaneseq
    %v507 = vshrl.u32 %v506, 7
    %v508 = vsub.s32 %v389, %v507
    %v509 = vrot.slane %v501, %v508
    %v510 = vsel %vm394, %v509, %v505
    %vm511 = vcmask 130048
    %v512 = vsel %vm511, %v510, 0
    %514 = vmatprep.subr.mxu0 0.0
    %515 = vmatpush1.msra.mxu0 0.0
    %516 = vmatprep.subr.mxu0 0.0
    %517 = vmatpush1.msra.mxu0 0.0
    %518 = vmatprep.subr.mxu0 0.0
    %519 = vmatpush1.msra.mxu0 0.0
    %520 = vmatprep.subr.mxu0 0.0
    %521 = vmatpush1.msra.mxu0 0.0
    %522 = vmatprep.subr.mxu0 0.0
    %523 = vmatpush1.msra.mxu0 0.0
    %524 = vmatprep.subr.mxu0 0.0
    %525 = vmatpush1.msra.mxu0 0.0
    %526 = vmatprep.subr.mxu0 0.0
    %527 = vmatpush1.msra.mxu0 0.0
    %528 = vmatprep.subr.mxu0 0.0
    %529 = vmatpush1.msra.mxu0 0.0
    %530 = vmatprep.subr.mxu0 0.0
    %531 = vmatpush1.msra.mxu0 0.0
    %532 = vmatprep.subr.mxu0 0.0
    %533 = vmatpush1.msra.mxu0 0.0
    %534 = vmatprep.subr.mxu0 0.0
    %535 = vmatpush1.msra.mxu0 0.0
    %536 = vmatprep.subr.mxu0 0.0
    %537 = vmatpush1.msra.mxu0 0.0
    %538 = vmatprep.subr.mxu0 0.0
    %539 = vmatpush1.msra.mxu0 0.0
    %540 = vmatprep.subr.mxu0 0.0
    %541 = vmatpush1.msra.mxu0 0.0
    %542 = vmatprep.subr.mxu0 0.0
    %543 = vmatpush1.msra.mxu0 %v491
    %544 = vmatprep.subr.mxu0 0.0
    %545 = vmatpush1.msra.mxu0 %v490
    %546 = vmatprep.subr.mxu0 0.0
    %547 = vmatpush2.msra.mxu0 0.0
    %548 = vmatprep.subr.mxu0 0.0
    %549 = vmatpush2.msra.mxu0 0.0
    %550 = vmatprep.subr.mxu0 0.0
    %551 = vmatpush2.msra.mxu0 0.0
    %552 = vmatprep.subr.mxu0 0.0
    %553 = vmatpush2.msra.mxu0 0.0
    %554 = vmatprep.subr.mxu0 0.0
    %555 = vmatpush2.msra.mxu0 0.0
    %556 = vmatprep.subr.mxu0 0.0
    %557 = vmatpush2.msra.mxu0 0.0
    %558 = vmatprep.subr.mxu0 0.0
    %559 = vmatpush2.msra.mxu0 0.0
    %560 = vmatprep.subr.mxu0 0.0
    %561 = vmatpush2.msra.mxu0 0.0
    %562 = vmatprep.subr.mxu0 0.0
    %563 = vmatpush2.msra.mxu0 0.0
    %564 = vmatprep.subr.mxu0 0.0
    %565 = vmatpush2.msra.mxu0 0.0
    %566 = vmatprep.subr.mxu0 0.0
    %567 = vmatpush2.msra.mxu0 0.0
    %568 = vmatprep.subr.mxu0 0.0
    %569 = vmatpush2.msra.mxu0 0.0
    %570 = vmatprep.subr.mxu0 0.0
    %571 = vmatpush2.msra.mxu0 0.0
    %572 = vmatprep.subr.mxu0 0.0
    %573 = vmatpush2.msra.mxu0 0.0
    %574 = vmatprep.subr.mxu0 0.0
    %575 = vmatpush2.msra.mxu0 0.0
    %576 = vmatprep.subr.mxu0 0.0
    %577 = vmatpush2.msra.mxu0 0.0
    %578 = vmatprep.mubr.f32.mxu0 0.0
    %579 = vmatmul.mubr.f32.gmra.mxu0 %v512
    %v580 = vpop.f32.mrf.mxu0
    %v581 = vadd.f32 0.0, %v580
    %v582 = vpop.f32.mrf.mxu0
    %583 = vdwg.mxu0
    %586 = vset.pattern.permute.xlu0 0
    %587 = vperm.xlu0 %586, %v488
    %v588 = vpop.permute.xlu0 %587
    %589 = vset.pattern.permute.xlu0 0
    %590 = vperm.xlu0 %589, %v489
    %v591 = vpop.permute.xlu0 %590
    %v592 = vlaneseq
    %v593 = vshrl.u32 %v592, 7
    %v594 = vsub.s32 %v384, %v593
    %v595 = vrot.slane %v588, %v594
    %v596 = vlaneseq
    %v597 = vshrl.u32 %v596, 7
    %v598 = vsub.s32 %v389, %v597
    %v599 = vrot.slane %v591, %v598
    %v600 = vsel %vm394, %v599, %v595
    %v601 = vsel %vm511, %v600, 0
    %603 = vmatprep.subr.mxu0 0.0
    %604 = vmatpush1.msra.mxu0 0.0
    %605 = vmatprep.subr.mxu0 0.0
    %606 = vmatpush1.msra.mxu0 0.0
    %607 = vmatprep.subr.mxu0 0.0
    %608 = vmatpush1.msra.mxu0 0.0
    %609 = vmatprep.subr.mxu0 0.0
    %610 = vmatpush1.msra.mxu0 0.0
    %611 = vmatprep.subr.mxu0 0.0
    %612 = vmatpush1.msra.mxu0 0.0
    %613 = vmatprep.subr.mxu0 0.0
    %614 = vmatpush1.msra.mxu0 0.0
    %615 = vmatprep.subr.mxu0 0.0
    %616 = vmatpush1.msra.mxu0 0.0
    %617 = vmatprep.subr.mxu0 0.0
    %618 = vmatpush1.msra.mxu0 0.0
    %619 = vmatprep.subr.mxu0 0.0
    %620 = vmatpush1.msra.mxu0 0.0
    %621 = vmatprep.subr.mxu0 0.0
    %622 = vmatpush1.msra.mxu0 0.0
    %623 = vmatprep.subr.mxu0 0.0
    %624 = vmatpush1.msra.mxu0 0.0
    %625 = vmatprep.subr.mxu0 0.0
    %626 = vmatpush1.msra.mxu0 0.0
    %627 = vmatprep.subr.mxu0 0.0
    %628 = vmatpush1.msra.mxu0 0.0
    %629 = vmatprep.subr.mxu0 0.0
    %630 = vmatpush1.msra.mxu0 0.0
    %631 = vmatprep.subr.mxu0 0.0
    %632 = vmatpush1.msra.mxu0 %v493
    %633 = vmatprep.subr.mxu0 0.0
    %634 = vmatpush1.msra.mxu0 %v492
    %635 = vmatprep.subr.mxu0 0.0
    %636 = vmatpush2.msra.mxu0 0.0
    %637 = vmatprep.subr.mxu0 0.0
    %638 = vmatpush2.msra.mxu0 0.0
    %639 = vmatprep.subr.mxu0 0.0
    %640 = vmatpush2.msra.mxu0 0.0
    %641 = vmatprep.subr.mxu0 0.0
    %642 = vmatpush2.msra.mxu0 0.0
    %643 = vmatprep.subr.mxu0 0.0
    %644 = vmatpush2.msra.mxu0 0.0
    %645 = vmatprep.subr.mxu0 0.0
    %646 = vmatpush2.msra.mxu0 0.0
    %647 = vmatprep.subr.mxu0 0.0
    %648 = vmatpush2.msra.mxu0 0.0
    %649 = vmatprep.subr.mxu0 0.0
    %650 = vmatpush2.msra.mxu0 0.0
    %651 = vmatprep.subr.mxu0 0.0
    %652 = vmatpush2.msra.mxu0 0.0
    %653 = vmatprep.subr.mxu0 0.0
    %654 = vmatpush2.msra.mxu0 0.0
    %655 = vmatprep.subr.mxu0 0.0
    %656 = vmatpush2.msra.mxu0 0.0
    %657 = vmatprep.subr.mxu0 0.0
    %658 = vmatpush2.msra.mxu0 0.0
    %659 = vmatprep.subr.mxu0 0.0
    %660 = vmatpush2.msra.mxu0 0.0
    %661 = vmatprep.subr.mxu0 0.0
    %662 = vmatpush2.msra.mxu0 0.0
    %663 = vmatprep.subr.mxu0 0.0
    %664 = vmatpush2.msra.mxu0 0.0
    %665 = vmatprep.subr.mxu0 0.0
    %666 = vmatpush2.msra.mxu0 0.0
    %667 = vmatprep.mubr.f32.mxu0 0.0
    %668 = vmatmul.mubr.f32.gmra.mxu0 %v601
    %v669 = vpop.f32.mrf.mxu0
    %v670 = vadd.f32 0.0, %v669
    %v671 = vpop.f32.mrf.mxu0
    %672 = vdwg.mxu0
    %v673 = vadd.f32 %v581, 0.0
    %v674 = vadd.f32 %v670, 0.0
    %s675 = scalar_lea.vmem [#allocation7], 2
    %v676 = vld [vmem:[%s675] sm:$0x3]
    %v679 = vrot.slane %v674, 7
    %v680 = vsel %vm405, %v679, %v673
    %v682 = vadd.f32 %v676, %v680
    %v683 = vld [vmem:[#allocation10] sm:$0xff]
    %v684 = vld [vmem:[#allocation10 + $0x8] sm:$0xff]
    %v685 = vld [vmem:[#allocation10 + $0x10] sm:$0xff]
    %v686 = vld [vmem:[#allocation10 + $0x18] sm:$0xff]
    %687 = vmatprep.subr.mxu0 0.0
    %688 = vmatpush1.msra.mxu0 0.0
    %689 = vmatprep.subr.mxu0 0.0
    %690 = vmatpush1.msra.mxu0 0.0
    %691 = vmatprep.subr.mxu0 0.0
    %692 = vmatpush1.msra.mxu0 0.0
    %693 = vmatprep.subr.mxu0 0.0
    %694 = vmatpush1.msra.mxu0 0.0
    %695 = vmatprep.subr.mxu0 0.0
    %696 = vmatpush1.msra.mxu0 0.0
    %697 = vmatprep.subr.mxu0 0.0
    %698 = vmatpush1.msra.mxu0 0.0
    %699 = vmatprep.subr.mxu0 0.0
    %700 = vmatpush1.msra.mxu0 0.0
    %701 = vmatprep.subr.mxu0 0.0
    %702 = vmatpush1.msra.mxu0 0.0
    %703 = vmatprep.subr.mxu0 0.0
    %704 = vmatpush1.msra.mxu0 0.0
    %705 = vmatprep.subr.mxu0 0.0
    %706 = vmatpush1.msra.mxu0 0.0
    %707 = vmatprep.subr.mxu0 0.0
    %708 = vmatpush1.msra.mxu0 0.0
    %709 = vmatprep.subr.mxu0 0.0
    %710 = vmatpush1.msra.mxu0 0.0
    %711 = vmatprep.subr.mxu0 0.0
    %712 = vmatpush1.msra.mxu0 %v686
    %713 = vmatprep.subr.mxu0 0.0
    %714 = vmatpush1.msra.mxu0 %v685
    %715 = vmatprep.subr.mxu0 0.0
    %716 = vmatpush1.msra.mxu0 %v684
    %717 = vmatprep.subr.mxu0 0.0
    %718 = vmatpush1.msra.mxu0 %v683
    %719 = vmatprep.subr.mxu0 0.0
    %720 = vmatpush2.msra.mxu0 0.0
    %721 = vmatprep.subr.mxu0 0.0
    %722 = vmatpush2.msra.mxu0 0.0
    %723 = vmatprep.subr.mxu0 0.0
    %724 = vmatpush2.msra.mxu0 0.0
    %725 = vmatprep.subr.mxu0 0.0
    %726 = vmatpush2.msra.mxu0 0.0
    %727 = vmatprep.subr.mxu0 0.0
    %728 = vmatpush2.msra.mxu0 0.0
    %729 = vmatprep.subr.mxu0 0.0
    %730 = vmatpush2.msra.mxu0 0.0
    %731 = vmatprep.subr.mxu0 0.0
    %732 = vmatpush2.msra.mxu0 0.0
    %733 = vmatprep.subr.mxu0 0.0
    %734 = vmatpush2.msra.mxu0 0.0
    %735 = vmatprep.subr.mxu0 0.0
    %736 = vmatpush2.msra.mxu0 0.0
    %737 = vmatprep.subr.mxu0 0.0
    %738 = vmatpush2.msra.mxu0 0.0
    %739 = vmatprep.subr.mxu0 0.0
    %740 = vmatpush2.msra.mxu0 0.0
    %741 = vmatprep.subr.mxu0 0.0
    %742 = vmatpush2.msra.mxu0 0.0
    %743 = vmatprep.subr.mxu0 0.0
    %744 = vmatpush2.msra.mxu0 0.0
    %745 = vmatprep.subr.mxu0 0.0
    %746 = vmatpush2.msra.mxu0 0.0
    %747 = vmatprep.subr.mxu0 0.0
    %748 = vmatpush2.msra.mxu0 0.0
    %749 = vmatprep.subr.mxu0 0.0
    %750 = vmatpush2.msra.mxu0 0.0
    %751 = vmatprep.mubr.f32.mxu0 0.0
    %752 = vmatmul.mubr.f32.gmra.mxu0 %v239
    %v753 = vpop.f32.mrf.mxu0
    %v754 = vadd.f32 0.0, %v753
    %v755 = vpop.f32.mrf.mxu0
    %756 = vdwg.mxu0
    %v757 = vadd.f32 %v682, %v754
    %v758 = vld [vmem:[%s7] sm:$0x1]
    %v760 = vlaneseq
    %v761 = vshrl.u32 %v760, 7
    %v762 = vsub.s32 0, %v761
    %v763 = vrot.slane %v758, %v762
    %v765 = vadd.f32 %v757, %v763
    %v766 = vxor.u32 %v765, 2147483648
    %v767 = vmul.f32 %v766, 1.442695
    %v768 = vpow.pop %v767
    %v769 = vadd.f32 %v768, 1.0
    %v770 = vrcp.pop %v769
    %v771 = vmul.f32 1.0, %v770
    %v772 = vtanh.pop %v765
    %v773 = vmul.f32 %v771, %v225
    %775 = vrot.lane.b32.xlu0 %v772, 64
    %v776 = vpop.permute.xlu0 %775
    %v778 = vmul.f32 %v771, %v776
    %780 = vrot.lane.b32.xlu0 %v778, 32
    %v781 = vpop.permute.xlu0 %780
    %v783 = vadd.f32 %v773, %v781
    %v784 = vtanh.pop %v783
    %786 = vrot.lane.b32.xlu0 %v784, 64
    %v787 = vpop.permute.xlu0 %786
    %v789 = vmul.f32 %v771, %v787
    %v790 = vld [vmem:[#allocation8] sm:$0xff]
    %v791 = vld [vmem:[#allocation8 + $0x8] sm:$0xff]
    %v792 = vld [vmem:[#allocation8 + $0x10] sm:$0xff]
    %v793 = vld [vmem:[#allocation8 + $0x18] sm:$0xff]
    %795 = vrot.lane.b32.xlu0 %v789, 32
    %v796 = vpop.permute.xlu0 %795
    %v797 = vsel %vm125, %v796, 0
    %799 = vmatprep.subr.mxu0 0.0
    %800 = vmatpush1.msra.mxu0 0.0
    %801 = vmatprep.subr.mxu0 0.0
    %802 = vmatpush1.msra.mxu0 0.0
    %803 = vmatprep.subr.mxu0 0.0
    %804 = vmatpush1.msra.mxu0 0.0
    %805 = vmatprep.subr.mxu0 0.0
    %806 = vmatpush1.msra.mxu0 0.0
    %807 = vmatprep.subr.mxu0 0.0
    %808 = vmatpush1.msra.mxu0 0.0
    %809 = vmatprep.subr.mxu0 0.0
    %810 = vmatpush1.msra.mxu0 0.0
    %811 = vmatprep.subr.mxu0 0.0
    %812 = vmatpush1.msra.mxu0 0.0
    %813 = vmatprep.subr.mxu0 0.0
    %814 = vmatpush1.msra.mxu0 0.0
    %815 = vmatprep.subr.mxu0 0.0
    %816 = vmatpush1.msra.mxu0 0.0
    %817 = vmatprep.subr.mxu0 0.0
    %818 = vmatpush1.msra.mxu0 0.0
    %819 = vmatprep.subr.mxu0 0.0
    %820 = vmatpush1.msra.mxu0 0.0
    %821 = vmatprep.subr.mxu0 0.0
    %822 = vmatpush1.msra.mxu0 0.0
    %823 = vmatprep.subr.mxu0 0.0
    %824 = vmatpush1.msra.mxu0 %v793
    %825 = vmatprep.subr.mxu0 0.0
    %826 = vmatpush1.msra.mxu0 %v792
    %827 = vmatprep.subr.mxu0 0.0
    %828 = vmatpush1.msra.mxu0 %v791
    %829 = vmatprep.subr.mxu0 0.0
    %830 = vmatpush1.msra.mxu0 %v790
    %831 = vmatprep.subr.mxu0 0.0
    %832 = vmatpush2.msra.mxu0 0.0
    %833 = vmatprep.subr.mxu0 0.0
    %834 = vmatpush2.msra.mxu0 0.0
    %835 = vmatprep.subr.mxu0 0.0
    %836 = vmatpush2.msra.mxu0 0.0
    %837 = vmatprep.subr.mxu0 0.0
    %838 = vmatpush2.msra.mxu0 0.0
    %839 = vmatprep.subr.mxu0 0.0
    %840 = vmatpush2.msra.mxu0 0.0
    %841 = vmatprep.subr.mxu0 0.0
    %842 = vmatpush2.msra.mxu0 0.0
    %843 = vmatprep.subr.mxu0 0.0
    %844 = vmatpush2.msra.mxu0 0.0
    %845 = vmatprep.subr.mxu0 0.0
    %846 = vmatpush2.msra.mxu0 0.0
    %847 = vmatprep.subr.mxu0 0.0
    %848 = vmatpush2.msra.mxu0 0.0
    %849 = vmatprep.subr.mxu0 0.0
    %850 = vmatpush2.msra.mxu0 0.0
    %851 = vmatprep.subr.mxu0 0.0
    %852 = vmatpush2.msra.mxu0 0.0
    %853 = vmatprep.subr.mxu0 0.0
    %854 = vmatpush2.msra.mxu0 0.0
    %855 = vmatprep.subr.mxu0 0.0
    %856 = vmatpush2.msra.mxu0 0.0
    %857 = vmatprep.subr.mxu0 0.0
    %858 = vmatpush2.msra.mxu0 0.0
    %859 = vmatprep.subr.mxu0 0.0
    %860 = vmatpush2.msra.mxu0 0.0
    %861 = vmatprep.subr.mxu0 0.0
    %862 = vmatpush2.msra.mxu0 0.0
    %863 = vmatprep.mubr.f32.mxu0 0.0
    %864 = vmatmul.mubr.f32.gmra.mxu0 %v797
    %v865 = vpop.f32.mrf.mxu0
    %v866 = vadd.f32 0.0, %v865
    %v867 = vpop.f32.mrf.mxu0
    %868 = vdwg.mxu0
    %v869 = vld [vmem:[#allocation2] sm:$0xff]
    %v870 = vld [vmem:[#allocation2 + $0x8] sm:$0xff]
    %v871 = vld [vmem:[#allocation2 + $0x10] sm:$0xff]
    %v872 = vld [vmem:[#allocation2 + $0x18] sm:$0xff]
    %v875 = vunpack.c.l.s4 1966171168
    %v876 = vunpack.c.0.s8 %v875
    %v877 = vlaneseq
    %v878 = vshrl.u32 %v877, 7
    %v879 = vsub.s32 %v876, %v878
    %v880 = vrot.slane %v866, %v879
    %v881 = vcombine.high %v880, %v880
    %v883 = vunpack.c.l.s4 1966171168
    %v884 = vunpack.c.0.s8 %v883
    %v885 = vlaneseq
    %v886 = vshrl.u32 %v885, 7
    %v887 = vsub.s32 %v884, %v886
    %v888 = vrot.slane %v880, %v887
    %v890 = vunpack.c.l.s4 1966171168
    %v891 = vunpack.c.0.s8 %v890
    %v892 = vlaneseq
    %v893 = vshrl.u32 %v892, 7
    %v894 = vsub.s32 %v891, %v893
    %v895 = vrot.slane %v881, %v894
    %v896 = vlaneseq
    %v897 = vshrl.u32 %v896, 7
    %v898 = vsub.s32 0, %v897
    %v899 = vrot.slane %v888, %v898
    %v900 = vlaneseq
    %v901 = vshrl.u32 %v900, 7
    %v902 = vsub.s32 0, %v901
    %v903 = vrot.slane %v895, %v902
    %v906 = vadd.f32 %v869, %v899
    %v907 = vadd.f32 %v870, %v899
    %v908 = vadd.f32 %v871, %v903
    %v909 = vadd.f32 %v872, %v903
    %v910 = vtanh.pop %v906
    %v911 = vtanh.pop %v907
    %v912 = vtanh.pop %v908
    %v913 = vtanh.pop %v909
    %v914 = vld [vmem:[%s5] sm:$0x1]
    %v916 = vlaneseq
    %v917 = vshrl.u32 %v916, 7
    %v918 = vsub.s32 0, %v917
    %v919 = vrot.slane %v914, %v918
    %v921 = vmul.f32 %v910, %v919
    %v922 = vmul.f32 %v911, %v919
    %v923 = vmul.f32 %v912, %v919
    %v924 = vmul.f32 %v913, %v919
    %v925 = vsel %vm125, %v921, 0.0
    %926 = vadd.xlane.f32.xlu0 %v925
    %v927 = vpop.xlane.xlu0 %926
    %v928 = vsel %vm125, %v922, 0.0
    %929 = vadd.xlane.f32.xlu0 %v928
    %v930 = vpop.xlane.xlu0 %929
    %v931 = vsel %vm125, %v923, 0.0
    %932 = vadd.xlane.f32.xlu0 %v931
    %v933 = vpop.xlane.xlu0 %932
    %v934 = vsel %vm125, %v924, 0.0
    %935 = vadd.xlane.f32.xlu0 %v934
    %v936 = vpop.xlane.xlu0 %935
    %v941 = vlaneseq
    %v942 = vshrl.u32 %v941, 7
    %v943 = vsub.s32 %v384, %v942
    %v944 = vrot.slane %v927, %v943
    %v945 = vlaneseq
    %v946 = vshrl.u32 %v945, 7
    %v947 = vsub.s32 %v389, %v946
    %v948 = vrot.slane %v930, %v947
    %v949 = vsel %vm394, %v948, %v944
    %v950 = vlaneseq
    %v951 = vshrl.u32 %v950, 7
    %v952 = vsub.s32 %v384, %v951
    %v953 = vrot.slane %v933, %v952
    %v954 = vlaneseq
    %v955 = vshrl.u32 %v954, 7
    %v956 = vsub.s32 %v389, %v955
    %v957 = vrot.slane %v936, %v956
    %v958 = vsel %vm394, %v957, %v953
    %v959 = vsel %vm405, %v958, %v949
    %v961 = vsel %vm408, %v959, -inf
    %962 = vmax.xlane.f32.xlu0 %v961
    %v963 = vpop.xlane.xlu0 %962
    %v965 = vlaneseq
    %v966 = vshrl.u32 %v965, 7
    %v967 = vsub.s32 0, %v966
    %v968 = vrot.slane %v963, %v967
    %v969 = vlaneseq
    %v970 = vshrl.u32 %v969, 7
    %v971 = vsub.s32 1, %v970
    %v972 = vrot.slane %v963, %v971
    %v975 = vsub.f32 %v927, %v968
    %v976 = vsub.f32 %v930, %v968
    %v977 = vsub.f32 %v933, %v972
    %v978 = vsub.f32 %v936, %v972
    %v979 = vmul.f32 %v975, 1.442695
    %v980 = vpow.pop %v979
    %v981 = vmul.f32 %v976, 1.442695
    %v982 = vpow.pop %v981
    %v983 = vmul.f32 %v977, 1.442695
    %v984 = vpow.pop %v983
    %v985 = vmul.f32 %v978, 1.442695
    %v986 = vpow.pop %v985
    %991 = vset.pattern.permute.xlu0 0
    %992 = vperm.xlu0 %991, %v980
    %v993 = vpop.permute.xlu0 %992
    %994 = vset.pattern.permute.xlu0 0
    %995 = vperm.xlu0 %994, %v982
    %v996 = vpop.permute.xlu0 %995
    %997 = vset.pattern.permute.xlu0 0
    %998 = vperm.xlu0 %997, %v984
    %v999 = vpop.permute.xlu0 %998
    %1000 = vset.pattern.permute.xlu0 0
    %1001 = vperm.xlu0 %1000, %v986
    %v1002 = vpop.permute.xlu0 %1001
    %v1003 = vlaneseq
    %v1004 = vshrl.u32 %v1003, 7
    %v1005 = vsub.s32 %v384, %v1004
    %v1006 = vrot.slane %v993, %v1005
    %v1007 = vlaneseq
    %v1008 = vshrl.u32 %v1007, 7
    %v1009 = vsub.s32 %v389, %v1008
    %v1010 = vrot.slane %v996, %v1009
    %v1011 = vsel %vm394, %v1010, %v1006
    %v1012 = vlaneseq
    %v1013 = vshrl.u32 %v1012, 7
    %v1014 = vsub.s32 %v384, %v1013
    %v1015 = vrot.slane %v999, %v1014
    %v1016 = vlaneseq
    %v1017 = vshrl.u32 %v1016, 7
    %v1018 = vsub.s32 %v389, %v1017
    %v1019 = vrot.slane %v1002, %v1018
    %v1020 = vsel %vm394, %v1019, %v1015
    %v1021 = vsel %vm405, %v1020, %v1011
    %v1023 = vsel %vm408, %v1021, 0.0
    %1024 = vadd.xlane.f32.xlu0 %v1023
    %v1025 = vpop.xlane.xlu0 %1024
    %v1026 = vrcp.pop %v1025
    %v1028 = vlaneseq
    %v1029 = vshrl.u32 %v1028, 7
    %v1030 = vsub.s32 0, %v1029
    %v1031 = vrot.slane %v1026, %v1030
    %v1032 = vlaneseq
    %v1033 = vshrl.u32 %v1032, 7
    %v1034 = vsub.s32 1, %v1033
    %v1035 = vrot.slane %v1026, %v1034
    %v1038 = vmul.f32 %v980, %v1031
    %v1039 = vmul.f32 %v982, %v1031
    %v1040 = vmul.f32 %v984, %v1035
    %v1041 = vmul.f32 %v986, %v1035
    %v1042 = vld [vmem:[#allocation5] sm:$0xff]
    %v1043 = vld [vmem:[#allocation5 + $0x8] sm:$0xff]
    %v1044 = vld [vmem:[#allocation5 + $0x10] sm:$0xff]
    %v1045 = vld [vmem:[#allocation5 + $0x18] sm:$0xff]
    %1048 = vset.pattern.permute.xlu0 0
    %1049 = vperm.xlu0 %1048, %v1038
    %v1050 = vpop.permute.xlu0 %1049
    %1051 = vset.pattern.permute.xlu0 0
    %1052 = vperm.xlu0 %1051, %v1039
    %v1053 = vpop.permute.xlu0 %1052
    %v1054 = vlaneseq
    %v1055 = vshrl.u32 %v1054, 7
    %v1056 = vsub.s32 %v384, %v1055
    %v1057 = vrot.slane %v1050, %v1056
    %v1058 = vlaneseq
    %v1059 = vshrl.u32 %v1058, 7
    %v1060 = vsub.s32 %v389, %v1059
    %v1061 = vrot.slane %v1053, %v1060
    %v1062 = vsel %vm394, %v1061, %v1057
    %v1063 = vsel %vm511, %v1062, 0
    %1065 = vmatprep.subr.mxu0 0.0
    %1066 = vmatpush1.msra.mxu0 0.0
    %1067 = vmatprep.subr.mxu0 0.0
    %1068 = vmatpush1.msra.mxu0 0.0
    %1069 = vmatprep.subr.mxu0 0.0
    %1070 = vmatpush1.msra.mxu0 0.0
    %1071 = vmatprep.subr.mxu0 0.0
    %1072 = vmatpush1.msra.mxu0 0.0
    %1073 = vmatprep.subr.mxu0 0.0
    %1074 = vmatpush1.msra.mxu0 0.0
    %1075 = vmatprep.subr.mxu0 0.0
    %1076 = vmatpush1.msra.mxu0 0.0
    %1077 = vmatprep.subr.mxu0 0.0
    %1078 = vmatpush1.msra.mxu0 0.0
    %1079 = vmatprep.subr.mxu0 0.0
    %1080 = vmatpush1.msra.mxu0 0.0
    %1081 = vmatprep.subr.mxu0 0.0
    %1082 = vmatpush1.msra.mxu0 0.0
    %1083 = vmatprep.subr.mxu0 0.0
    %1084 = vmatpush1.msra.mxu0 0.0
    %1085 = vmatprep.subr.mxu0 0.0
    %1086 = vmatpush1.msra.mxu0 0.0
    %1087 = vmatprep.subr.mxu0 0.0
    %1088 = vmatpush1.msra.mxu0 0.0
    %1089 = vmatprep.subr.mxu0 0.0
    %1090 = vmatpush1.msra.mxu0 0.0
    %1091 = vmatprep.subr.mxu0 0.0
    %1092 = vmatpush1.msra.mxu0 0.0
    %1093 = vmatprep.subr.mxu0 0.0
    %1094 = vmatpush1.msra.mxu0 %v1043
    %1095 = vmatprep.subr.mxu0 0.0
    %1096 = vmatpush1.msra.mxu0 %v1042
    %1097 = vmatprep.subr.mxu0 0.0
    %1098 = vmatpush2.msra.mxu0 0.0
    %1099 = vmatprep.subr.mxu0 0.0
    %1100 = vmatpush2.msra.mxu0 0.0
    %1101 = vmatprep.subr.mxu0 0.0
    %1102 = vmatpush2.msra.mxu0 0.0
    %1103 = vmatprep.subr.mxu0 0.0
    %1104 = vmatpush2.msra.mxu0 0.0
    %1105 = vmatprep.subr.mxu0 0.0
    %1106 = vmatpush2.msra.mxu0 0.0
    %1107 = vmatprep.subr.mxu0 0.0
    %1108 = vmatpush2.msra.mxu0 0.0
    %1109 = vmatprep.subr.mxu0 0.0
    %1110 = vmatpush2.msra.mxu0 0.0
    %1111 = vmatprep.subr.mxu0 0.0
    %1112 = vmatpush2.msra.mxu0 0.0
    %1113 = vmatprep.subr.mxu0 0.0
    %1114 = vmatpush2.msra.mxu0 0.0
    %1115 = vmatprep.subr.mxu0 0.0
    %1116 = vmatpush2.msra.mxu0 0.0
    %1117 = vmatprep.subr.mxu0 0.0
    %1118 = vmatpush2.msra.mxu0 0.0
    %1119 = vmatprep.subr.mxu0 0.0
    %1120 = vmatpush2.msra.mxu0 0.0
    %1121 = vmatprep.subr.mxu0 0.0
    %1122 = vmatpush2.msra.mxu0 0.0
    %1123 = vmatprep.subr.mxu0 0.0
    %1124 = vmatpush2.msra.mxu0 0.0
    %1125 = vmatprep.subr.mxu0 0.0
    %1126 = vmatpush2.msra.mxu0 0.0
    %1127 = vmatprep.subr.mxu0 0.0
    %1128 = vmatpush2.msra.mxu0 0.0
    %1129 = vmatprep.mubr.f32.mxu0 0.0
    %1130 = vmatmul.mubr.f32.gmra.mxu0 %v1063
    %v1131 = vpop.f32.mrf.mxu0
    %v1132 = vadd.f32 0.0, %v1131
    %v1133 = vpop.f32.mrf.mxu0
    %1134 = vdwg.mxu0
    %1137 = vset.pattern.permute.xlu0 0
    %1138 = vperm.xlu0 %1137, %v1040
    %v1139 = vpop.permute.xlu0 %1138
    %1140 = vset.pattern.permute.xlu0 0
    %1141 = vperm.xlu0 %1140, %v1041
    %v1142 = vpop.permute.xlu0 %1141
    %v1143 = vlaneseq
    %v1144 = vshrl.u32 %v1143, 7
    %v1145 = vsub.s32 %v384, %v1144
    %v1146 = vrot.slane %v1139, %v1145
    %v1147 = vlaneseq
    %v1148 = vshrl.u32 %v1147, 7
    %v1149 = vsub.s32 %v389, %v1148
    %v1150 = vrot.slane %v1142, %v1149
    %v1151 = vsel %vm394, %v1150, %v1146
    %v1152 = vsel %vm511, %v1151, 0
    %1154 = vmatprep.subr.mxu0 0.0
    %1155 = vmatpush1.msra.mxu0 0.0
    %1156 = vmatprep.subr.mxu0 0.0
    %1157 = vmatpush1.msra.mxu0 0.0
    %1158 = vmatprep.subr.mxu0 0.0
    %1159 = vmatpush1.msra.mxu0 0.0
    %1160 = vmatprep.subr.mxu0 0.0
    %1161 = vmatpush1.msra.mxu0 0.0
    %1162 = vmatprep.subr.mxu0 0.0
    %1163 = vmatpush1.msra.mxu0 0.0
    %1164 = vmatprep.subr.mxu0 0.0
    %1165 = vmatpush1.msra.mxu0 0.0
    %1166 = vmatprep.subr.mxu0 0.0
    %1167 = vmatpush1.msra.mxu0 0.0
    %1168 = vmatprep.subr.mxu0 0.0
    %1169 = vmatpush1.msra.mxu0 0.0
    %1170 = vmatprep.subr.mxu0 0.0
    %1171 = vmatpush1.msra.mxu0 0.0
    %1172 = vmatprep.subr.mxu0 0.0
    %1173 = vmatpush1.msra.mxu0 0.0
    %1174 = vmatprep.subr.mxu0 0.0
    %1175 = vmatpush1.msra.mxu0 0.0
    %1176 = vmatprep.subr.mxu0 0.0
    %1177 = vmatpush1.msra.mxu0 0.0
    %1178 = vmatprep.subr.mxu0 0.0
    %1179 = vmatpush1.msra.mxu0 0.0
    %1180 = vmatprep.subr.mxu0 0.0
    %1181 = vmatpush1.msra.mxu0 0.0
    %1182 = vmatprep.subr.mxu0 0.0
    %1183 = vmatpush1.msra.mxu0 %v1045
    %1184 = vmatprep.subr.mxu0 0.0
    %1185 = vmatpush1.msra.mxu0 %v1044
    %1186 = vmatprep.subr.mxu0 0.0
    %1187 = vmatpush2.msra.mxu0 0.0
    %1188 = vmatprep.subr.mxu0 0.0
    %1189 = vmatpush2.msra.mxu0 0.0
    %1190 = vmatprep.subr.mxu0 0.0
    %1191 = vmatpush2.msra.mxu0 0.0
    %1192 = vmatprep.subr.mxu0 0.0
    %1193 = vmatpush2.msra.mxu0 0.0
    %1194 = vmatprep.subr.mxu0 0.0
    %1195 = vmatpush2.msra.mxu0 0.0
    %1196 = vmatprep.subr.mxu0 0.0
    %1197 = vmatpush2.msra.mxu0 0.0
    %1198 = vmatprep.subr.mxu0 0.0
    %1199 = vmatpush2.msra.mxu0 0.0
    %1200 = vmatprep.subr.mxu0 0.0
    %1201 = vmatpush2.msra.mxu0 0.0
    %1202 = vmatprep.subr.mxu0 0.0
    %1203 = vmatpush2.msra.mxu0 0.0
    %1204 = vmatprep.subr.mxu0 0.0
    %1205 = vmatpush2.msra.mxu0 0.0
    %1206 = vmatprep.subr.mxu0 0.0
    %1207 = vmatpush2.msra.mxu0 0.0
    %1208 = vmatprep.subr.mxu0 0.0
    %1209 = vmatpush2.msra.mxu0 0.0
    %1210 = vmatprep.subr.mxu0 0.0
    %1211 = vmatpush2.msra.mxu0 0.0
    %1212 = vmatprep.subr.mxu0 0.0
    %1213 = vmatpush2.msra.mxu0 0.0
    %1214 = vmatprep.subr.mxu0 0.0
    %1215 = vmatpush2.msra.mxu0 0.0
    %1216 = vmatprep.subr.mxu0 0.0
    %1217 = vmatpush2.msra.mxu0 0.0
    %1218 = vmatprep.mubr.f32.mxu0 0.0
    %1219 = vmatmul.mubr.f32.gmra.mxu0 %v1152
    %v1220 = vpop.f32.mrf.mxu0
    %v1221 = vadd.f32 0.0, %v1220
    %v1222 = vpop.f32.mrf.mxu0
    %1223 = vdwg.mxu0
    %v1224 = vadd.f32 %v1132, 0.0
    %v1225 = vadd.f32 %v1221, 0.0
    %s1226 = scalar_lea.vmem [#allocation7], 4
    %v1227 = vld [vmem:[%s1226] sm:$0x3]
    %v1230 = vrot.slane %v1225, 7
    %v1231 = vsel %vm405, %v1230, %v1224
    %v1233 = vadd.f32 %v1227, %v1231
    %v1234 = vld [vmem:[#allocation10] sm:$0xff]
    %v1235 = vld [vmem:[#allocation10 + $0x8] sm:$0xff]
    %v1236 = vld [vmem:[#allocation10 + $0x10] sm:$0xff]
    %v1237 = vld [vmem:[#allocation10 + $0x18] sm:$0xff]
    %1238 = vmatprep.subr.mxu0 0.0
    %1239 = vmatpush1.msra.mxu0 0.0
    %1240 = vmatprep.subr.mxu0 0.0
    %1241 = vmatpush1.msra.mxu0 0.0
    %1242 = vmatprep.subr.mxu0 0.0
    %1243 = vmatpush1.msra.mxu0 0.0
    %1244 = vmatprep.subr.mxu0 0.0
    %1245 = vmatpush1.msra.mxu0 0.0
    %1246 = vmatprep.subr.mxu0 0.0
    %1247 = vmatpush1.msra.mxu0 0.0
    %1248 = vmatprep.subr.mxu0 0.0
    %1249 = vmatpush1.msra.mxu0 0.0
    %1250 = vmatprep.subr.mxu0 0.0
    %1251 = vmatpush1.msra.mxu0 0.0
    %1252 = vmatprep.subr.mxu0 0.0
    %1253 = vmatpush1.msra.mxu0 0.0
    %1254 = vmatprep.subr.mxu0 0.0
    %1255 = vmatpush1.msra.mxu0 0.0
    %1256 = vmatprep.subr.mxu0 0.0
    %1257 = vmatpush1.msra.mxu0 0.0
    %1258 = vmatprep.subr.mxu0 0.0
    %1259 = vmatpush1.msra.mxu0 0.0
    %1260 = vmatprep.subr.mxu0 0.0
    %1261 = vmatpush1.msra.mxu0 0.0
    %1262 = vmatprep.subr.mxu0 0.0
    %1263 = vmatpush1.msra.mxu0 %v1237
    %1264 = vmatprep.subr.mxu0 0.0
    %1265 = vmatpush1.msra.mxu0 %v1236
    %1266 = vmatprep.subr.mxu0 0.0
    %1267 = vmatpush1.msra.mxu0 %v1235
    %1268 = vmatprep.subr.mxu0 0.0
    %1269 = vmatpush1.msra.mxu0 %v1234
    %1270 = vmatprep.subr.mxu0 0.0
    %1271 = vmatpush2.msra.mxu0 0.0
    %1272 = vmatprep.subr.mxu0 0.0
    %1273 = vmatpush2.msra.mxu0 0.0
    %1274 = vmatprep.subr.mxu0 0.0
    %1275 = vmatpush2.msra.mxu0 0.0
    %1276 = vmatprep.subr.mxu0 0.0
    %1277 = vmatpush2.msra.mxu0 0.0
    %1278 = vmatprep.subr.mxu0 0.0
    %1279 = vmatpush2.msra.mxu0 0.0
    %1280 = vmatprep.subr.mxu0 0.0
    %1281 = vmatpush2.msra.mxu0 0.0
    %1282 = vmatprep.subr.mxu0 0.0
    %1283 = vmatpush2.msra.mxu0 0.0
    %1284 = vmatprep.subr.mxu0 0.0
    %1285 = vmatpush2.msra.mxu0 0.0
    %1286 = vmatprep.subr.mxu0 0.0
    %1287 = vmatpush2.msra.mxu0 0.0
    %1288 = vmatprep.subr.mxu0 0.0
    %1289 = vmatpush2.msra.mxu0 0.0
    %1290 = vmatprep.subr.mxu0 0.0
    %1291 = vmatpush2.msra.mxu0 0.0
    %1292 = vmatprep.subr.mxu0 0.0
    %1293 = vmatpush2.msra.mxu0 0.0
    %1294 = vmatprep.subr.mxu0 0.0
    %1295 = vmatpush2.msra.mxu0 0.0
    %1296 = vmatprep.subr.mxu0 0.0
    %1297 = vmatpush2.msra.mxu0 0.0
    %1298 = vmatprep.subr.mxu0 0.0
    %1299 = vmatpush2.msra.mxu0 0.0
    %1300 = vmatprep.subr.mxu0 0.0
    %1301 = vmatpush2.msra.mxu0 0.0
    %1302 = vmatprep.mubr.f32.mxu0 0.0
    %1303 = vmatmul.mubr.f32.gmra.mxu0 %v797
    %v1304 = vpop.f32.mrf.mxu0
    %v1305 = vadd.f32 0.0, %v1304
    %v1306 = vpop.f32.mrf.mxu0
    %1307 = vdwg.mxu0
    %v1308 = vadd.f32 %v1233, %v1305
    %v1309 = vld [vmem:[%s7] sm:$0x1]
    %v1311 = vlaneseq
    %v1312 = vshrl.u32 %v1311, 7
    %v1313 = vsub.s32 0, %v1312
    %v1314 = vrot.slane %v1309, %v1313
    %v1316 = vadd.f32 %v1308, %v1314
    %v1317 = vxor.u32 %v1316, 2147483648
    %v1318 = vmul.f32 %v1317, 1.442695
    %v1319 = vpow.pop %v1318
    %v1320 = vadd.f32 %v1319, 1.0
    %v1321 = vrcp.pop %v1320
    %v1322 = vmul.f32 1.0, %v1321
    %v1323 = vtanh.pop %v1316
    %v1324 = vmul.f32 %v1322, %v783
    %1326 = vrot.lane.b32.xlu0 %v1323, 64
    %v1327 = vpop.permute.xlu0 %1326
    %v1329 = vmul.f32 %v1322, %v1327
    %1331 = vrot.lane.b32.xlu0 %v1329, 32
    %v1332 = vpop.permute.xlu0 %1331
    %v1334 = vadd.f32 %v1324, %v1332
    %v1335 = vtanh.pop %v1334
    %1337 = vrot.lane.b32.xlu0 %v1335, 64
    %v1338 = vpop.permute.xlu0 %1337
    %v1340 = vmul.f32 %v1322, %v1338
    %v1341 = vld [vmem:[#allocation8] sm:$0xff]
    %v1342 = vld [vmem:[#allocation8 + $0x8] sm:$0xff]
    %v1343 = vld [vmem:[#allocation8 + $0x10] sm:$0xff]
    %v1344 = vld [vmem:[#allocation8 + $0x18] sm:$0xff]
    %1346 = vrot.lane.b32.xlu0 %v1340, 32
    %v1347 = vpop.permute.xlu0 %1346
    %v1348 = vsel %vm125, %v1347, 0
    %1350 = vmatprep.subr.mxu0 0.0
    %1351 = vmatpush1.msra.mxu0 0.0
    %1352 = vmatprep.subr.mxu0 0.0
    %1353 = vmatpush1.msra.mxu0 0.0
    %1354 = vmatprep.subr.mxu0 0.0
    %1355 = vmatpush1.msra.mxu0 0.0
    %1356 = vmatprep.subr.mxu0 0.0
    %1357 = vmatpush1.msra.mxu0 0.0
    %1358 = vmatprep.subr.mxu0 0.0
    %1359 = vmatpush1.msra.mxu0 0.0
    %1360 = vmatprep.subr.mxu0 0.0
    %1361 = vmatpush1.msra.mxu0 0.0
    %1362 = vmatprep.subr.mxu0 0.0
    %1363 = vmatpush1.msra.mxu0 0.0
    %1364 = vmatprep.subr.mxu0 0.0
    %1365 = vmatpush1.msra.mxu0 0.0
    %1366 = vmatprep.subr.mxu0 0.0
    %1367 = vmatpush1.msra.mxu0 0.0
    %1368 = vmatprep.subr.mxu0 0.0
    %1369 = vmatpush1.msra.mxu0 0.0
    %1370 = vmatprep.subr.mxu0 0.0
    %1371 = vmatpush1.msra.mxu0 0.0
    %1372 = vmatprep.subr.mxu0 0.0
    %1373 = vmatpush1.msra.mxu0 0.0
    %1374 = vmatprep.subr.mxu0 0.0
    %1375 = vmatpush1.msra.mxu0 %v1344
    %1376 = vmatprep.subr.mxu0 0.0
    %1377 = vmatpush1.msra.mxu0 %v1343
    %1378 = vmatprep.subr.mxu0 0.0
    %1379 = vmatpush1.msra.mxu0 %v1342
    %1380 = vmatprep.subr.mxu0 0.0
    %1381 = vmatpush1.msra.mxu0 %v1341
    %1382 = vmatprep.subr.mxu0 0.0
    %1383 = vmatpush2.msra.mxu0 0.0
    %1384 = vmatprep.subr.mxu0 0.0
    %1385 = vmatpush2.msra.mxu0 0.0
    %1386 = vmatprep.subr.mxu0 0.0
    %1387 = vmatpush2.msra.mxu0 0.0
    %1388 = vmatprep.subr.mxu0 0.0
    %1389 = vmatpush2.msra.mxu0 0.0
    %1390 = vmatprep.subr.mxu0 0.0
    %1391 = vmatpush2.msra.mxu0 0.0
    %1392 = vmatprep.subr.mxu0 0.0
    %1393 = vmatpush2.msra.mxu0 0.0
    %1394 = vmatprep.subr.mxu0 0.0
    %1395 = vmatpush2.msra.mxu0 0.0
    %1396 = vmatprep.subr.mxu0 0.0
    %1397 = vmatpush2.msra.mxu0 0.0
    %1398 = vmatprep.subr.mxu0 0.0
    %1399 = vmatpush2.msra.mxu0 0.0
    %1400 = vmatprep.subr.mxu0 0.0
    %1401 = vmatpush2.msra.mxu0 0.0
    %1402 = vmatprep.subr.mxu0 0.0
    %1403 = vmatpush2.msra.mxu0 0.0
    %1404 = vmatprep.subr.mxu0 0.0
    %1405 = vmatpush2.msra.mxu0 0.0
    %1406 = vmatprep.subr.mxu0 0.0
    %1407 = vmatpush2.msra.mxu0 0.0
    %1408 = vmatprep.subr.mxu0 0.0
    %1409 = vmatpush2.msra.mxu0 0.0
    %1410 = vmatprep.subr.mxu0 0.0
    %1411 = vmatpush2.msra.mxu0 0.0
    %1412 = vmatprep.subr.mxu0 0.0
    %1413 = vmatpush2.msra.mxu0 0.0
    %1414 = vmatprep.mubr.f32.mxu0 0.0
    %1415 = vmatmul.mubr.f32.gmra.mxu0 %v1348
    %v1416 = vpop.f32.mrf.mxu0
    %v1417 = vadd.f32 0.0, %v1416
    %v1418 = vpop.f32.mrf.mxu0
    %1419 = vdwg.mxu0
    %v1420 = vld [vmem:[#allocation2] sm:$0xff]
    %v1421 = vld [vmem:[#allocation2 + $0x8] sm:$0xff]
    %v1422 = vld [vmem:[#allocation2 + $0x10] sm:$0xff]
    %v1423 = vld [vmem:[#allocation2 + $0x18] sm:$0xff]
    %v1426 = vunpack.c.l.s4 1966171168
    %v1427 = vunpack.c.0.s8 %v1426
    %v1428 = vlaneseq
    %v1429 = vshrl.u32 %v1428, 7
    %v1430 = vsub.s32 %v1427, %v1429
    %v1431 = vrot.slane %v1417, %v1430
    %v1432 = vcombine.high %v1431, %v1431
    %v1434 = vunpack.c.l.s4 1966171168
    %v1435 = vunpack.c.0.s8 %v1434
    %v1436 = vlaneseq
    %v1437 = vshrl.u32 %v1436, 7
    %v1438 = vsub.s32 %v1435, %v1437
    %v1439 = vrot.slane %v1431, %v1438
    %v1441 = vunpack.c.l.s4 1966171168
    %v1442 = vunpack.c.0.s8 %v1441
    %v1443 = vlaneseq
    %v1444 = vshrl.u32 %v1443, 7
    %v1445 = vsub.s32 %v1442, %v1444
    %v1446 = vrot.slane %v1432, %v1445
    %v1447 = vlaneseq
    %v1448 = vshrl.u32 %v1447, 7
    %v1449 = vsub.s32 0, %v1448
    %v1450 = vrot.slane %v1439, %v1449
    %v1451 = vlaneseq
    %v1452 = vshrl.u32 %v1451, 7
    %v1453 = vsub.s32 0, %v1452
    %v1454 = vrot.slane %v1446, %v1453
    %v1457 = vadd.f32 %v1420, %v1450
    %v1458 = vadd.f32 %v1421, %v1450
    %v1459 = vadd.f32 %v1422, %v1454
    %v1460 = vadd.f32 %v1423, %v1454
    %v1461 = vtanh.pop %v1457
    %v1462 = vtanh.pop %v1458
    %v1463 = vtanh.pop %v1459
    %v1464 = vtanh.pop %v1460
    %v1465 = vld [vmem:[%s5] sm:$0x1]
    %v1467 = vlaneseq
    %v1468 = vshrl.u32 %v1467, 7
    %v1469 = vsub.s32 0, %v1468
    %v1470 = vrot.slane %v1465, %v1469
    %v1472 = vmul.f32 %v1461, %v1470
    %v1473 = vmul.f32 %v1462, %v1470
    %v1474 = vmul.f32 %v1463, %v1470
    %v1475 = vmul.f32 %v1464, %v1470
    %v1476 = vsel %vm125, %v1472, 0.0
    %1477 = vadd.xlane.f32.xlu0 %v1476
    %v1478 = vpop.xlane.xlu0 %1477
    %v1479 = vsel %vm125, %v1473, 0.0
    %1480 = vadd.xlane.f32.xlu0 %v1479
    %v1481 = vpop.xlane.xlu0 %1480
    %v1482 = vsel %vm125, %v1474, 0.0
    %1483 = vadd.xlane.f32.xlu0 %v1482
    %v1484 = vpop.xlane.xlu0 %1483
    %v1485 = vsel %vm125, %v1475, 0.0
    %1486 = vadd.xlane.f32.xlu0 %v1485
    %v1487 = vpop.xlane.xlu0 %1486
    %v1492 = vlaneseq
    %v1493 = vshrl.u32 %v1492, 7
    %v1494 = vsub.s32 %v384, %v1493
    %v1495 = vrot.slane %v1478, %v1494
    %v1496 = vlaneseq
    %v1497 = vshrl.u32 %v1496, 7
    %v1498 = vsub.s32 %v389, %v1497
    %v1499 = vrot.slane %v1481, %v1498
    %v1500 = vsel %vm394, %v1499, %v1495
    %v1501 = vlaneseq
    %v1502 = vshrl.u32 %v1501, 7
    %v1503 = vsub.s32 %v384, %v1502
    %v1504 = vrot.slane %v1484, %v1503
    %v1505 = vlaneseq
    %v1506 = vshrl.u32 %v1505, 7
    %v1507 = vsub.s32 %v389, %v1506
    %v1508 = vrot.slane %v1487, %v1507
    %v1509 = vsel %vm394, %v1508, %v1504
    %v1510 = vsel %vm405, %v1509, %v1500
    %v1512 = vsel %vm408, %v1510, -inf
    %1513 = vmax.xlane.f32.xlu0 %v1512
    %v1514 = vpop.xlane.xlu0 %1513
    %v1516 = vlaneseq
    %v1517 = vshrl.u32 %v1516, 7
    %v1518 = vsub.s32 0, %v1517
    %v1519 = vrot.slane %v1514, %v1518
    %v1520 = vlaneseq
    %v1521 = vshrl.u32 %v1520, 7
    %v1522 = vsub.s32 1, %v1521
    %v1523 = vrot.slane %v1514, %v1522
    %v1526 = vsub.f32 %v1478, %v1519
    %v1527 = vsub.f32 %v1481, %v1519
    %v1528 = vsub.f32 %v1484, %v1523
    %v1529 = vsub.f32 %v1487, %v1523
    %v1530 = vmul.f32 %v1526, 1.442695
    %v1531 = vpow.pop %v1530
    %v1532 = vmul.f32 %v1527, 1.442695
    %v1533 = vpow.pop %v1532
    %v1534 = vmul.f32 %v1528, 1.442695
    %v1535 = vpow.pop %v1534
    %v1536 = vmul.f32 %v1529, 1.442695
    %v1537 = vpow.pop %v1536
    %1542 = vset.pattern.permute.xlu0 0
    %1543 = vperm.xlu0 %1542, %v1531
    %v1544 = vpop.permute.xlu0 %1543
    %1545 = vset.pattern.permute.xlu0 0
    %1546 = vperm.xlu0 %1545, %v1533
    %v1547 = vpop.permute.xlu0 %1546
    %1548 = vset.pattern.permute.xlu0 0
    %1549 = vperm.xlu0 %1548, %v1535
    %v1550 = vpop.permute.xlu0 %1549
    %1551 = vset.pattern.permute.xlu0 0
    %1552 = vperm.xlu0 %1551, %v1537
    %v1553 = vpop.permute.xlu0 %1552
    %v1554 = vlaneseq
    %v1555 = vshrl.u32 %v1554, 7
    %v1556 = vsub.s32 %v384, %v1555
    %v1557 = vrot.slane %v1544, %v1556
    %v1558 = vlaneseq
    %v1559 = vshrl.u32 %v1558, 7
    %v1560 = vsub.s32 %v389, %v1559
    %v1561 = vrot.slane %v1547, %v1560
    %v1562 = vsel %vm394, %v1561, %v1557
    %v1563 = vlaneseq
    %v1564 = vshrl.u32 %v1563, 7
    %v1565 = vsub.s32 %v384, %v1564
    %v1566 = vrot.slane %v1550, %v1565
    %v1567 = vlaneseq
    %v1568 = vshrl.u32 %v1567, 7
    %v1569 = vsub.s32 %v389, %v1568
    %v1570 = vrot.slane %v1553, %v1569
    %v1571 = vsel %vm394, %v1570, %v1566
    %v1572 = vsel %vm405, %v1571, %v1562
    %v1574 = vsel %vm408, %v1572, 0.0
    %1575 = vadd.xlane.f32.xlu0 %v1574
    %v1576 = vpop.xlane.xlu0 %1575
    %v1577 = vrcp.pop %v1576
    %v1579 = vlaneseq
    %v1580 = vshrl.u32 %v1579, 7
    %v1581 = vsub.s32 0, %v1580
    %v1582 = vrot.slane %v1577, %v1581
    %v1583 = vlaneseq
    %v1584 = vshrl.u32 %v1583, 7
    %v1585 = vsub.s32 1, %v1584
    %v1586 = vrot.slane %v1577, %v1585
    %v1589 = vmul.f32 %v1531, %v1582
    %v1590 = vmul.f32 %v1533, %v1582
    %v1591 = vmul.f32 %v1535, %v1586
    %v1592 = vmul.f32 %v1537, %v1586
    %v1593 = vld [vmem:[#allocation5] sm:$0xff]
    %v1594 = vld [vmem:[#allocation5 + $0x8] sm:$0xff]
    %v1595 = vld [vmem:[#allocation5 + $0x10] sm:$0xff]
    %v1596 = vld [vmem:[#allocation5 + $0x18] sm:$0xff]
    %1599 = vset.pattern.permute.xlu0 0
    %1600 = vperm.xlu0 %1599, %v1589
    %v1601 = vpop.permute.xlu0 %1600
    %1602 = vset.pattern.permute.xlu0 0
    %1603 = vperm.xlu0 %1602, %v1590
    %v1604 = vpop.permute.xlu0 %1603
    %v1605 = vlaneseq
    %v1606 = vshrl.u32 %v1605, 7
    %v1607 = vsub.s32 %v384, %v1606
    %v1608 = vrot.slane %v1601, %v1607
    %v1609 = vlaneseq
    %v1610 = vshrl.u32 %v1609, 7
    %v1611 = vsub.s32 %v389, %v1610
    %v1612 = vrot.slane %v1604, %v1611
    %v1613 = vsel %vm394, %v1612, %v1608
    %v1614 = vsel %vm511, %v1613, 0
    %1616 = vmatprep.subr.mxu0 0.0
    %1617 = vmatpush1.msra.mxu0 0.0
    %1618 = vmatprep.subr.mxu0 0.0
    %1619 = vmatpush1.msra.mxu0 0.0
    %1620 = vmatprep.subr.mxu0 0.0
    %1621 = vmatpush1.msra.mxu0 0.0
    %1622 = vmatprep.subr.mxu0 0.0
    %1623 = vmatpush1.msra.mxu0 0.0
    %1624 = vmatprep.subr.mxu0 0.0
    %1625 = vmatpush1.msra.mxu0 0.0
    %1626 = vmatprep.subr.mxu0 0.0
    %1627 = vmatpush1.msra.mxu0 0.0
    %1628 = vmatprep.subr.mxu0 0.0
    %1629 = vmatpush1.msra.mxu0 0.0
    %1630 = vmatprep.subr.mxu0 0.0
    %1631 = vmatpush1.msra.mxu0 0.0
    %1632 = vmatprep.subr.mxu0 0.0
    %1633 = vmatpush1.msra.mxu0 0.0
    %1634 = vmatprep.subr.mxu0 0.0
    %1635 = vmatpush1.msra.mxu0 0.0
    %1636 = vmatprep.subr.mxu0 0.0
    %1637 = vmatpush1.msra.mxu0 0.0
    %1638 = vmatprep.subr.mxu0 0.0
    %1639 = vmatpush1.msra.mxu0 0.0
    %1640 = vmatprep.subr.mxu0 0.0
    %1641 = vmatpush1.msra.mxu0 0.0
    %1642 = vmatprep.subr.mxu0 0.0
    %1643 = vmatpush1.msra.mxu0 0.0
    %1644 = vmatprep.subr.mxu0 0.0
    %1645 = vmatpush1.msra.mxu0 %v1594
    %1646 = vmatprep.subr.mxu0 0.0
    %1647 = vmatpush1.msra.mxu0 %v1593
    %1648 = vmatprep.subr.mxu0 0.0
    %1649 = vmatpush2.msra.mxu0 0.0
    %1650 = vmatprep.subr.mxu0 0.0
    %1651 = vmatpush2.msra.mxu0 0.0
    %1652 = vmatprep.subr.mxu0 0.0
    %1653 = vmatpush2.msra.mxu0 0.0
    %1654 = vmatprep.subr.mxu0 0.0
    %1655 = vmatpush2.msra.mxu0 0.0
    %1656 = vmatprep.subr.mxu0 0.0
    %1657 = vmatpush2.msra.mxu0 0.0
    %1658 = vmatprep.subr.mxu0 0.0
    %1659 = vmatpush2.msra.mxu0 0.0
    %1660 = vmatprep.subr.mxu0 0.0
    %1661 = vmatpush2.msra.mxu0 0.0
    %1662 = vmatprep.subr.mxu0 0.0
    %1663 = vmatpush2.msra.mxu0 0.0
    %1664 = vmatprep.subr.mxu0 0.0
    %1665 = vmatpush2.msra.mxu0 0.0
    %1666 = vmatprep.subr.mxu0 0.0
    %1667 = vmatpush2.msra.mxu0 0.0
    %1668 = vmatprep.subr.mxu0 0.0
    %1669 = vmatpush2.msra.mxu0 0.0
    %1670 = vmatprep.subr.mxu0 0.0
    %1671 = vmatpush2.msra.mxu0 0.0
    %1672 = vmatprep.subr.mxu0 0.0
    %1673 = vmatpush2.msra.mxu0 0.0
    %1674 = vmatprep.subr.mxu0 0.0
    %1675 = vmatpush2.msra.mxu0 0.0
    %1676 = vmatprep.subr.mxu0 0.0
    %1677 = vmatpush2.msra.mxu0 0.0
    %1678 = vmatprep.subr.mxu0 0.0
    %1679 = vmatpush2.msra.mxu0 0.0
    %1680 = vmatprep.mubr.f32.mxu0 0.0
    %1681 = vmatmul.mubr.f32.gmra.mxu0 %v1614
    %v1682 = vpop.f32.mrf.mxu0
    %v1683 = vadd.f32 0.0, %v1682
    %v1684 = vpop.f32.mrf.mxu0
    %1685 = vdwg.mxu0
    %1688 = vset.pattern.permute.xlu0 0
    %1689 = vperm.xlu0 %1688, %v1591
    %v1690 = vpop.permute.xlu0 %1689
    %1691 = vset.pattern.permute.xlu0 0
    %1692 = vperm.xlu0 %1691, %v1592
    %v1693 = vpop.permute.xlu0 %1692
    %v1694 = vlaneseq
    %v1695 = vshrl.u32 %v1694, 7
    %v1696 = vsub.s32 %v384, %v1695
    %v1697 = vrot.slane %v1690, %v1696
    %v1698 = vlaneseq
    %v1699 = vshrl.u32 %v1698, 7
    %v1700 = vsub.s32 %v389, %v1699
    %v1701 = vrot.slane %v1693, %v1700
    %v1702 = vsel %vm394, %v1701, %v1697
    %v1703 = vsel %vm511, %v1702, 0
    %1705 = vmatprep.subr.mxu0 0.0
    %1706 = vmatpush1.msra.mxu0 0.0
    %1707 = vmatprep.subr.mxu0 0.0
    %1708 = vmatpush1.msra.mxu0 0.0
    %1709 = vmatprep.subr.mxu0 0.0
    %1710 = vmatpush1.msra.mxu0 0.0
    %1711 = vmatprep.subr.mxu0 0.0
    %1712 = vmatpush1.msra.mxu0 0.0
    %1713 = vmatprep.subr.mxu0 0.0
    %1714 = vmatpush1.msra.mxu0 0.0
    %1715 = vmatprep.subr.mxu0 0.0
    %1716 = vmatpush1.msra.mxu0 0.0
    %1717 = vmatprep.subr.mxu0 0.0
    %1718 = vmatpush1.msra.mxu0 0.0
    %1719 = vmatprep.subr.mxu0 0.0
    %1720 = vmatpush1.msra.mxu0 0.0
    %1721 = vmatprep.subr.mxu0 0.0
    %1722 = vmatpush1.msra.mxu0 0.0
    %1723 = vmatprep.subr.mxu0 0.0
    %1724 = vmatpush1.msra.mxu0 0.0
    %1725 = vmatprep.subr.mxu0 0.0
    %1726 = vmatpush1.msra.mxu0 0.0
    %1727 = vmatprep.subr.mxu0 0.0
    %1728 = vmatpush1.msra.mxu0 0.0
    %1729 = vmatprep.subr.mxu0 0.0
    %1730 = vmatpush1.msra.mxu0 0.0
    %1731 = vmatprep.subr.mxu0 0.0
    %1732 = vmatpush1.msra.mxu0 0.0
    %1733 = vmatprep.subr.mxu0 0.0
    %1734 = vmatpush1.msra.mxu0 %v1596
    %1735 = vmatprep.subr.mxu0 0.0
    %1736 = vmatpush1.msra.mxu0 %v1595
    %1737 = vmatprep.subr.mxu0 0.0
    %1738 = vmatpush2.msra.mxu0 0.0
    %1739 = vmatprep.subr.mxu0 0.0
    %1740 = vmatpush2.msra.mxu0 0.0
    %1741 = vmatprep.subr.mxu0 0.0
    %1742 = vmatpush2.msra.mxu0 0.0
    %1743 = vmatprep.subr.mxu0 0.0
    %1744 = vmatpush2.msra.mxu0 0.0
    %1745 = vmatprep.subr.mxu0 0.0
    %1746 = vmatpush2.msra.mxu0 0.0
    %1747 = vmatprep.subr.mxu0 0.0
    %1748 = vmatpush2.msra.mxu0 0.0
    %1749 = vmatprep.subr.mxu0 0.0
    %1750 = vmatpush2.msra.mxu0 0.0
    %1751 = vmatprep.subr.mxu0 0.0
    %1752 = vmatpush2.msra.mxu0 0.0
    %1753 = vmatprep.subr.mxu0 0.0
    %1754 = vmatpush2.msra.mxu0 0.0
    %1755 = vmatprep.subr.mxu0 0.0
    %1756 = vmatpush2.msra.mxu0 0.0
    %1757 = vmatprep.subr.mxu0 0.0
    %1758 = vmatpush2.msra.mxu0 0.0
    %1759 = vmatprep.subr.mxu0 0.0
    %1760 = vmatpush2.msra.mxu0 0.0
    %1761 = vmatprep.subr.mxu0 0.0
    %1762 = vmatpush2.msra.mxu0 0.0
    %1763 = vmatprep.subr.mxu0 0.0
    %1764 = vmatpush2.msra.mxu0 0.0
    %1765 = vmatprep.subr.mxu0 0.0
    %1766 = vmatpush2.msra.mxu0 0.0
    %1767 = vmatprep.subr.mxu0 0.0
    %1768 = vmatpush2.msra.mxu0 0.0
    %1769 = vmatprep.mubr.f32.mxu0 0.0
    %1770 = vmatmul.mubr.f32.gmra.mxu0 %v1703
    %v1771 = vpop.f32.mrf.mxu0
    %v1772 = vadd.f32 0.0, %v1771
    %v1773 = vpop.f32.mrf.mxu0
    %1774 = vdwg.mxu0
    %v1775 = vadd.f32 %v1683, 0.0
    %v1776 = vadd.f32 %v1772, 0.0
    %s1777 = scalar_lea.vmem [#allocation7], 6
    %v1778 = vld [vmem:[%s1777] sm:$0x3]
    %v1781 = vrot.slane %v1776, 7
    %v1782 = vsel %vm405, %v1781, %v1775
    %v1784 = vadd.f32 %v1778, %v1782
    %v1785 = vld [vmem:[#allocation10] sm:$0xff]
    %v1786 = vld [vmem:[#allocation10 + $0x8] sm:$0xff]
    %v1787 = vld [vmem:[#allocation10 + $0x10] sm:$0xff]
    %v1788 = vld [vmem:[#allocation10 + $0x18] sm:$0xff]
    %1789 = vmatprep.subr.mxu0 0.0
    %1790 = vmatpush1.msra.mxu0 0.0
    %1791 = vmatprep.subr.mxu0 0.0
    %1792 = vmatpush1.msra.mxu0 0.0
    %1793 = vmatprep.subr.mxu0 0.0
    %1794 = vmatpush1.msra.mxu0 0.0
    %1795 = vmatprep.subr.mxu0 0.0
    %1796 = vmatpush1.msra.mxu0 0.0
    %1797 = vmatprep.subr.mxu0 0.0
    %1798 = vmatpush1.msra.mxu0 0.0
    %1799 = vmatprep.subr.mxu0 0.0
    %1800 = vmatpush1.msra.mxu0 0.0
    %1801 = vmatprep.subr.mxu0 0.0
    %1802 = vmatpush1.msra.mxu0 0.0
    %1803 = vmatprep.subr.mxu0 0.0
    %1804 = vmatpush1.msra.mxu0 0.0
    %1805 = vmatprep.subr.mxu0 0.0
    %1806 = vmatpush1.msra.mxu0 0.0
    %1807 = vmatprep.subr.mxu0 0.0
    %1808 = vmatpush1.msra.mxu0 0.0
    %1809 = vmatprep.subr.mxu0 0.0
    %1810 = vmatpush1.msra.mxu0 0.0
    %1811 = vmatprep.subr.mxu0 0.0
    %1812 = vmatpush1.msra.mxu0 0.0
    %1813 = vmatprep.subr.mxu0 0.0
    %1814 = vmatpush1.msra.mxu0 %v1788
    %1815 = vmatprep.subr.mxu0 0.0
    %1816 = vmatpush1.msra.mxu0 %v1787
    %1817 = vmatprep.subr.mxu0 0.0
    %1818 = vmatpush1.msra.mxu0 %v1786
    %1819 = vmatprep.subr.mxu0 0.0
    %1820 = vmatpush1.msra.mxu0 %v1785
    %1821 = vmatprep.subr.mxu0 0.0
    %1822 = vmatpush2.msra.mxu0 0.0
    %1823 = vmatprep.subr.mxu0 0.0
    %1824 = vmatpush2.msra.mxu0 0.0
    %1825 = vmatprep.subr.mxu0 0.0
    %1826 = vmatpush2.msra.mxu0 0.0
    %1827 = vmatprep.subr.mxu0 0.0
    %1828 = vmatpush2.msra.mxu0 0.0
    %1829 = vmatprep.subr.mxu0 0.0
    %1830 = vmatpush2.msra.mxu0 0.0
    %1831 = vmatprep.subr.mxu0 0.0
    %1832 = vmatpush2.msra.mxu0 0.0
    %1833 = vmatprep.subr.mxu0 0.0
    %1834 = vmatpush2.msra.mxu0 0.0
    %1835 = vmatprep.subr.mxu0 0.0
    %1836 = vmatpush2.msra.mxu0 0.0
    %1837 = vmatprep.subr.mxu0 0.0
    %1838 = vmatpush2.msra.mxu0 0.0
    %1839 = vmatprep.subr.mxu0 0.0
    %1840 = vmatpush2.msra.mxu0 0.0
    %1841 = vmatprep.subr.mxu0 0.0
    %1842 = vmatpush2.msra.mxu0 0.0
    %1843 = vmatprep.subr.mxu0 0.0
    %1844 = vmatpush2.msra.mxu0 0.0
    %1845 = vmatprep.subr.mxu0 0.0
    %1846 = vmatpush2.msra.mxu0 0.0
    %1847 = vmatprep.subr.mxu0 0.0
    %1848 = vmatpush2.msra.mxu0 0.0
    %1849 = vmatprep.subr.mxu0 0.0
    %1850 = vmatpush2.msra.mxu0 0.0
    %1851 = vmatprep.subr.mxu0 0.0
    %1852 = vmatpush2.msra.mxu0 0.0
    %1853 = vmatprep.mubr.f32.mxu0 0.0
    %1854 = vmatmul.mubr.f32.gmra.mxu0 %v1348
    %v1855 = vpop.f32.mrf.mxu0
    %v1856 = vadd.f32 0.0, %v1855
    %v1857 = vpop.f32.mrf.mxu0
    %1858 = vdwg.mxu0
    %v1859 = vadd.f32 %v1784, %v1856
    %v1860 = vld [vmem:[%s7] sm:$0x1]
    %v1862 = vlaneseq
    %v1863 = vshrl.u32 %v1862, 7
    %v1864 = vsub.s32 0, %v1863
    %v1865 = vrot.slane %v1860, %v1864
    %v1867 = vadd.f32 %v1859, %v1865
    %v1868 = vxor.u32 %v1867, 2147483648
    %v1869 = vmul.f32 %v1868, 1.442695
    %v1870 = vpow.pop %v1869
    %v1871 = vadd.f32 %v1870, 1.0
    %v1872 = vrcp.pop %v1871
    %v1873 = vmul.f32 1.0, %v1872
    %v1874 = vtanh.pop %v1867
    %v1875 = vmul.f32 %v1873, %v1334
    %1877 = vrot.lane.b32.xlu0 %v1874, 64
    %v1878 = vpop.permute.xlu0 %1877
    %v1880 = vmul.f32 %v1873, %v1878
    %1882 = vrot.lane.b32.xlu0 %v1880, 32
    %v1883 = vpop.permute.xlu0 %1882
    %v1885 = vadd.f32 %v1875, %v1883
    %v1886 = vtanh.pop %v1885
    %1888 = vrot.lane.b32.xlu0 %v1886, 64
    %v1889 = vpop.permute.xlu0 %1888
    %v1891 = vmul.f32 %v1873, %v1889
    %v1892 = vld [vmem:[#allocation8] sm:$0xff]
    %v1893 = vld [vmem:[#allocation8 + $0x8] sm:$0xff]
    %v1894 = vld [vmem:[#allocation8 + $0x10] sm:$0xff]
    %v1895 = vld [vmem:[#allocation8 + $0x18] sm:$0xff]
    %1897 = vrot.lane.b32.xlu0 %v1891, 32
    %v1898 = vpop.permute.xlu0 %1897
    %v1899 = vsel %vm125, %v1898, 0
    %1901 = vmatprep.subr.mxu0 0.0
    %1902 = vmatpush1.msra.mxu0 0.0
    %1903 = vmatprep.subr.mxu0 0.0
    %1904 = vmatpush1.msra.mxu0 0.0
    %1905 = vmatprep.subr.mxu0 0.0
    %1906 = vmatpush1.msra.mxu0 0.0
    %1907 = vmatprep.subr.mxu0 0.0
    %1908 = vmatpush1.msra.mxu0 0.0
    %1909 = vmatprep.subr.mxu0 0.0
    %1910 = vmatpush1.msra.mxu0 0.0
    %1911 = vmatprep.subr.mxu0 0.0
    %1912 = vmatpush1.msra.mxu0 0.0
    %1913 = vmatprep.subr.mxu0 0.0
    %1914 = vmatpush1.msra.mxu0 0.0
    %1915 = vmatprep.subr.mxu0 0.0
    %1916 = vmatpush1.msra.mxu0 0.0
    %1917 = vmatprep.subr.mxu0 0.0
    %1918 = vmatpush1.msra.mxu0 0.0
    %1919 = vmatprep.subr.mxu0 0.0
    %1920 = vmatpush1.msra.mxu0 0.0
    %1921 = vmatprep.subr.mxu0 0.0
    %1922 = vmatpush1.msra.mxu0 0.0
    %1923 = vmatprep.subr.mxu0 0.0
    %1924 = vmatpush1.msra.mxu0 0.0
    %1925 = vmatprep.subr.mxu0 0.0
    %1926 = vmatpush1.msra.mxu0 %v1895
    %1927 = vmatprep.subr.mxu0 0.0
    %1928 = vmatpush1.msra.mxu0 %v1894
    %1929 = vmatprep.subr.mxu0 0.0
    %1930 = vmatpush1.msra.mxu0 %v1893
    %1931 = vmatprep.subr.mxu0 0.0
    %1932 = vmatpush1.msra.mxu0 %v1892
    %1933 = vmatprep.subr.mxu0 0.0
    %1934 = vmatpush2.msra.mxu0 0.0
    %1935 = vmatprep.subr.mxu0 0.0
    %1936 = vmatpush2.msra.mxu0 0.0
    %1937 = vmatprep.subr.mxu0 0.0
    %1938 = vmatpush2.msra.mxu0 0.0
    %1939 = vmatprep.subr.mxu0 0.0
    %1940 = vmatpush2.msra.mxu0 0.0
    %1941 = vmatprep.subr.mxu0 0.0
    %1942 = vmatpush2.msra.mxu0 0.0
    %1943 = vmatprep.subr.mxu0 0.0
    %1944 = vmatpush2.msra.mxu0 0.0
    %1945 = vmatprep.subr.mxu0 0.0
    %1946 = vmatpush2.msra.mxu0 0.0
    %1947 = vmatprep.subr.mxu0 0.0
    %1948 = vmatpush2.msra.mxu0 0.0
    %1949 = vmatprep.subr.mxu0 0.0
    %1950 = vmatpush2.msra.mxu0 0.0
    %1951 = vmatprep.subr.mxu0 0.0
    %1952 = vmatpush2.msra.mxu0 0.0
    %1953 = vmatprep.subr.mxu0 0.0
    %1954 = vmatpush2.msra.mxu0 0.0
    %1955 = vmatprep.subr.mxu0 0.0
    %1956 = vmatpush2.msra.mxu0 0.0
    %1957 = vmatprep.subr.mxu0 0.0
    %1958 = vmatpush2.msra.mxu0 0.0
    %1959 = vmatprep.subr.mxu0 0.0
    %1960 = vmatpush2.msra.mxu0 0.0
    %1961 = vmatprep.subr.mxu0 0.0
    %1962 = vmatpush2.msra.mxu0 0.0
    %1963 = vmatprep.subr.mxu0 0.0
    %1964 = vmatpush2.msra.mxu0 0.0
    %1965 = vmatprep.mubr.f32.mxu0 0.0
    %1966 = vmatmul.mubr.f32.gmra.mxu0 %v1899
    %v1967 = vpop.f32.mrf.mxu0
    %v1968 = vadd.f32 0.0, %v1967
    %v1969 = vpop.f32.mrf.mxu0
    %1970 = vdwg.mxu0
    %v1971 = vld [vmem:[#allocation2] sm:$0xff]
    %v1972 = vld [vmem:[#allocation2 + $0x8] sm:$0xff]
    %v1973 = vld [vmem:[#allocation2 + $0x10] sm:$0xff]
    %v1974 = vld [vmem:[#allocation2 + $0x18] sm:$0xff]
    %v1977 = vunpack.c.l.s4 1966171168
    %v1978 = vunpack.c.0.s8 %v1977
    %v1979 = vlaneseq
    %v1980 = vshrl.u32 %v1979, 7
    %v1981 = vsub.s32 %v1978, %v1980
    %v1982 = vrot.slane %v1968, %v1981
    %v1983 = vcombine.high %v1982, %v1982
    %v1985 = vunpack.c.l.s4 1966171168
    %v1986 = vunpack.c.0.s8 %v1985
    %v1987 = vlaneseq
    %v1988 = vshrl.u32 %v1987, 7
    %v1989 = vsub.s32 %v1986, %v1988
    %v1990 = vrot.slane %v1982, %v1989
    %v1992 = vunpack.c.l.s4 1966171168
    %v1993 = vunpack.c.0.s8 %v1992
    %v1994 = vlaneseq
    %v1995 = vshrl.u32 %v1994, 7
    %v1996 = vsub.s32 %v1993, %v1995
    %v1997 = vrot.slane %v1983, %v1996
    %v1998 = vlaneseq
    %v1999 = vshrl.u32 %v1998, 7
    %v2000 = vsub.s32 0, %v1999
    %v2001 = vrot.slane %v1990, %v2000
    %v2002 = vlaneseq
    %v2003 = vshrl.u32 %v2002, 7
    %v2004 = vsub.s32 0, %v2003
    %v2005 = vrot.slane %v1997, %v2004
    %v2008 = vadd.f32 %v1971, %v2001
    %v2009 = vadd.f32 %v1972, %v2001
    %v2010 = vadd.f32 %v1973, %v2005
    %v2011 = vadd.f32 %v1974, %v2005
    %v2012 = vtanh.pop %v2008
    %v2013 = vtanh.pop %v2009
    %v2014 = vtanh.pop %v2010
    %v2015 = vtanh.pop %v2011
    %v2016 = vld [vmem:[%s5] sm:$0x1]
    %v2018 = vlaneseq
    %v2019 = vshrl.u32 %v2018, 7
    %v2020 = vsub.s32 0, %v2019
    %v2021 = vrot.slane %v2016, %v2020
    %v2023 = vmul.f32 %v2012, %v2021
    %v2024 = vmul.f32 %v2013, %v2021
    %v2025 = vmul.f32 %v2014, %v2021
    %v2026 = vmul.f32 %v2015, %v2021
    %v2027 = vsel %vm125, %v2023, 0.0
    %2028 = vadd.xlane.f32.xlu0 %v2027
    %v2029 = vpop.xlane.xlu0 %2028
    %v2030 = vsel %vm125, %v2024, 0.0
    %2031 = vadd.xlane.f32.xlu0 %v2030
    %v2032 = vpop.xlane.xlu0 %2031
    %v2033 = vsel %vm125, %v2025, 0.0
    %2034 = vadd.xlane.f32.xlu0 %v2033
    %v2035 = vpop.xlane.xlu0 %2034
    %v2036 = vsel %vm125, %v2026, 0.0
    %2037 = vadd.xlane.f32.xlu0 %v2036
    %v2038 = vpop.xlane.xlu0 %2037
    %v2043 = vlaneseq
    %v2044 = vshrl.u32 %v2043, 7
    %v2045 = vsub.s32 %v384, %v2044
    %v2046 = vrot.slane %v2029, %v2045
    %v2047 = vlaneseq
    %v2048 = vshrl.u32 %v2047, 7
    %v2049 = vsub.s32 %v389, %v2048
    %v2050 = vrot.slane %v2032, %v2049
    %v2051 = vsel %vm394, %v2050, %v2046
    %v2052 = vlaneseq
    %v2053 = vshrl.u32 %v2052, 7
    %v2054 = vsub.s32 %v384, %v2053
    %v2055 = vrot.slane %v2035, %v2054
    %v2056 = vlaneseq
    %v2057 = vshrl.u32 %v2056, 7
    %v2058 = vsub.s32 %v389, %v2057
    %v2059 = vrot.slane %v2038, %v2058
    %v2060 = vsel %vm394, %v2059, %v2055
    %v2061 = vsel %vm405, %v2060, %v2051
    %v2063 = vsel %vm408, %v2061, -inf
    %2064 = vmax.xlane.f32.xlu0 %v2063
    %v2065 = vpop.xlane.xlu0 %2064
    %v2067 = vlaneseq
    %v2068 = vshrl.u32 %v2067, 7
    %v2069 = vsub.s32 0, %v2068
    %v2070 = vrot.slane %v2065, %v2069
    %v2071 = vlaneseq
    %v2072 = vshrl.u32 %v2071, 7
    %v2073 = vsub.s32 1, %v2072
    %v2074 = vrot.slane %v2065, %v2073
    %v2077 = vsub.f32 %v2029, %v2070
    %v2078 = vsub.f32 %v2032, %v2070
    %v2079 = vsub.f32 %v2035, %v2074
    %v2080 = vsub.f32 %v2038, %v2074
    %v2081 = vmul.f32 %v2077, 1.442695
    %v2082 = vpow.pop %v2081
    %v2083 = vmul.f32 %v2078, 1.442695
    %v2084 = vpow.pop %v2083
    %v2085 = vmul.f32 %v2079, 1.442695
    %v2086 = vpow.pop %v2085
    %v2087 = vmul.f32 %v2080, 1.442695
    %v2088 = vpow.pop %v2087
    %2093 = vset.pattern.permute.xlu0 0
    %2094 = vperm.xlu0 %2093, %v2082
    %v2095 = vpop.permute.xlu0 %2094
    %2096 = vset.pattern.permute.xlu0 0
    %2097 = vperm.xlu0 %2096, %v2084
    %v2098 = vpop.permute.xlu0 %2097
    %2099 = vset.pattern.permute.xlu0 0
    %2100 = vperm.xlu0 %2099, %v2086
    %v2101 = vpop.permute.xlu0 %2100
    %2102 = vset.pattern.permute.xlu0 0
    %2103 = vperm.xlu0 %2102, %v2088
    %v2104 = vpop.permute.xlu0 %2103
    %v2105 = vlaneseq
    %v2106 = vshrl.u32 %v2105, 7
    %v2107 = vsub.s32 %v384, %v2106
    %v2108 = vrot.slane %v2095, %v2107
    %v2109 = vlaneseq
    %v2110 = vshrl.u32 %v2109, 7
    %v2111 = vsub.s32 %v389, %v2110
    %v2112 = vrot.slane %v2098, %v2111
    %v2113 = vsel %vm394, %v2112, %v2108
    %v2114 = vlaneseq
    %v2115 = vshrl.u32 %v2114, 7
    %v2116 = vsub.s32 %v384, %v2115
    %v2117 = vrot.slane %v2101, %v2116
    %v2118 = vlaneseq
    %v2119 = vshrl.u32 %v2118, 7
    %v2120 = vsub.s32 %v389, %v2119
    %v2121 = vrot.slane %v2104, %v2120
    %v2122 = vsel %vm394, %v2121, %v2117
    %v2123 = vsel %vm405, %v2122, %v2113
    %v2125 = vsel %vm408, %v2123, 0.0
    %2126 = vadd.xlane.f32.xlu0 %v2125
    %v2127 = vpop.xlane.xlu0 %2126
    %v2128 = vrcp.pop %v2127
    %v2130 = vlaneseq
    %v2131 = vshrl.u32 %v2130, 7
    %v2132 = vsub.s32 0, %v2131
    %v2133 = vrot.slane %v2128, %v2132
    %v2134 = vlaneseq
    %v2135 = vshrl.u32 %v2134, 7
    %v2136 = vsub.s32 1, %v2135
    %v2137 = vrot.slane %v2128, %v2136
    %v2140 = vmul.f32 %v2082, %v2133
    %v2141 = vmul.f32 %v2084, %v2133
    %v2142 = vmul.f32 %v2086, %v2137
    %v2143 = vmul.f32 %v2088, %v2137
    %v2144 = vld [vmem:[#allocation5] sm:$0xff]
    %v2145 = vld [vmem:[#allocation5 + $0x8] sm:$0xff]
    %v2146 = vld [vmem:[#allocation5 + $0x10] sm:$0xff]
    %v2147 = vld [vmem:[#allocation5 + $0x18] sm:$0xff]
    %2150 = vset.pattern.permute.xlu0 0
    %2151 = vperm.xlu0 %2150, %v2140
    %v2152 = vpop.permute.xlu0 %2151
    %2153 = vset.pattern.permute.xlu0 0
    %2154 = vperm.xlu0 %2153, %v2141
    %v2155 = vpop.permute.xlu0 %2154
    %v2156 = vlaneseq
    %v2157 = vshrl.u32 %v2156, 7
    %v2158 = vsub.s32 %v384, %v2157
    %v2159 = vrot.slane %v2152, %v2158
    %v2160 = vlaneseq
    %v2161 = vshrl.u32 %v2160, 7
    %v2162 = vsub.s32 %v389, %v2161
    %v2163 = vrot.slane %v2155, %v2162
    %v2164 = vsel %vm394, %v2163, %v2159
    %v2165 = vsel %vm511, %v2164, 0
    %2167 = vmatprep.subr.mxu0 0.0
    %2168 = vmatpush1.msra.mxu0 0.0
    %2169 = vmatprep.subr.mxu0 0.0
    %2170 = vmatpush1.msra.mxu0 0.0
    %2171 = vmatprep.subr.mxu0 0.0
    %2172 = vmatpush1.msra.mxu0 0.0
    %2173 = vmatprep.subr.mxu0 0.0
    %2174 = vmatpush1.msra.mxu0 0.0
    %2175 = vmatprep.subr.mxu0 0.0
    %2176 = vmatpush1.msra.mxu0 0.0
    %2177 = vmatprep.subr.mxu0 0.0
    %2178 = vmatpush1.msra.mxu0 0.0
    %2179 = vmatprep.subr.mxu0 0.0
    %2180 = vmatpush1.msra.mxu0 0.0
    %2181 = vmatprep.subr.mxu0 0.0
    %2182 = vmatpush1.msra.mxu0 0.0
    %2183 = vmatprep.subr.mxu0 0.0
    %2184 = vmatpush1.msra.mxu0 0.0
    %2185 = vmatprep.subr.mxu0 0.0
    %2186 = vmatpush1.msra.mxu0 0.0
    %2187 = vmatprep.subr.mxu0 0.0
    %2188 = vmatpush1.msra.mxu0 0.0
    %2189 = vmatprep.subr.mxu0 0.0
    %2190 = vmatpush1.msra.mxu0 0.0
    %2191 = vmatprep.subr.mxu0 0.0
    %2192 = vmatpush1.msra.mxu0 0.0
    %2193 = vmatprep.subr.mxu0 0.0
    %2194 = vmatpush1.msra.mxu0 0.0
    %2195 = vmatprep.subr.mxu0 0.0
    %2196 = vmatpush1.msra.mxu0 %v2145
    %2197 = vmatprep.subr.mxu0 0.0
    %2198 = vmatpush1.msra.mxu0 %v2144
    %2199 = vmatprep.subr.mxu0 0.0
    %2200 = vmatpush2.msra.mxu0 0.0
    %2201 = vmatprep.subr.mxu0 0.0
    %2202 = vmatpush2.msra.mxu0 0.0
    %2203 = vmatprep.subr.mxu0 0.0
    %2204 = vmatpush2.msra.mxu0 0.0
    %2205 = vmatprep.subr.mxu0 0.0
    %2206 = vmatpush2.msra.mxu0 0.0
    %2207 = vmatprep.subr.mxu0 0.0
    %2208 = vmatpush2.msra.mxu0 0.0
    %2209 = vmatprep.subr.mxu0 0.0
    %2210 = vmatpush2.msra.mxu0 0.0
    %2211 = vmatprep.subr.mxu0 0.0
    %2212 = vmatpush2.msra.mxu0 0.0
    %2213 = vmatprep.subr.mxu0 0.0
    %2214 = vmatpush2.msra.mxu0 0.0
    %2215 = vmatprep.subr.mxu0 0.0
    %2216 = vmatpush2.msra.mxu0 0.0
    %2217 = vmatprep.subr.mxu0 0.0
    %2218 = vmatpush2.msra.mxu0 0.0
    %2219 = vmatprep.subr.mxu0 0.0
    %2220 = vmatpush2.msra.mxu0 0.0
    %2221 = vmatprep.subr.mxu0 0.0
    %2222 = vmatpush2.msra.mxu0 0.0
    %2223 = vmatprep.subr.mxu0 0.0
    %2224 = vmatpush2.msra.mxu0 0.0
    %2225 = vmatprep.subr.mxu0 0.0
    %2226 = vmatpush2.msra.mxu0 0.0
    %2227 = vmatprep.subr.mxu0 0.0
    %2228 = vmatpush2.msra.mxu0 0.0
    %2229 = vmatprep.subr.mxu0 0.0
    %2230 = vmatpush2.msra.mxu0 0.0
    %2231 = vmatprep.mubr.f32.mxu0 0.0
    %2232 = vmatmul.mubr.f32.gmra.mxu0 %v2165
    %v2233 = vpop.f32.mrf.mxu0
    %v2234 = vadd.f32 0.0, %v2233
    %v2235 = vpop.f32.mrf.mxu0
    %2236 = vdwg.mxu0
    %2239 = vset.pattern.permute.xlu0 0
    %2240 = vperm.xlu0 %2239, %v2142
    %v2241 = vpop.permute.xlu0 %2240
    %2242 = vset.pattern.permute.xlu0 0
    %2243 = vperm.xlu0 %2242, %v2143
    %v2244 = vpop.permute.xlu0 %2243
    %v2245 = vlaneseq
    %v2246 = vshrl.u32 %v2245, 7
    %v2247 = vsub.s32 %v384, %v2246
    %v2248 = vrot.slane %v2241, %v2247
    %v2249 = vlaneseq
    %v2250 = vshrl.u32 %v2249, 7
    %v2251 = vsub.s32 %v389, %v2250
    %v2252 = vrot.slane %v2244, %v2251
    %v2253 = vsel %vm394, %v2252, %v2248
    %v2254 = vsel %vm511, %v2253, 0
    %2256 = vmatprep.subr.mxu0 0.0
    %2257 = vmatpush1.msra.mxu0 0.0
    %2258 = vmatprep.subr.mxu0 0.0
    %2259 = vmatpush1.msra.mxu0 0.0
    %2260 = vmatprep.subr.mxu0 0.0
    %2261 = vmatpush1.msra.mxu0 0.0
    %2262 = vmatprep.subr.mxu0 0.0
    %2263 = vmatpush1.msra.mxu0 0.0
    %2264 = vmatprep.subr.mxu0 0.0
    %2265 = vmatpush1.msra.mxu0 0.0
    %2266 = vmatprep.subr.mxu0 0.0
    %2267 = vmatpush1.msra.mxu0 0.0
    %2268 = vmatprep.subr.mxu0 0.0
    %2269 = vmatpush1.msra.mxu0 0.0
    %2270 = vmatprep.subr.mxu0 0.0
    %2271 = vmatpush1.msra.mxu0 0.0
    %2272 = vmatprep.subr.mxu0 0.0
    %2273 = vmatpush1.msra.mxu0 0.0
    %2274 = vmatprep.subr.mxu0 0.0
    %2275 = vmatpush1.msra.mxu0 0.0
    %2276 = vmatprep.subr.mxu0 0.0
    %2277 = vmatpush1.msra.mxu0 0.0
    %2278 = vmatprep.subr.mxu0 0.0
    %2279 = vmatpush1.msra.mxu0 0.0
    %2280 = vmatprep.subr.mxu0 0.0
    %2281 = vmatpush1.msra.mxu0 0.0
    %2282 = vmatprep.subr.mxu0 0.0
    %2283 = vmatpush1.msra.mxu0 0.0
    %2284 = vmatprep.subr.mxu0 0.0
    %2285 = vmatpush1.msra.mxu0 %v2147
    %2286 = vmatprep.subr.mxu0 0.0
    %2287 = vmatpush1.msra.mxu0 %v2146
    %2288 = vmatprep.subr.mxu0 0.0
    %2289 = vmatpush2.msra.mxu0 0.0
    %2290 = vmatprep.subr.mxu0 0.0
    %2291 = vmatpush2.msra.mxu0 0.0
    %2292 = vmatprep.subr.mxu0 0.0
    %2293 = vmatpush2.msra.mxu0 0.0
    %2294 = vmatprep.subr.mxu0 0.0
    %2295 = vmatpush2.msra.mxu0 0.0
    %2296 = vmatprep.subr.mxu0 0.0
    %2297 = vmatpush2.msra.mxu0 0.0
    %2298 = vmatprep.subr.mxu0 0.0
    %2299 = vmatpush2.msra.mxu0 0.0
    %2300 = vmatprep.subr.mxu0 0.0
    %2301 = vmatpush2.msra.mxu0 0.0
    %2302 = vmatprep.subr.mxu0 0.0
    %2303 = vmatpush2.msra.mxu0 0.0
    %2304 = vmatprep.subr.mxu0 0.0
    %2305 = vmatpush2.msra.mxu0 0.0
    %2306 = vmatprep.subr.mxu0 0.0
    %2307 = vmatpush2.msra.mxu0 0.0
    %2308 = vmatprep.subr.mxu0 0.0
    %2309 = vmatpush2.msra.mxu0 0.0
    %2310 = vmatprep.subr.mxu0 0.0
    %2311 = vmatpush2.msra.mxu0 0.0
    %2312 = vmatprep.subr.mxu0 0.0
    %2313 = vmatpush2.msra.mxu0 0.0
    %2314 = vmatprep.subr.mxu0 0.0
    %2315 = vmatpush2.msra.mxu0 0.0
    %2316 = vmatprep.subr.mxu0 0.0
    %2317 = vmatpush2.msra.mxu0 0.0
    %2318 = vmatprep.subr.mxu0 0.0
    %2319 = vmatpush2.msra.mxu0 0.0
    %2320 = vmatprep.mubr.f32.mxu0 0.0
    %2321 = vmatmul.mubr.f32.gmra.mxu0 %v2254
    %v2322 = vpop.f32.mrf.mxu0
    %v2323 = vadd.f32 0.0, %v2322
    %v2324 = vpop.f32.mrf.mxu0
    %2325 = vdwg.mxu0
    %v2326 = vadd.f32 %v2234, 0.0
    %v2327 = vadd.f32 %v2323, 0.0
    %s2328 = scalar_lea.vmem [#allocation7], 8
    %v2329 = vld [vmem:[%s2328] sm:$0x3]
    %v2332 = vrot.slane %v2327, 7
    %v2333 = vsel %vm405, %v2332, %v2326
    %v2335 = vadd.f32 %v2329, %v2333
    %v2336 = vld [vmem:[#allocation10] sm:$0xff]
    %v2337 = vld [vmem:[#allocation10 + $0x8] sm:$0xff]
    %v2338 = vld [vmem:[#allocation10 + $0x10] sm:$0xff]
    %v2339 = vld [vmem:[#allocation10 + $0x18] sm:$0xff]
    %2340 = vmatprep.subr.mxu0 0.0
    %2341 = vmatpush1.msra.mxu0 0.0
    %2342 = vmatprep.subr.mxu0 0.0
    %2343 = vmatpush1.msra.mxu0 0.0
    %2344 = vmatprep.subr.mxu0 0.0
    %2345 = vmatpush1.msra.mxu0 0.0
    %2346 = vmatprep.subr.mxu0 0.0
    %2347 = vmatpush1.msra.mxu0 0.0
    %2348 = vmatprep.subr.mxu0 0.0
    %2349 = vmatpush1.msra.mxu0 0.0
    %2350 = vmatprep.subr.mxu0 0.0
    %2351 = vmatpush1.msra.mxu0 0.0
    %2352 = vmatprep.subr.mxu0 0.0
    %2353 = vmatpush1.msra.mxu0 0.0
    %2354 = vmatprep.subr.mxu0 0.0
    %2355 = vmatpush1.msra.mxu0 0.0
    %2356 = vmatprep.subr.mxu0 0.0
    %2357 = vmatpush1.msra.mxu0 0.0
    %2358 = vmatprep.subr.mxu0 0.0
    %2359 = vmatpush1.msra.mxu0 0.0
    %2360 = vmatprep.subr.mxu0 0.0
    %2361 = vmatpush1.msra.mxu0 0.0
    %2362 = vmatprep.subr.mxu0 0.0
    %2363 = vmatpush1.msra.mxu0 0.0
    %2364 = vmatprep.subr.mxu0 0.0
    %2365 = vmatpush1.msra.mxu0 %v2339
    %2366 = vmatprep.subr.mxu0 0.0
    %2367 = vmatpush1.msra.mxu0 %v2338
    %2368 = vmatprep.subr.mxu0 0.0
    %2369 = vmatpush1.msra.mxu0 %v2337
    %2370 = vmatprep.subr.mxu0 0.0
    %2371 = vmatpush1.msra.mxu0 %v2336
    %2372 = vmatprep.subr.mxu0 0.0
    %2373 = vmatpush2.msra.mxu0 0.0
    %2374 = vmatprep.subr.mxu0 0.0
    %2375 = vmatpush2.msra.mxu0 0.0
    %2376 = vmatprep.subr.mxu0 0.0
    %2377 = vmatpush2.msra.mxu0 0.0
    %2378 = vmatprep.subr.mxu0 0.0
    %2379 = vmatpush2.msra.mxu0 0.0
    %2380 = vmatprep.subr.mxu0 0.0
    %2381 = vmatpush2.msra.mxu0 0.0
    %2382 = vmatprep.subr.mxu0 0.0
    %2383 = vmatpush2.msra.mxu0 0.0
    %2384 = vmatprep.subr.mxu0 0.0
    %2385 = vmatpush2.msra.mxu0 0.0
    %2386 = vmatprep.subr.mxu0 0.0
    %2387 = vmatpush2.msra.mxu0 0.0
    %2388 = vmatprep.subr.mxu0 0.0
    %2389 = vmatpush2.msra.mxu0 0.0
    %2390 = vmatprep.subr.mxu0 0.0
    %2391 = vmatpush2.msra.mxu0 0.0
    %2392 = vmatprep.subr.mxu0 0.0
    %2393 = vmatpush2.msra.mxu0 0.0
    %2394 = vmatprep.subr.mxu0 0.0
    %2395 = vmatpush2.msra.mxu0 0.0
    %2396 = vmatprep.subr.mxu0 0.0
    %2397 = vmatpush2.msra.mxu0 0.0
    %2398 = vmatprep.subr.mxu0 0.0
    %2399 = vmatpush2.msra.mxu0 0.0
    %2400 = vmatprep.subr.mxu0 0.0
    %2401 = vmatpush2.msra.mxu0 0.0
    %2402 = vmatprep.subr.mxu0 0.0
    %2403 = vmatpush2.msra.mxu0 0.0
    %2404 = vmatprep.mubr.f32.mxu0 0.0
    %2405 = vmatmul.mubr.f32.gmra.mxu0 %v1899
    %v2406 = vpop.f32.mrf.mxu0
    %v2407 = vadd.f32 0.0, %v2406
    %v2408 = vpop.f32.mrf.mxu0
    %2409 = vdwg.mxu0
    %v2410 = vadd.f32 %v2335, %v2407
    %v2411 = vld [vmem:[%s7] sm:$0x1]
    %v2413 = vlaneseq
    %v2414 = vshrl.u32 %v2413, 7
    %v2415 = vsub.s32 0, %v2414
    %v2416 = vrot.slane %v2411, %v2415
    %v2418 = vadd.f32 %v2410, %v2416
    %v2419 = vxor.u32 %v2418, 2147483648
    %v2420 = vmul.f32 %v2419, 1.442695
    %v2421 = vpow.pop %v2420
    %v2422 = vadd.f32 %v2421, 1.0
    %v2423 = vrcp.pop %v2422
    %v2424 = vmul.f32 1.0, %v2423
    %v2425 = vtanh.pop %v2418
    %v2426 = vmul.f32 %v2424, %v1885
    %2428 = vrot.lane.b32.xlu0 %v2425, 64
    %v2429 = vpop.permute.xlu0 %2428
    %v2431 = vmul.f32 %v2424, %v2429
    %2433 = vrot.lane.b32.xlu0 %v2431, 32
    %v2434 = vpop.permute.xlu0 %2433
    %v2436 = vadd.f32 %v2426, %v2434
    %v2437 = vtanh.pop %v2436
    %2439 = vrot.lane.b32.xlu0 %v2437, 64
    %v2440 = vpop.permute.xlu0 %2439
    %v2442 = vmul.f32 %v2424, %v2440
    %v2443 = vld [vmem:[#allocation8] sm:$0xff]
    %v2444 = vld [vmem:[#allocation8 + $0x8] sm:$0xff]
    %v2445 = vld [vmem:[#allocation8 + $0x10] sm:$0xff]
    %v2446 = vld [vmem:[#allocation8 + $0x18] sm:$0xff]
    %2448 = vrot.lane.b32.xlu0 %v2442, 32
    %v2449 = vpop.permute.xlu0 %2448
    %v2450 = vsel %vm125, %v2449, 0
    %2452 = vmatprep.subr.mxu0 0.0
    %2453 = vmatpush1.msra.mxu0 0.0
    %2454 = vmatprep.subr.mxu0 0.0
    %2455 = vmatpush1.msra.mxu0 0.0
    %2456 = vmatprep.subr.mxu0 0.0
    %2457 = vmatpush1.msra.mxu0 0.0
    %2458 = vmatprep.subr.mxu0 0.0
    %2459 = vmatpush1.msra.mxu0 0.0
    %2460 = vmatprep.subr.mxu0 0.0
    %2461 = vmatpush1.msra.mxu0 0.0
    %2462 = vmatprep.subr.mxu0 0.0
    %2463 = vmatpush1.msra.mxu0 0.0
    %2464 = vmatprep.subr.mxu0 0.0
    %2465 = vmatpush1.msra.mxu0 0.0
    %2466 = vmatprep.subr.mxu0 0.0
    %2467 = vmatpush1.msra.mxu0 0.0
    %2468 = vmatprep.subr.mxu0 0.0
    %2469 = vmatpush1.msra.mxu0 0.0
    %2470 = vmatprep.subr.mxu0 0.0
    %2471 = vmatpush1.msra.mxu0 0.0
    %2472 = vmatprep.subr.mxu0 0.0
    %2473 = vmatpush1.msra.mxu0 0.0
    %2474 = vmatprep.subr.mxu0 0.0
    %2475 = vmatpush1.msra.mxu0 0.0
    %2476 = vmatprep.subr.mxu0 0.0
    %2477 = vmatpush1.msra.mxu0 %v2446
    %2478 = vmatprep.subr.mxu0 0.0
    %2479 = vmatpush1.msra.mxu0 %v2445
    %2480 = vmatprep.subr.mxu0 0.0
    %2481 = vmatpush1.msra.mxu0 %v2444
    %2482 = vmatprep.subr.mxu0 0.0
    %2483 = vmatpush1.msra.mxu0 %v2443
    %2484 = vmatprep.subr.mxu0 0.0
    %2485 = vmatpush2.msra.mxu0 0.0
    %2486 = vmatprep.subr.mxu0 0.0
    %2487 = vmatpush2.msra.mxu0 0.0
    %2488 = vmatprep.subr.mxu0 0.0
    %2489 = vmatpush2.msra.mxu0 0.0
    %2490 = vmatprep.subr.mxu0 0.0
    %2491 = vmatpush2.msra.mxu0 0.0
    %2492 = vmatprep.subr.mxu0 0.0
    %2493 = vmatpush2.msra.mxu0 0.0
    %2494 = vmatprep.subr.mxu0 0.0
    %2495 = vmatpush2.msra.mxu0 0.0
    %2496 = vmatprep.subr.mxu0 0.0
    %2497 = vmatpush2.msra.mxu0 0.0
    %2498 = vmatprep.subr.mxu0 0.0
    %2499 = vmatpush2.msra.mxu0 0.0
    %2500 = vmatprep.subr.mxu0 0.0
    %2501 = vmatpush2.msra.mxu0 0.0
    %2502 = vmatprep.subr.mxu0 0.0
    %2503 = vmatpush2.msra.mxu0 0.0
    %2504 = vmatprep.subr.mxu0 0.0
    %2505 = vmatpush2.msra.mxu0 0.0
    %2506 = vmatprep.subr.mxu0 0.0
    %2507 = vmatpush2.msra.mxu0 0.0
    %2508 = vmatprep.subr.mxu0 0.0
    %2509 = vmatpush2.msra.mxu0 0.0
    %2510 = vmatprep.subr.mxu0 0.0
    %2511 = vmatpush2.msra.mxu0 0.0
    %2512 = vmatprep.subr.mxu0 0.0
    %2513 = vmatpush2.msra.mxu0 0.0
    %2514 = vmatprep.subr.mxu0 0.0
    %2515 = vmatpush2.msra.mxu0 0.0
    %2516 = vmatprep.mubr.f32.mxu0 0.0
    %2517 = vmatmul.mubr.f32.gmra.mxu0 %v2450
    %v2518 = vpop.f32.mrf.mxu0
    %v2519 = vadd.f32 0.0, %v2518
    %v2520 = vpop.f32.mrf.mxu0
    %2521 = vdwg.mxu0
    %v2522 = vld [vmem:[#allocation2] sm:$0xff]
    %v2523 = vld [vmem:[#allocation2 + $0x8] sm:$0xff]
    %v2524 = vld [vmem:[#allocation2 + $0x10] sm:$0xff]
    %v2525 = vld [vmem:[#allocation2 + $0x18] sm:$0xff]
    %v2528 = vunpack.c.l.s4 1966171168
    %v2529 = vunpack.c.0.s8 %v2528
    %v2530 = vlaneseq
    %v2531 = vshrl.u32 %v2530, 7
    %v2532 = vsub.s32 %v2529, %v2531
    %v2533 = vrot.slane %v2519, %v2532
    %v2534 = vcombine.high %v2533, %v2533
    %v2536 = vunpack.c.l.s4 1966171168
    %v2537 = vunpack.c.0.s8 %v2536
    %v2538 = vlaneseq
    %v2539 = vshrl.u32 %v2538, 7
    %v2540 = vsub.s32 %v2537, %v2539
    %v2541 = vrot.slane %v2533, %v2540
    %v2543 = vunpack.c.l.s4 1966171168
    %v2544 = vunpack.c.0.s8 %v2543
    %v2545 = vlaneseq
    %v2546 = vshrl.u32 %v2545, 7
    %v2547 = vsub.s32 %v2544, %v2546
    %v2548 = vrot.slane %v2534, %v2547
    %v2549 = vlaneseq
    %v2550 = vshrl.u32 %v2549, 7
    %v2551 = vsub.s32 0, %v2550
    %v2552 = vrot.slane %v2541, %v2551
    %v2553 = vlaneseq
    %v2554 = vshrl.u32 %v2553, 7
    %v2555 = vsub.s32 0, %v2554
    %v2556 = vrot.slane %v2548, %v2555
    %v2559 = vadd.f32 %v2522, %v2552
    %v2560 = vadd.f32 %v2523, %v2552
    %v2561 = vadd.f32 %v2524, %v2556
    %v2562 = vadd.f32 %v2525, %v2556
    %v2563 = vtanh.pop %v2559
    %v2564 = vtanh.pop %v2560
    %v2565 = vtanh.pop %v2561
    %v2566 = vtanh.pop %v2562
    %v2567 = vld [vmem:[%s5] sm:$0x1]
    %v2569 = vlaneseq
    %v2570 = vshrl.u32 %v2569, 7
    %v2571 = vsub.s32 0, %v2570
    %v2572 = vrot.slane %v2567, %v2571
    %v2574 = vmul.f32 %v2563, %v2572
    %v2575 = vmul.f32 %v2564, %v2572
    %v2576 = vmul.f32 %v2565, %v2572
    %v2577 = vmul.f32 %v2566, %v2572
    %v2578 = vsel %vm125, %v2574, 0.0
    %2579 = vadd.xlane.f32.xlu0 %v2578
    %v2580 = vpop.xlane.xlu0 %2579
    %v2581 = vsel %vm125, %v2575, 0.0
    %2582 = vadd.xlane.f32.xlu0 %v2581
    %v2583 = vpop.xlane.xlu0 %2582
    %v2584 = vsel %vm125, %v2576, 0.0
    %2585 = vadd.xlane.f32.xlu0 %v2584
    %v2586 = vpop.xlane.xlu0 %2585
    %v2587 = vsel %vm125, %v2577, 0.0
    %2588 = vadd.xlane.f32.xlu0 %v2587
    %v2589 = vpop.xlane.xlu0 %2588
    %v2594 = vlaneseq
    %v2595 = vshrl.u32 %v2594, 7
    %v2596 = vsub.s32 %v384, %v2595
    %v2597 = vrot.slane %v2580, %v2596
    %v2598 = vlaneseq
    %v2599 = vshrl.u32 %v2598, 7
    %v2600 = vsub.s32 %v389, %v2599
    %v2601 = vrot.slane %v2583, %v2600
    %v2602 = vsel %vm394, %v2601, %v2597
    %v2603 = vlaneseq
    %v2604 = vshrl.u32 %v2603, 7
    %v2605 = vsub.s32 %v384, %v2604
    %v2606 = vrot.slane %v2586, %v2605
    %v2607 = vlaneseq
    %v2608 = vshrl.u32 %v2607, 7
    %v2609 = vsub.s32 %v389, %v2608
    %v2610 = vrot.slane %v2589, %v2609
    %v2611 = vsel %vm394, %v2610, %v2606
    %v2612 = vsel %vm405, %v2611, %v2602
    %v2614 = vsel %vm408, %v2612, -inf
    %2615 = vmax.xlane.f32.xlu0 %v2614
    %v2616 = vpop.xlane.xlu0 %2615
    %v2618 = vlaneseq
    %v2619 = vshrl.u32 %v2618, 7
    %v2620 = vsub.s32 0, %v2619
    %v2621 = vrot.slane %v2616, %v2620
    %v2622 = vlaneseq
    %v2623 = vshrl.u32 %v2622, 7
    %v2624 = vsub.s32 1, %v2623
    %v2625 = vrot.slane %v2616, %v2624
    %v2628 = vsub.f32 %v2580, %v2621
    %v2629 = vsub.f32 %v2583, %v2621
    %v2630 = vsub.f32 %v2586, %v2625
    %v2631 = vsub.f32 %v2589, %v2625
    %v2632 = vmul.f32 %v2628, 1.442695
    %v2633 = vpow.pop %v2632
    %v2634 = vmul.f32 %v2629, 1.442695
    %v2635 = vpow.pop %v2634
    %v2636 = vmul.f32 %v2630, 1.442695
    %v2637 = vpow.pop %v2636
    %v2638 = vmul.f32 %v2631, 1.442695
    %v2639 = vpow.pop %v2638
    %2644 = vset.pattern.permute.xlu0 0
    %2645 = vperm.xlu0 %2644, %v2633
    %v2646 = vpop.permute.xlu0 %2645
    %2647 = vset.pattern.permute.xlu0 0
    %2648 = vperm.xlu0 %2647, %v2635
    %v2649 = vpop.permute.xlu0 %2648
    %2650 = vset.pattern.permute.xlu0 0
    %2651 = vperm.xlu0 %2650, %v2637
    %v2652 = vpop.permute.xlu0 %2651
    %2653 = vset.pattern.permute.xlu0 0
    %2654 = vperm.xlu0 %2653, %v2639
    %v2655 = vpop.permute.xlu0 %2654
    %v2656 = vlaneseq
    %v2657 = vshrl.u32 %v2656, 7
    %v2658 = vsub.s32 %v384, %v2657
    %v2659 = vrot.slane %v2646, %v2658
    %v2660 = vlaneseq
    %v2661 = vshrl.u32 %v2660, 7
    %v2662 = vsub.s32 %v389, %v2661
    %v2663 = vrot.slane %v2649, %v2662
    %v2664 = vsel %vm394, %v2663, %v2659
    %v2665 = vlaneseq
    %v2666 = vshrl.u32 %v2665, 7
    %v2667 = vsub.s32 %v384, %v2666
    %v2668 = vrot.slane %v2652, %v2667
    %v2669 = vlaneseq
    %v2670 = vshrl.u32 %v2669, 7
    %v2671 = vsub.s32 %v389, %v2670
    %v2672 = vrot.slane %v2655, %v2671
    %v2673 = vsel %vm394, %v2672, %v2668
    %v2674 = vsel %vm405, %v2673, %v2664
    %v2676 = vsel %vm408, %v2674, 0.0
    %2677 = vadd.xlane.f32.xlu0 %v2676
    %v2678 = vpop.xlane.xlu0 %2677
    %v2679 = vrcp.pop %v2678
    %v2681 = vlaneseq
    %v2682 = vshrl.u32 %v2681, 7
    %v2683 = vsub.s32 0, %v2682
    %v2684 = vrot.slane %v2679, %v2683
    %v2685 = vlaneseq
    %v2686 = vshrl.u32 %v2685, 7
    %v2687 = vsub.s32 1, %v2686
    %v2688 = vrot.slane %v2679, %v2687
    %v2691 = vmul.f32 %v2633, %v2684
    %v2692 = vmul.f32 %v2635, %v2684
    %v2693 = vmul.f32 %v2637, %v2688
    %v2694 = vmul.f32 %v2639, %v2688
    %v2695 = vld [vmem:[#allocation5] sm:$0xff]
    %v2696 = vld [vmem:[#allocation5 + $0x8] sm:$0xff]
    %v2697 = vld [vmem:[#allocation5 + $0x10] sm:$0xff]
    %v2698 = vld [vmem:[#allocation5 + $0x18] sm:$0xff]
    %2701 = vset.pattern.permute.xlu0 0
    %2702 = vperm.xlu0 %2701, %v2691
    %v2703 = vpop.permute.xlu0 %2702
    %2704 = vset.pattern.permute.xlu0 0
    %2705 = vperm.xlu0 %2704, %v2692
    %v2706 = vpop.permute.xlu0 %2705
    %v2707 = vlaneseq
    %v2708 = vshrl.u32 %v2707, 7
    %v2709 = vsub.s32 %v384, %v2708
    %v2710 = vrot.slane %v2703, %v2709
    %v2711 = vlaneseq
    %v2712 = vshrl.u32 %v2711, 7
    %v2713 = vsub.s32 %v389, %v2712
    %v2714 = vrot.slane %v2706, %v2713
    %v2715 = vsel %vm394, %v2714, %v2710
    %v2716 = vsel %vm511, %v2715, 0
    %2718 = vmatprep.subr.mxu0 0.0
    %2719 = vmatpush1.msra.mxu0 0.0
    %2720 = vmatprep.subr.mxu0 0.0
    %2721 = vmatpush1.msra.mxu0 0.0
    %2722 = vmatprep.subr.mxu0 0.0
    %2723 = vmatpush1.msra.mxu0 0.0
    %2724 = vmatprep.subr.mxu0 0.0
    %2725 = vmatpush1.msra.mxu0 0.0
    %2726 = vmatprep.subr.mxu0 0.0
    %2727 = vmatpush1.msra.mxu0 0.0
    %2728 = vmatprep.subr.mxu0 0.0
    %2729 = vmatpush1.msra.mxu0 0.0
    %2730 = vmatprep.subr.mxu0 0.0
    %2731 = vmatpush1.msra.mxu0 0.0
    %2732 = vmatprep.subr.mxu0 0.0
    %2733 = vmatpush1.msra.mxu0 0.0
    %2734 = vmatprep.subr.mxu0 0.0
    %2735 = vmatpush1.msra.mxu0 0.0
    %2736 = vmatprep.subr.mxu0 0.0
    %2737 = vmatpush1.msra.mxu0 0.0
    %2738 = vmatprep.subr.mxu0 0.0
    %2739 = vmatpush1.msra.mxu0 0.0
    %2740 = vmatprep.subr.mxu0 0.0
    %2741 = vmatpush1.msra.mxu0 0.0
    %2742 = vmatprep.subr.mxu0 0.0
    %2743 = vmatpush1.msra.mxu0 0.0
    %2744 = vmatprep.subr.mxu0 0.0
    %2745 = vmatpush1.msra.mxu0 0.0
    %2746 = vmatprep.subr.mxu0 0.0
    %2747 = vmatpush1.msra.mxu0 %v2696
    %2748 = vmatprep.subr.mxu0 0.0
    %2749 = vmatpush1.msra.mxu0 %v2695
    %2750 = vmatprep.subr.mxu0 0.0
    %2751 = vmatpush2.msra.mxu0 0.0
    %2752 = vmatprep.subr.mxu0 0.0
    %2753 = vmatpush2.msra.mxu0 0.0
    %2754 = vmatprep.subr.mxu0 0.0
    %2755 = vmatpush2.msra.mxu0 0.0
    %2756 = vmatprep.subr.mxu0 0.0
    %2757 = vmatpush2.msra.mxu0 0.0
    %2758 = vmatprep.subr.mxu0 0.0
    %2759 = vmatpush2.msra.mxu0 0.0
    %2760 = vmatprep.subr.mxu0 0.0
    %2761 = vmatpush2.msra.mxu0 0.0
    %2762 = vmatprep.subr.mxu0 0.0
    %2763 = vmatpush2.msra.mxu0 0.0
    %2764 = vmatprep.subr.mxu0 0.0
    %2765 = vmatpush2.msra.mxu0 0.0
    %2766 = vmatprep.subr.mxu0 0.0
    %2767 = vmatpush2.msra.mxu0 0.0
    %2768 = vmatprep.subr.mxu0 0.0
    %2769 = vmatpush2.msra.mxu0 0.0
    %2770 = vmatprep.subr.mxu0 0.0
    %2771 = vmatpush2.msra.mxu0 0.0
    %2772 = vmatprep.subr.mxu0 0.0
    %2773 = vmatpush2.msra.mxu0 0.0
    %2774 = vmatprep.subr.mxu0 0.0
    %2775 = vmatpush2.msra.mxu0 0.0
    %2776 = vmatprep.subr.mxu0 0.0
    %2777 = vmatpush2.msra.mxu0 0.0
    %2778 = vmatprep.subr.mxu0 0.0
    %2779 = vmatpush2.msra.mxu0 0.0
    %2780 = vmatprep.subr.mxu0 0.0
    %2781 = vmatpush2.msra.mxu0 0.0
    %2782 = vmatprep.mubr.f32.mxu0 0.0
    %2783 = vmatmul.mubr.f32.gmra.mxu0 %v2716
    %v2784 = vpop.f32.mrf.mxu0
    %v2785 = vadd.f32 0.0, %v2784
    %v2786 = vpop.f32.mrf.mxu0
    %2787 = vdwg.mxu0
    %2790 = vset.pattern.permute.xlu0 0
    %2791 = vperm.xlu0 %2790, %v2693
    %v2792 = vpop.permute.xlu0 %2791
    %2793 = vset.pattern.permute.xlu0 0
    %2794 = vperm.xlu0 %2793, %v2694
    %v2795 = vpop.permute.xlu0 %2794
    %v2796 = vlaneseq
    %v2797 = vshrl.u32 %v2796, 7
    %v2798 = vsub.s32 %v384, %v2797
    %v2799 = vrot.slane %v2792, %v2798
    %v2800 = vlaneseq
    %v2801 = vshrl.u32 %v2800, 7
    %v2802 = vsub.s32 %v389, %v2801
    %v2803 = vrot.slane %v2795, %v2802
    %v2804 = vsel %vm394, %v2803, %v2799
    %v2805 = vsel %vm511, %v2804, 0
    %2807 = vmatprep.subr.mxu0 0.0
    %2808 = vmatpush1.msra.mxu0 0.0
    %2809 = vmatprep.subr.mxu0 0.0
    %2810 = vmatpush1.msra.mxu0 0.0
    %2811 = vmatprep.subr.mxu0 0.0
    %2812 = vmatpush1.msra.mxu0 0.0
    %2813 = vmatprep.subr.mxu0 0.0
    %2814 = vmatpush1.msra.mxu0 0.0
    %2815 = vmatprep.subr.mxu0 0.0
    %2816 = vmatpush1.msra.mxu0 0.0
    %2817 = vmatprep.subr.mxu0 0.0
    %2818 = vmatpush1.msra.mxu0 0.0
    %2819 = vmatprep.subr.mxu0 0.0
    %2820 = vmatpush1.msra.mxu0 0.0
    %2821 = vmatprep.subr.mxu0 0.0
    %2822 = vmatpush1.msra.mxu0 0.0
    %2823 = vmatprep.subr.mxu0 0.0
    %2824 = vmatpush1.msra.mxu0 0.0
    %2825 = vmatprep.subr.mxu0 0.0
    %2826 = vmatpush1.msra.mxu0 0.0
    %2827 = vmatprep.subr.mxu0 0.0
    %2828 = vmatpush1.msra.mxu0 0.0
    %2829 = vmatprep.subr.mxu0 0.0
    %2830 = vmatpush1.msra.mxu0 0.0
    %2831 = vmatprep.subr.mxu0 0.0
    %2832 = vmatpush1.msra.mxu0 0.0
    %2833 = vmatprep.subr.mxu0 0.0
    %2834 = vmatpush1.msra.mxu0 0.0
    %2835 = vmatprep.subr.mxu0 0.0
    %2836 = vmatpush1.msra.mxu0 %v2698
    %2837 = vmatprep.subr.mxu0 0.0
    %2838 = vmatpush1.msra.mxu0 %v2697
    %2839 = vmatprep.subr.mxu0 0.0
    %2840 = vmatpush2.msra.mxu0 0.0
    %2841 = vmatprep.subr.mxu0 0.0
    %2842 = vmatpush2.msra.mxu0 0.0
    %2843 = vmatprep.subr.mxu0 0.0
    %2844 = vmatpush2.msra.mxu0 0.0
    %2845 = vmatprep.subr.mxu0 0.0
    %2846 = vmatpush2.msra.mxu0 0.0
    %2847 = vmatprep.subr.mxu0 0.0
    %2848 = vmatpush2.msra.mxu0 0.0
    %2849 = vmatprep.subr.mxu0 0.0
    %2850 = vmatpush2.msra.mxu0 0.0
    %2851 = vmatprep.subr.mxu0 0.0
    %2852 = vmatpush2.msra.mxu0 0.0
    %2853 = vmatprep.subr.mxu0 0.0
    %2854 = vmatpush2.msra.mxu0 0.0
    %2855 = vmatprep.subr.mxu0 0.0
    %2856 = vmatpush2.msra.mxu0 0.0
    %2857 = vmatprep.subr.mxu0 0.0
    %2858 = vmatpush2.msra.mxu0 0.0
    %2859 = vmatprep.subr.mxu0 0.0
    %2860 = vmatpush2.msra.mxu0 0.0
    %2861 = vmatprep.subr.mxu0 0.0
    %2862 = vmatpush2.msra.mxu0 0.0
    %2863 = vmatprep.subr.mxu0 0.0
    %2864 = vmatpush2.msra.mxu0 0.0
    %2865 = vmatprep.subr.mxu0 0.0
    %2866 = vmatpush2.msra.mxu0 0.0
    %2867 = vmatprep.subr.mxu0 0.0
    %2868 = vmatpush2.msra.mxu0 0.0
    %2869 = vmatprep.subr.mxu0 0.0
    %2870 = vmatpush2.msra.mxu0 0.0
    %2871 = vmatprep.mubr.f32.mxu0 0.0
    %2872 = vmatmul.mubr.f32.gmra.mxu0 %v2805
    %v2873 = vpop.f32.mrf.mxu0
    %v2874 = vadd.f32 0.0, %v2873
    %v2875 = vpop.f32.mrf.mxu0
    %2876 = vdwg.mxu0
    %v2877 = vadd.f32 %v2785, 0.0
    %v2878 = vadd.f32 %v2874, 0.0
    %s2879 = scalar_lea.vmem [#allocation7], 10
    %v2880 = vld [vmem:[%s2879] sm:$0x3]
    %v2883 = vrot.slane %v2878, 7
    %v2884 = vsel %vm405, %v2883, %v2877
    %v2886 = vadd.f32 %v2880, %v2884
    %v2887 = vld [vmem:[#allocation10] sm:$0xff]
    %v2888 = vld [vmem:[#allocation10 + $0x8] sm:$0xff]
    %v2889 = vld [vmem:[#allocation10 + $0x10] sm:$0xff]
    %v2890 = vld [vmem:[#allocation10 + $0x18] sm:$0xff]
    %2891 = vmatprep.subr.mxu0 0.0
    %2892 = vmatpush1.msra.mxu0 0.0
    %2893 = vmatprep.subr.mxu0 0.0
    %2894 = vmatpush1.msra.mxu0 0.0
    %2895 = vmatprep.subr.mxu0 0.0
    %2896 = vmatpush1.msra.mxu0 0.0
    %2897 = vmatprep.subr.mxu0 0.0
    %2898 = vmatpush1.msra.mxu0 0.0
    %2899 = vmatprep.subr.mxu0 0.0
    %2900 = vmatpush1.msra.mxu0 0.0
    %2901 = vmatprep.subr.mxu0 0.0
    %2902 = vmatpush1.msra.mxu0 0.0
    %2903 = vmatprep.subr.mxu0 0.0
    %2904 = vmatpush1.msra.mxu0 0.0
    %2905 = vmatprep.subr.mxu0 0.0
    %2906 = vmatpush1.msra.mxu0 0.0
    %2907 = vmatprep.subr.mxu0 0.0
    %2908 = vmatpush1.msra.mxu0 0.0
    %2909 = vmatprep.subr.mxu0 0.0
    %2910 = vmatpush1.msra.mxu0 0.0
    %2911 = vmatprep.subr.mxu0 0.0
    %2912 = vmatpush1.msra.mxu0 0.0
    %2913 = vmatprep.subr.mxu0 0.0
    %2914 = vmatpush1.msra.mxu0 0.0
    %2915 = vmatprep.subr.mxu0 0.0
    %2916 = vmatpush1.msra.mxu0 %v2890
    %2917 = vmatprep.subr.mxu0 0.0
    %2918 = vmatpush1.msra.mxu0 %v2889
    %2919 = vmatprep.subr.mxu0 0.0
    %2920 = vmatpush1.msra.mxu0 %v2888
    %2921 = vmatprep.subr.mxu0 0.0
    %2922 = vmatpush1.msra.mxu0 %v2887
    %2923 = vmatprep.subr.mxu0 0.0
    %2924 = vmatpush2.msra.mxu0 0.0
    %2925 = vmatprep.subr.mxu0 0.0
    %2926 = vmatpush2.msra.mxu0 0.0
    %2927 = vmatprep.subr.mxu0 0.0
    %2928 = vmatpush2.msra.mxu0 0.0
    %2929 = vmatprep.subr.mxu0 0.0
    %2930 = vmatpush2.msra.mxu0 0.0
    %2931 = vmatprep.subr.mxu0 0.0
    %2932 = vmatpush2.msra.mxu0 0.0
    %2933 = vmatprep.subr.mxu0 0.0
    %2934 = vmatpush2.msra.mxu0 0.0
    %2935 = vmatprep.subr.mxu0 0.0
    %2936 = vmatpush2.msra.mxu0 0.0
    %2937 = vmatprep.subr.mxu0 0.0
    %2938 = vmatpush2.msra.mxu0 0.0
    %2939 = vmatprep.subr.mxu0 0.0
    %2940 = vmatpush2.msra.mxu0 0.0
    %2941 = vmatprep.subr.mxu0 0.0
    %2942 = vmatpush2.msra.mxu0 0.0
    %2943 = vmatprep.subr.mxu0 0.0
    %2944 = vmatpush2.msra.mxu0 0.0
    %2945 = vmatprep.subr.mxu0 0.0
    %2946 = vmatpush2.msra.mxu0 0.0
    %2947 = vmatprep.subr.mxu0 0.0
    %2948 = vmatpush2.msra.mxu0 0.0
    %2949 = vmatprep.subr.mxu0 0.0
    %2950 = vmatpush2.msra.mxu0 0.0
    %2951 = vmatprep.subr.mxu0 0.0
    %2952 = vmatpush2.msra.mxu0 0.0
    %2953 = vmatprep.subr.mxu0 0.0
    %2954 = vmatpush2.msra.mxu0 0.0
    %2955 = vmatprep.mubr.f32.mxu0 0.0
    %2956 = vmatmul.mubr.f32.gmra.mxu0 %v2450
    %v2957 = vpop.f32.mrf.mxu0
    %v2958 = vadd.f32 0.0, %v2957
    %v2959 = vpop.f32.mrf.mxu0
    %2960 = vdwg.mxu0
    %v2961 = vadd.f32 %v2886, %v2958
    %v2962 = vld [vmem:[%s7] sm:$0x1]
    %v2964 = vlaneseq
    %v2965 = vshrl.u32 %v2964, 7
    %v2966 = vsub.s32 0, %v2965
    %v2967 = vrot.slane %v2962, %v2966
    %v2969 = vadd.f32 %v2961, %v2967
    %v2970 = vxor.u32 %v2969, 2147483648
    %v2971 = vmul.f32 %v2970, 1.442695
    %v2972 = vpow.pop %v2971
    %v2973 = vadd.f32 %v2972, 1.0
    %v2974 = vrcp.pop %v2973
    %v2975 = vmul.f32 1.0, %v2974
    %v2976 = vtanh.pop %v2969
    %v2977 = vmul.f32 %v2975, %v2436
    %2979 = vrot.lane.b32.xlu0 %v2976, 64
    %v2980 = vpop.permute.xlu0 %2979
    %v2982 = vmul.f32 %v2975, %v2980
    %2984 = vrot.lane.b32.xlu0 %v2982, 32
    %v2985 = vpop.permute.xlu0 %2984
    %v2987 = vadd.f32 %v2977, %v2985
    %v2988 = vtanh.pop %v2987
    %2990 = vrot.lane.b32.xlu0 %v2988, 64
    %v2991 = vpop.permute.xlu0 %2990
    %v2993 = vmul.f32 %v2975, %v2991
    %v2994 = vld [vmem:[#allocation8] sm:$0xff]
    %v2995 = vld [vmem:[#allocation8 + $0x8] sm:$0xff]
    %v2996 = vld [vmem:[#allocation8 + $0x10] sm:$0xff]
    %v2997 = vld [vmem:[#allocation8 + $0x18] sm:$0xff]
    %2999 = vrot.lane.b32.xlu0 %v2993, 32
    %v3000 = vpop.permute.xlu0 %2999
    %v3001 = vsel %vm125, %v3000, 0
    %3003 = vmatprep.subr.mxu0 0.0
    %3004 = vmatpush1.msra.mxu0 0.0
    %3005 = vmatprep.subr.mxu0 0.0
    %3006 = vmatpush1.msra.mxu0 0.0
    %3007 = vmatprep.subr.mxu0 0.0
    %3008 = vmatpush1.msra.mxu0 0.0
    %3009 = vmatprep.subr.mxu0 0.0
    %3010 = vmatpush1.msra.mxu0 0.0
    %3011 = vmatprep.subr.mxu0 0.0
    %3012 = vmatpush1.msra.mxu0 0.0
    %3013 = vmatprep.subr.mxu0 0.0
    %3014 = vmatpush1.msra.mxu0 0.0
    %3015 = vmatprep.subr.mxu0 0.0
    %3016 = vmatpush1.msra.mxu0 0.0
    %3017 = vmatprep.subr.mxu0 0.0
    %3018 = vmatpush1.msra.mxu0 0.0
    %3019 = vmatprep.subr.mxu0 0.0
    %3020 = vmatpush1.msra.mxu0 0.0
    %3021 = vmatprep.subr.mxu0 0.0
    %3022 = vmatpush1.msra.mxu0 0.0
    %3023 = vmatprep.subr.mxu0 0.0
    %3024 = vmatpush1.msra.mxu0 0.0
    %3025 = vmatprep.subr.mxu0 0.0
    %3026 = vmatpush1.msra.mxu0 0.0
    %3027 = vmatprep.subr.mxu0 0.0
    %3028 = vmatpush1.msra.mxu0 %v2997
    %3029 = vmatprep.subr.mxu0 0.0
    %3030 = vmatpush1.msra.mxu0 %v2996
    %3031 = vmatprep.subr.mxu0 0.0
    %3032 = vmatpush1.msra.mxu0 %v2995
    %3033 = vmatprep.subr.mxu0 0.0
    %3034 = vmatpush1.msra.mxu0 %v2994
    %3035 = vmatprep.subr.mxu0 0.0
    %3036 = vmatpush2.msra.mxu0 0.0
    %3037 = vmatprep.subr.mxu0 0.0
    %3038 = vmatpush2.msra.mxu0 0.0
    %3039 = vmatprep.subr.mxu0 0.0
    %3040 = vmatpush2.msra.mxu0 0.0
    %3041 = vmatprep.subr.mxu0 0.0
    %3042 = vmatpush2.msra.mxu0 0.0
    %3043 = vmatprep.subr.mxu0 0.0
    %3044 = vmatpush2.msra.mxu0 0.0
    %3045 = vmatprep.subr.mxu0 0.0
    %3046 = vmatpush2.msra.mxu0 0.0
    %3047 = vmatprep.subr.mxu0 0.0
    %3048 = vmatpush2.msra.mxu0 0.0
    %3049 = vmatprep.subr.mxu0 0.0
    %3050 = vmatpush2.msra.mxu0 0.0
    %3051 = vmatprep.subr.mxu0 0.0
    %3052 = vmatpush2.msra.mxu0 0.0
    %3053 = vmatprep.subr.mxu0 0.0
    %3054 = vmatpush2.msra.mxu0 0.0
    %3055 = vmatprep.subr.mxu0 0.0
    %3056 = vmatpush2.msra.mxu0 0.0
    %3057 = vmatprep.subr.mxu0 0.0
    %3058 = vmatpush2.msra.mxu0 0.0
    %3059 = vmatprep.subr.mxu0 0.0
    %3060 = vmatpush2.msra.mxu0 0.0
    %3061 = vmatprep.subr.mxu0 0.0
    %3062 = vmatpush2.msra.mxu0 0.0
    %3063 = vmatprep.subr.mxu0 0.0
    %3064 = vmatpush2.msra.mxu0 0.0
    %3065 = vmatprep.subr.mxu0 0.0
    %3066 = vmatpush2.msra.mxu0 0.0
    %3067 = vmatprep.mubr.f32.mxu0 0.0
    %3068 = vmatmul.mubr.f32.gmra.mxu0 %v3001
    %v3069 = vpop.f32.mrf.mxu0
    %v3070 = vadd.f32 0.0, %v3069
    %v3071 = vpop.f32.mrf.mxu0
    %3072 = vdwg.mxu0
    %v3073 = vld [vmem:[#allocation2] sm:$0xff]
    %v3074 = vld [vmem:[#allocation2 + $0x8] sm:$0xff]
    %v3075 = vld [vmem:[#allocation2 + $0x10] sm:$0xff]
    %v3076 = vld [vmem:[#allocation2 + $0x18] sm:$0xff]
    %v3079 = vunpack.c.l.s4 1966171168
    %v3080 = vunpack.c.0.s8 %v3079
    %v3081 = vlaneseq
    %v3082 = vshrl.u32 %v3081, 7
    %v3083 = vsub.s32 %v3080, %v3082
    %v3084 = vrot.slane %v3070, %v3083
    %v3085 = vcombine.high %v3084, %v3084
    %v3087 = vunpack.c.l.s4 1966171168
    %v3088 = vunpack.c.0.s8 %v3087
    %v3089 = vlaneseq
    %v3090 = vshrl.u32 %v3089, 7
    %v3091 = vsub.s32 %v3088, %v3090
    %v3092 = vrot.slane %v3084, %v3091
    %v3094 = vunpack.c.l.s4 1966171168
    %v3095 = vunpack.c.0.s8 %v3094
    %v3096 = vlaneseq
    %v3097 = vshrl.u32 %v3096, 7
    %v3098 = vsub.s32 %v3095, %v3097
    %v3099 = vrot.slane %v3085, %v3098
    %v3100 = vlaneseq
    %v3101 = vshrl.u32 %v3100, 7
    %v3102 = vsub.s32 0, %v3101
    %v3103 = vrot.slane %v3092, %v3102
    %v3104 = vlaneseq
    %v3105 = vshrl.u32 %v3104, 7
    %v3106 = vsub.s32 0, %v3105
    %v3107 = vrot.slane %v3099, %v3106
    %v3110 = vadd.f32 %v3073, %v3103
    %v3111 = vadd.f32 %v3074, %v3103
    %v3112 = vadd.f32 %v3075, %v3107
    %v3113 = vadd.f32 %v3076, %v3107
    %v3114 = vtanh.pop %v3110
    %v3115 = vtanh.pop %v3111
    %v3116 = vtanh.pop %v3112
    %v3117 = vtanh.pop %v3113
    %v3118 = vld [vmem:[%s5] sm:$0x1]
    %v3120 = vlaneseq
    %v3121 = vshrl.u32 %v3120, 7
    %v3122 = vsub.s32 0, %v3121
    %v3123 = vrot.slane %v3118, %v3122
    %v3125 = vmul.f32 %v3114, %v3123
    %v3126 = vmul.f32 %v3115, %v3123
    %v3127 = vmul.f32 %v3116, %v3123
    %v3128 = vmul.f32 %v3117, %v3123
    %v3129 = vsel %vm125, %v3125, 0.0
    %3130 = vadd.xlane.f32.xlu0 %v3129
    %v3131 = vpop.xlane.xlu0 %3130
    %v3132 = vsel %vm125, %v3126, 0.0
    %3133 = vadd.xlane.f32.xlu0 %v3132
    %v3134 = vpop.xlane.xlu0 %3133
    %v3135 = vsel %vm125, %v3127, 0.0
    %3136 = vadd.xlane.f32.xlu0 %v3135
    %v3137 = vpop.xlane.xlu0 %3136
    %v3138 = vsel %vm125, %v3128, 0.0
    %3139 = vadd.xlane.f32.xlu0 %v3138
    %v3140 = vpop.xlane.xlu0 %3139
    %v3145 = vlaneseq
    %v3146 = vshrl.u32 %v3145, 7
    %v3147 = vsub.s32 %v384, %v3146
    %v3148 = vrot.slane %v3131, %v3147
    %v3149 = vlaneseq
    %v3150 = vshrl.u32 %v3149, 7
    %v3151 = vsub.s32 %v389, %v3150
    %v3152 = vrot.slane %v3134, %v3151
    %v3153 = vsel %vm394, %v3152, %v3148
    %v3154 = vlaneseq
    %v3155 = vshrl.u32 %v3154, 7
    %v3156 = vsub.s32 %v384, %v3155
    %v3157 = vrot.slane %v3137, %v3156
    %v3158 = vlaneseq
    %v3159 = vshrl.u32 %v3158, 7
    %v3160 = vsub.s32 %v389, %v3159
    %v3161 = vrot.slane %v3140, %v3160
    %v3162 = vsel %vm394, %v3161, %v3157
    %v3163 = vsel %vm405, %v3162, %v3153
    %v3165 = vsel %vm408, %v3163, -inf
    %3166 = vmax.xlane.f32.xlu0 %v3165
    %v3167 = vpop.xlane.xlu0 %3166
    %v3169 = vlaneseq
    %v3170 = vshrl.u32 %v3169, 7
    %v3171 = vsub.s32 0, %v3170
    %v3172 = vrot.slane %v3167, %v3171
    %v3173 = vlaneseq
    %v3174 = vshrl.u32 %v3173, 7
    %v3175 = vsub.s32 1, %v3174
    %v3176 = vrot.slane %v3167, %v3175
    %v3179 = vsub.f32 %v3131, %v3172
    %v3180 = vsub.f32 %v3134, %v3172
    %v3181 = vsub.f32 %v3137, %v3176
    %v3182 = vsub.f32 %v3140, %v3176
    %v3183 = vmul.f32 %v3179, 1.442695
    %v3184 = vpow.pop %v3183
    %v3185 = vmul.f32 %v3180, 1.442695
    %v3186 = vpow.pop %v3185
    %v3187 = vmul.f32 %v3181, 1.442695
    %v3188 = vpow.pop %v3187
    %v3189 = vmul.f32 %v3182, 1.442695
    %v3190 = vpow.pop %v3189
    %3195 = vset.pattern.permute.xlu0 0
    %3196 = vperm.xlu0 %3195, %v3184
    %v3197 = vpop.permute.xlu0 %3196
    %3198 = vset.pattern.permute.xlu0 0
    %3199 = vperm.xlu0 %3198, %v3186
    %v3200 = vpop.permute.xlu0 %3199
    %3201 = vset.pattern.permute.xlu0 0
    %3202 = vperm.xlu0 %3201, %v3188
    %v3203 = vpop.permute.xlu0 %3202
    %3204 = vset.pattern.permute.xlu0 0
    %3205 = vperm.xlu0 %3204, %v3190
    %v3206 = vpop.permute.xlu0 %3205
    %v3207 = vlaneseq
    %v3208 = vshrl.u32 %v3207, 7
    %v3209 = vsub.s32 %v384, %v3208
    %v3210 = vrot.slane %v3197, %v3209
    %v3211 = vlaneseq
    %v3212 = vshrl.u32 %v3211, 7
    %v3213 = vsub.s32 %v389, %v3212
    %v3214 = vrot.slane %v3200, %v3213
    %v3215 = vsel %vm394, %v3214, %v3210
    %v3216 = vlaneseq
    %v3217 = vshrl.u32 %v3216, 7
    %v3218 = vsub.s32 %v384, %v3217
    %v3219 = vrot.slane %v3203, %v3218
    %v3220 = vlaneseq
    %v3221 = vshrl.u32 %v3220, 7
    %v3222 = vsub.s32 %v389, %v3221
    %v3223 = vrot.slane %v3206, %v3222
    %v3224 = vsel %vm394, %v3223, %v3219
    %v3225 = vsel %vm405, %v3224, %v3215
    %v3227 = vsel %vm408, %v3225, 0.0
    %3228 = vadd.xlane.f32.xlu0 %v3227
    %v3229 = vpop.xlane.xlu0 %3228
    %v3230 = vrcp.pop %v3229
    %v3232 = vlaneseq
    %v3233 = vshrl.u32 %v3232, 7
    %v3234 = vsub.s32 0, %v3233
    %v3235 = vrot.slane %v3230, %v3234
    %v3236 = vlaneseq
    %v3237 = vshrl.u32 %v3236, 7
    %v3238 = vsub.s32 1, %v3237
    %v3239 = vrot.slane %v3230, %v3238
    %v3242 = vmul.f32 %v3184, %v3235
    %v3243 = vmul.f32 %v3186, %v3235
    %v3244 = vmul.f32 %v3188, %v3239
    %v3245 = vmul.f32 %v3190, %v3239
    %v3246 = vld [vmem:[#allocation5] sm:$0xff]
    %v3247 = vld [vmem:[#allocation5 + $0x8] sm:$0xff]
    %v3248 = vld [vmem:[#allocation5 + $0x10] sm:$0xff]
    %v3249 = vld [vmem:[#allocation5 + $0x18] sm:$0xff]
    %3252 = vset.pattern.permute.xlu0 0
    %3253 = vperm.xlu0 %3252, %v3242
    %v3254 = vpop.permute.xlu0 %3253
    %3255 = vset.pattern.permute.xlu0 0
    %3256 = vperm.xlu0 %3255, %v3243
    %v3257 = vpop.permute.xlu0 %3256
    %v3258 = vlaneseq
    %v3259 = vshrl.u32 %v3258, 7
    %v3260 = vsub.s32 %v384, %v3259
    %v3261 = vrot.slane %v3254, %v3260
    %v3262 = vlaneseq
    %v3263 = vshrl.u32 %v3262, 7
    %v3264 = vsub.s32 %v389, %v3263
    %v3265 = vrot.slane %v3257, %v3264
    %v3266 = vsel %vm394, %v3265, %v3261
    %v3267 = vsel %vm511, %v3266, 0
    %3269 = vmatprep.subr.mxu0 0.0
    %3270 = vmatpush1.msra.mxu0 0.0
    %3271 = vmatprep.subr.mxu0 0.0
    %3272 = vmatpush1.msra.mxu0 0.0
    %3273 = vmatprep.subr.mxu0 0.0
    %3274 = vmatpush1.msra.mxu0 0.0
    %3275 = vmatprep.subr.mxu0 0.0
    %3276 = vmatpush1.msra.mxu0 0.0
    %3277 = vmatprep.subr.mxu0 0.0
    %3278 = vmatpush1.msra.mxu0 0.0
    %3279 = vmatprep.subr.mxu0 0.0
    %3280 = vmatpush1.msra.mxu0 0.0
    %3281 = vmatprep.subr.mxu0 0.0
    %3282 = vmatpush1.msra.mxu0 0.0
    %3283 = vmatprep.subr.mxu0 0.0
    %3284 = vmatpush1.msra.mxu0 0.0
    %3285 = vmatprep.subr.mxu0 0.0
    %3286 = vmatpush1.msra.mxu0 0.0
    %3287 = vmatprep.subr.mxu0 0.0
    %3288 = vmatpush1.msra.mxu0 0.0
    %3289 = vmatprep.subr.mxu0 0.0
    %3290 = vmatpush1.msra.mxu0 0.0
    %3291 = vmatprep.subr.mxu0 0.0
    %3292 = vmatpush1.msra.mxu0 0.0
    %3293 = vmatprep.subr.mxu0 0.0
    %3294 = vmatpush1.msra.mxu0 0.0
    %3295 = vmatprep.subr.mxu0 0.0
    %3296 = vmatpush1.msra.mxu0 0.0
    %3297 = vmatprep.subr.mxu0 0.0
    %3298 = vmatpush1.msra.mxu0 %v3247
    %3299 = vmatprep.subr.mxu0 0.0
    %3300 = vmatpush1.msra.mxu0 %v3246
    %3301 = vmatprep.subr.mxu0 0.0
    %3302 = vmatpush2.msra.mxu0 0.0
    %3303 = vmatprep.subr.mxu0 0.0
    %3304 = vmatpush2.msra.mxu0 0.0
    %3305 = vmatprep.subr.mxu0 0.0
    %3306 = vmatpush2.msra.mxu0 0.0
    %3307 = vmatprep.subr.mxu0 0.0
    %3308 = vmatpush2.msra.mxu0 0.0
    %3309 = vmatprep.subr.mxu0 0.0
    %3310 = vmatpush2.msra.mxu0 0.0
    %3311 = vmatprep.subr.mxu0 0.0
    %3312 = vmatpush2.msra.mxu0 0.0
    %3313 = vmatprep.subr.mxu0 0.0
    %3314 = vmatpush2.msra.mxu0 0.0
    %3315 = vmatprep.subr.mxu0 0.0
    %3316 = vmatpush2.msra.mxu0 0.0
    %3317 = vmatprep.subr.mxu0 0.0
    %3318 = vmatpush2.msra.mxu0 0.0
    %3319 = vmatprep.subr.mxu0 0.0
    %3320 = vmatpush2.msra.mxu0 0.0
    %3321 = vmatprep.subr.mxu0 0.0
    %3322 = vmatpush2.msra.mxu0 0.0
    %3323 = vmatprep.subr.mxu0 0.0
    %3324 = vmatpush2.msra.mxu0 0.0
    %3325 = vmatprep.subr.mxu0 0.0
    %3326 = vmatpush2.msra.mxu0 0.0
    %3327 = vmatprep.subr.mxu0 0.0
    %3328 = vmatpush2.msra.mxu0 0.0
    %3329 = vmatprep.subr.mxu0 0.0
    %3330 = vmatpush2.msra.mxu0 0.0
    %3331 = vmatprep.subr.mxu0 0.0
    %3332 = vmatpush2.msra.mxu0 0.0
    %3333 = vmatprep.mubr.f32.mxu0 0.0
    %3334 = vmatmul.mubr.f32.gmra.mxu0 %v3267
    %v3335 = vpop.f32.mrf.mxu0
    %v3336 = vadd.f32 0.0, %v3335
    %v3337 = vpop.f32.mrf.mxu0
    %3338 = vdwg.mxu0
    %3341 = vset.pattern.permute.xlu0 0
    %3342 = vperm.xlu0 %3341, %v3244
    %v3343 = vpop.permute.xlu0 %3342
    %3344 = vset.pattern.permute.xlu0 0
    %3345 = vperm.xlu0 %3344, %v3245
    %v3346 = vpop.permute.xlu0 %3345
    %v3347 = vlaneseq
    %v3348 = vshrl.u32 %v3347, 7
    %v3349 = vsub.s32 %v384, %v3348
    %v3350 = vrot.slane %v3343, %v3349
    %v3351 = vlaneseq
    %v3352 = vshrl.u32 %v3351, 7
    %v3353 = vsub.s32 %v389, %v3352
    %v3354 = vrot.slane %v3346, %v3353
    %v3355 = vsel %vm394, %v3354, %v3350
    %v3356 = vsel %vm511, %v3355, 0
    %3358 = vmatprep.subr.mxu0 0.0
    %3359 = vmatpush1.msra.mxu0 0.0
    %3360 = vmatprep.subr.mxu0 0.0
    %3361 = vmatpush1.msra.mxu0 0.0
    %3362 = vmatprep.subr.mxu0 0.0
    %3363 = vmatpush1.msra.mxu0 0.0
    %3364 = vmatprep.subr.mxu0 0.0
    %3365 = vmatpush1.msra.mxu0 0.0
    %3366 = vmatprep.subr.mxu0 0.0
    %3367 = vmatpush1.msra.mxu0 0.0
    %3368 = vmatprep.subr.mxu0 0.0
    %3369 = vmatpush1.msra.mxu0 0.0
    %3370 = vmatprep.subr.mxu0 0.0
    %3371 = vmatpush1.msra.mxu0 0.0
    %3372 = vmatprep.subr.mxu0 0.0
    %3373 = vmatpush1.msra.mxu0 0.0
    %3374 = vmatprep.subr.mxu0 0.0
    %3375 = vmatpush1.msra.mxu0 0.0
    %3376 = vmatprep.subr.mxu0 0.0
    %3377 = vmatpush1.msra.mxu0 0.0
    %3378 = vmatprep.subr.mxu0 0.0
    %3379 = vmatpush1.msra.mxu0 0.0
    %3380 = vmatprep.subr.mxu0 0.0
    %3381 = vmatpush1.msra.mxu0 0.0
    %3382 = vmatprep.subr.mxu0 0.0
    %3383 = vmatpush1.msra.mxu0 0.0
    %3384 = vmatprep.subr.mxu0 0.0
    %3385 = vmatpush1.msra.mxu0 0.0
    %3386 = vmatprep.subr.mxu0 0.0
    %3387 = vmatpush1.msra.mxu0 %v3249
    %3388 = vmatprep.subr.mxu0 0.0
    %3389 = vmatpush1.msra.mxu0 %v3248
    %3390 = vmatprep.subr.mxu0 0.0
    %3391 = vmatpush2.msra.mxu0 0.0
    %3392 = vmatprep.subr.mxu0 0.0
    %3393 = vmatpush2.msra.mxu0 0.0
    %3394 = vmatprep.subr.mxu0 0.0
    %3395 = vmatpush2.msra.mxu0 0.0
    %3396 = vmatprep.subr.mxu0 0.0
    %3397 = vmatpush2.msra.mxu0 0.0
    %3398 = vmatprep.subr.mxu0 0.0
    %3399 = vmatpush2.msra.mxu0 0.0
    %3400 = vmatprep.subr.mxu0 0.0
    %3401 = vmatpush2.msra.mxu0 0.0
    %3402 = vmatprep.subr.mxu0 0.0
    %3403 = vmatpush2.msra.mxu0 0.0
    %3404 = vmatprep.subr.mxu0 0.0
    %3405 = vmatpush2.msra.mxu0 0.0
    %3406 = vmatprep.subr.mxu0 0.0
    %3407 = vmatpush2.msra.mxu0 0.0
    %3408 = vmatprep.subr.mxu0 0.0
    %3409 = vmatpush2.msra.mxu0 0.0
    %3410 = vmatprep.subr.mxu0 0.0
    %3411 = vmatpush2.msra.mxu0 0.0
    %3412 = vmatprep.subr.mxu0 0.0
    %3413 = vmatpush2.msra.mxu0 0.0
    %3414 = vmatprep.subr.mxu0 0.0
    %3415 = vmatpush2.msra.mxu0 0.0
    %3416 = vmatprep.subr.mxu0 0.0
    %3417 = vmatpush2.msra.mxu0 0.0
    %3418 = vmatprep.subr.mxu0 0.0
    %3419 = vmatpush2.msra.mxu0 0.0
    %3420 = vmatprep.subr.mxu0 0.0
    %3421 = vmatpush2.msra.mxu0 0.0
    %3422 = vmatprep.mubr.f32.mxu0 0.0
    %3423 = vmatmul.mubr.f32.gmra.mxu0 %v3356
    %v3424 = vpop.f32.mrf.mxu0
    %v3425 = vadd.f32 0.0, %v3424
    %v3426 = vpop.f32.mrf.mxu0
    %3427 = vdwg.mxu0
    %v3428 = vadd.f32 %v3336, 0.0
    %v3429 = vadd.f32 %v3425, 0.0
    %s3430 = scalar_lea.vmem [#allocation7], 12
    %v3431 = vld [vmem:[%s3430] sm:$0x3]
    %v3434 = vrot.slane %v3429, 7
    %v3435 = vsel %vm405, %v3434, %v3428
    %v3437 = vadd.f32 %v3431, %v3435
    %v3438 = vld [vmem:[#allocation10] sm:$0xff]
    %v3439 = vld [vmem:[#allocation10 + $0x8] sm:$0xff]
    %v3440 = vld [vmem:[#allocation10 + $0x10] sm:$0xff]
    %v3441 = vld [vmem:[#allocation10 + $0x18] sm:$0xff]
    %3442 = vmatprep.subr.mxu0 0.0
    %3443 = vmatpush1.msra.mxu0 0.0
    %3444 = vmatprep.subr.mxu0 0.0
    %3445 = vmatpush1.msra.mxu0 0.0
    %3446 = vmatprep.subr.mxu0 0.0
    %3447 = vmatpush1.msra.mxu0 0.0
    %3448 = vmatprep.subr.mxu0 0.0
    %3449 = vmatpush1.msra.mxu0 0.0
    %3450 = vmatprep.subr.mxu0 0.0
    %3451 = vmatpush1.msra.mxu0 0.0
    %3452 = vmatprep.subr.mxu0 0.0
    %3453 = vmatpush1.msra.mxu0 0.0
    %3454 = vmatprep.subr.mxu0 0.0
    %3455 = vmatpush1.msra.mxu0 0.0
    %3456 = vmatprep.subr.mxu0 0.0
    %3457 = vmatpush1.msra.mxu0 0.0
    %3458 = vmatprep.subr.mxu0 0.0
    %3459 = vmatpush1.msra.mxu0 0.0
    %3460 = vmatprep.subr.mxu0 0.0
    %3461 = vmatpush1.msra.mxu0 0.0
    %3462 = vmatprep.subr.mxu0 0.0
    %3463 = vmatpush1.msra.mxu0 0.0
    %3464 = vmatprep.subr.mxu0 0.0
    %3465 = vmatpush1.msra.mxu0 0.0
    %3466 = vmatprep.subr.mxu0 0.0
    %3467 = vmatpush1.msra.mxu0 %v3441
    %3468 = vmatprep.subr.mxu0 0.0
    %3469 = vmatpush1.msra.mxu0 %v3440
    %3470 = vmatprep.subr.mxu0 0.0
    %3471 = vmatpush1.msra.mxu0 %v3439
    %3472 = vmatprep.subr.mxu0 0.0
    %3473 = vmatpush1.msra.mxu0 %v3438
    %3474 = vmatprep.subr.mxu0 0.0
    %3475 = vmatpush2.msra.mxu0 0.0
    %3476 = vmatprep.subr.mxu0 0.0
    %3477 = vmatpush2.msra.mxu0 0.0
    %3478 = vmatprep.subr.mxu0 0.0
    %3479 = vmatpush2.msra.mxu0 0.0
    %3480 = vmatprep.subr.mxu0 0.0
    %3481 = vmatpush2.msra.mxu0 0.0
    %3482 = vmatprep.subr.mxu0 0.0
    %3483 = vmatpush2.msra.mxu0 0.0
    %3484 = vmatprep.subr.mxu0 0.0
    %3485 = vmatpush2.msra.mxu0 0.0
    %3486 = vmatprep.subr.mxu0 0.0
    %3487 = vmatpush2.msra.mxu0 0.0
    %3488 = vmatprep.subr.mxu0 0.0
    %3489 = vmatpush2.msra.mxu0 0.0
    %3490 = vmatprep.subr.mxu0 0.0
    %3491 = vmatpush2.msra.mxu0 0.0
    %3492 = vmatprep.subr.mxu0 0.0
    %3493 = vmatpush2.msra.mxu0 0.0
    %3494 = vmatprep.subr.mxu0 0.0
    %3495 = vmatpush2.msra.mxu0 0.0
    %3496 = vmatprep.subr.mxu0 0.0
    %3497 = vmatpush2.msra.mxu0 0.0
    %3498 = vmatprep.subr.mxu0 0.0
    %3499 = vmatpush2.msra.mxu0 0.0
    %3500 = vmatprep.subr.mxu0 0.0
    %3501 = vmatpush2.msra.mxu0 0.0
    %3502 = vmatprep.subr.mxu0 0.0
    %3503 = vmatpush2.msra.mxu0 0.0
    %3504 = vmatprep.subr.mxu0 0.0
    %3505 = vmatpush2.msra.mxu0 0.0
    %3506 = vmatprep.mubr.f32.mxu0 0.0
    %3507 = vmatmul.mubr.f32.gmra.mxu0 %v3001
    %v3508 = vpop.f32.mrf.mxu0
    %v3509 = vadd.f32 0.0, %v3508
    %v3510 = vpop.f32.mrf.mxu0
    %3511 = vdwg.mxu0
    %v3512 = vadd.f32 %v3437, %v3509
    %v3513 = vld [vmem:[%s7] sm:$0x1]
    %v3515 = vlaneseq
    %v3516 = vshrl.u32 %v3515, 7
    %v3517 = vsub.s32 0, %v3516
    %v3518 = vrot.slane %v3513, %v3517
    %v3520 = vadd.f32 %v3512, %v3518
    %v3521 = vxor.u32 %v3520, 2147483648
    %v3522 = vmul.f32 %v3521, 1.442695
    %v3523 = vpow.pop %v3522
    %v3524 = vadd.f32 %v3523, 1.0
    %v3525 = vrcp.pop %v3524
    %v3526 = vmul.f32 1.0, %v3525
    %v3527 = vtanh.pop %v3520
    %v3528 = vmul.f32 %v3526, %v2987
    %3530 = vrot.lane.b32.xlu0 %v3527, 64
    %v3531 = vpop.permute.xlu0 %3530
    %v3533 = vmul.f32 %v3526, %v3531
    %3535 = vrot.lane.b32.xlu0 %v3533, 32
    %v3536 = vpop.permute.xlu0 %3535
    %v3538 = vadd.f32 %v3528, %v3536
    %v3539 = vtanh.pop %v3538
    %3541 = vrot.lane.b32.xlu0 %v3539, 64
    %v3542 = vpop.permute.xlu0 %3541
    %v3544 = vmul.f32 %v3526, %v3542
    %v3545 = vld [vmem:[#allocation8] sm:$0xff]
    %v3546 = vld [vmem:[#allocation8 + $0x8] sm:$0xff]
    %v3547 = vld [vmem:[#allocation8 + $0x10] sm:$0xff]
    %v3548 = vld [vmem:[#allocation8 + $0x18] sm:$0xff]
    %3550 = vrot.lane.b32.xlu0 %v3544, 32
    %v3551 = vpop.permute.xlu0 %3550
    %v3552 = vsel %vm125, %v3551, 0
    %3554 = vmatprep.subr.mxu0 0.0
    %3555 = vmatpush1.msra.mxu0 0.0
    %3556 = vmatprep.subr.mxu0 0.0
    %3557 = vmatpush1.msra.mxu0 0.0
    %3558 = vmatprep.subr.mxu0 0.0
    %3559 = vmatpush1.msra.mxu0 0.0
    %3560 = vmatprep.subr.mxu0 0.0
    %3561 = vmatpush1.msra.mxu0 0.0
    %3562 = vmatprep.subr.mxu0 0.0
    %3563 = vmatpush1.msra.mxu0 0.0
    %3564 = vmatprep.subr.mxu0 0.0
    %3565 = vmatpush1.msra.mxu0 0.0
    %3566 = vmatprep.subr.mxu0 0.0
    %3567 = vmatpush1.msra.mxu0 0.0
    %3568 = vmatprep.subr.mxu0 0.0
    %3569 = vmatpush1.msra.mxu0 0.0
    %3570 = vmatprep.subr.mxu0 0.0
    %3571 = vmatpush1.msra.mxu0 0.0
    %3572 = vmatprep.subr.mxu0 0.0
    %3573 = vmatpush1.msra.mxu0 0.0
    %3574 = vmatprep.subr.mxu0 0.0
    %3575 = vmatpush1.msra.mxu0 0.0
    %3576 = vmatprep.subr.mxu0 0.0
    %3577 = vmatpush1.msra.mxu0 0.0
    %3578 = vmatprep.subr.mxu0 0.0
    %3579 = vmatpush1.msra.mxu0 %v3548
    %3580 = vmatprep.subr.mxu0 0.0
    %3581 = vmatpush1.msra.mxu0 %v3547
    %3582 = vmatprep.subr.mxu0 0.0
    %3583 = vmatpush1.msra.mxu0 %v3546
    %3584 = vmatprep.subr.mxu0 0.0
    %3585 = vmatpush1.msra.mxu0 %v3545
    %3586 = vmatprep.subr.mxu0 0.0
    %3587 = vmatpush2.msra.mxu0 0.0
    %3588 = vmatprep.subr.mxu0 0.0
    %3589 = vmatpush2.msra.mxu0 0.0
    %3590 = vmatprep.subr.mxu0 0.0
    %3591 = vmatpush2.msra.mxu0 0.0
    %3592 = vmatprep.subr.mxu0 0.0
    %3593 = vmatpush2.msra.mxu0 0.0
    %3594 = vmatprep.subr.mxu0 0.0
    %3595 = vmatpush2.msra.mxu0 0.0
    %3596 = vmatprep.subr.mxu0 0.0
    %3597 = vmatpush2.msra.mxu0 0.0
    %3598 = vmatprep.subr.mxu0 0.0
    %3599 = vmatpush2.msra.mxu0 0.0
    %3600 = vmatprep.subr.mxu0 0.0
    %3601 = vmatpush2.msra.mxu0 0.0
    %3602 = vmatprep.subr.mxu0 0.0
    %3603 = vmatpush2.msra.mxu0 0.0
    %3604 = vmatprep.subr.mxu0 0.0
    %3605 = vmatpush2.msra.mxu0 0.0
    %3606 = vmatprep.subr.mxu0 0.0
    %3607 = vmatpush2.msra.mxu0 0.0
    %3608 = vmatprep.subr.mxu0 0.0
    %3609 = vmatpush2.msra.mxu0 0.0
    %3610 = vmatprep.subr.mxu0 0.0
    %3611 = vmatpush2.msra.mxu0 0.0
    %3612 = vmatprep.subr.mxu0 0.0
    %3613 = vmatpush2.msra.mxu0 0.0
    %3614 = vmatprep.subr.mxu0 0.0
    %3615 = vmatpush2.msra.mxu0 0.0
    %3616 = vmatprep.subr.mxu0 0.0
    %3617 = vmatpush2.msra.mxu0 0.0
    %3618 = vmatprep.mubr.f32.mxu0 0.0
    %3619 = vmatmul.mubr.f32.gmra.mxu0 %v3552
    %v3620 = vpop.f32.mrf.mxu0
    %v3621 = vadd.f32 0.0, %v3620
    %v3622 = vpop.f32.mrf.mxu0
    %3623 = vdwg.mxu0
    %v3624 = vld [vmem:[#allocation2] sm:$0xff]
    %v3625 = vld [vmem:[#allocation2 + $0x8] sm:$0xff]
    %v3626 = vld [vmem:[#allocation2 + $0x10] sm:$0xff]
    %v3627 = vld [vmem:[#allocation2 + $0x18] sm:$0xff]
    %v3630 = vunpack.c.l.s4 1966171168
    %v3631 = vunpack.c.0.s8 %v3630
    %v3632 = vlaneseq
    %v3633 = vshrl.u32 %v3632, 7
    %v3634 = vsub.s32 %v3631, %v3633
    %v3635 = vrot.slane %v3621, %v3634
    %v3636 = vcombine.high %v3635, %v3635
    %v3638 = vunpack.c.l.s4 1966171168
    %v3639 = vunpack.c.0.s8 %v3638
    %v3640 = vlaneseq
    %v3641 = vshrl.u32 %v3640, 7
    %v3642 = vsub.s32 %v3639, %v3641
    %v3643 = vrot.slane %v3635, %v3642
    %v3645 = vunpack.c.l.s4 1966171168
    %v3646 = vunpack.c.0.s8 %v3645
    %v3647 = vlaneseq
    %v3648 = vshrl.u32 %v3647, 7
    %v3649 = vsub.s32 %v3646, %v3648
    %v3650 = vrot.slane %v3636, %v3649
    %v3651 = vlaneseq
    %v3652 = vshrl.u32 %v3651, 7
    %v3653 = vsub.s32 0, %v3652
    %v3654 = vrot.slane %v3643, %v3653
    %v3655 = vlaneseq
    %v3656 = vshrl.u32 %v3655, 7
    %v3657 = vsub.s32 0, %v3656
    %v3658 = vrot.slane %v3650, %v3657
    %v3661 = vadd.f32 %v3624, %v3654
    %v3662 = vadd.f32 %v3625, %v3654
    %v3663 = vadd.f32 %v3626, %v3658
    %v3664 = vadd.f32 %v3627, %v3658
    %v3665 = vtanh.pop %v3661
    %v3666 = vtanh.pop %v3662
    %v3667 = vtanh.pop %v3663
    %v3668 = vtanh.pop %v3664
    %v3669 = vld [vmem:[%s5] sm:$0x1]
    %v3671 = vlaneseq
    %v3672 = vshrl.u32 %v3671, 7
    %v3673 = vsub.s32 0, %v3672
    %v3674 = vrot.slane %v3669, %v3673
    %v3676 = vmul.f32 %v3665, %v3674
    %v3677 = vmul.f32 %v3666, %v3674
    %v3678 = vmul.f32 %v3667, %v3674
    %v3679 = vmul.f32 %v3668, %v3674
    %v3680 = vsel %vm125, %v3676, 0.0
    %3681 = vadd.xlane.f32.xlu0 %v3680
    %v3682 = vpop.xlane.xlu0 %3681
    %v3683 = vsel %vm125, %v3677, 0.0
    %3684 = vadd.xlane.f32.xlu0 %v3683
    %v3685 = vpop.xlane.xlu0 %3684
    %v3686 = vsel %vm125, %v3678, 0.0
    %3687 = vadd.xlane.f32.xlu0 %v3686
    %v3688 = vpop.xlane.xlu0 %3687
    %v3689 = vsel %vm125, %v3679, 0.0
    %3690 = vadd.xlane.f32.xlu0 %v3689
    %v3691 = vpop.xlane.xlu0 %3690
    %v3696 = vlaneseq
    %v3697 = vshrl.u32 %v3696, 7
    %v3698 = vsub.s32 %v384, %v3697
    %v3699 = vrot.slane %v3682, %v3698
    %v3700 = vlaneseq
    %v3701 = vshrl.u32 %v3700, 7
    %v3702 = vsub.s32 %v389, %v3701
    %v3703 = vrot.slane %v3685, %v3702
    %v3704 = vsel %vm394, %v3703, %v3699
    %v3705 = vlaneseq
    %v3706 = vshrl.u32 %v3705, 7
    %v3707 = vsub.s32 %v384, %v3706
    %v3708 = vrot.slane %v3688, %v3707
    %v3709 = vlaneseq
    %v3710 = vshrl.u32 %v3709, 7
    %v3711 = vsub.s32 %v389, %v3710
    %v3712 = vrot.slane %v3691, %v3711
    %v3713 = vsel %vm394, %v3712, %v3708
    %v3714 = vsel %vm405, %v3713, %v3704
    %v3716 = vsel %vm408, %v3714, -inf
    %3717 = vmax.xlane.f32.xlu0 %v3716
    %v3718 = vpop.xlane.xlu0 %3717
    %v3720 = vlaneseq
    %v3721 = vshrl.u32 %v3720, 7
    %v3722 = vsub.s32 0, %v3721
    %v3723 = vrot.slane %v3718, %v3722
    %v3724 = vlaneseq
    %v3725 = vshrl.u32 %v3724, 7
    %v3726 = vsub.s32 1, %v3725
    %v3727 = vrot.slane %v3718, %v3726
    %v3730 = vsub.f32 %v3682, %v3723
    %v3731 = vsub.f32 %v3685, %v3723
    %v3732 = vsub.f32 %v3688, %v3727
    %v3733 = vsub.f32 %v3691, %v3727
    %v3734 = vmul.f32 %v3730, 1.442695
    %v3735 = vpow.pop %v3734
    %v3736 = vmul.f32 %v3731, 1.442695
    %v3737 = vpow.pop %v3736
    %v3738 = vmul.f32 %v3732, 1.442695
    %v3739 = vpow.pop %v3738
    %v3740 = vmul.f32 %v3733, 1.442695
    %v3741 = vpow.pop %v3740
    %3746 = vset.pattern.permute.xlu0 0
    %3747 = vperm.xlu0 %3746, %v3735
    %v3748 = vpop.permute.xlu0 %3747
    %3749 = vset.pattern.permute.xlu0 0
    %3750 = vperm.xlu0 %3749, %v3737
    %v3751 = vpop.permute.xlu0 %3750
    %3752 = vset.pattern.permute.xlu0 0
    %3753 = vperm.xlu0 %3752, %v3739
    %v3754 = vpop.permute.xlu0 %3753
    %3755 = vset.pattern.permute.xlu0 0
    %3756 = vperm.xlu0 %3755, %v3741
    %v3757 = vpop.permute.xlu0 %3756
    %v3758 = vlaneseq
    %v3759 = vshrl.u32 %v3758, 7
    %v3760 = vsub.s32 %v384, %v3759
    %v3761 = vrot.slane %v3748, %v3760
    %v3762 = vlaneseq
    %v3763 = vshrl.u32 %v3762, 7
    %v3764 = vsub.s32 %v389, %v3763
    %v3765 = vrot.slane %v3751, %v3764
    %v3766 = vsel %vm394, %v3765, %v3761
    %v3767 = vlaneseq
    %v3768 = vshrl.u32 %v3767, 7
    %v3769 = vsub.s32 %v384, %v3768
    %v3770 = vrot.slane %v3754, %v3769
    %v3771 = vlaneseq
    %v3772 = vshrl.u32 %v3771, 7
    %v3773 = vsub.s32 %v389, %v3772
    %v3774 = vrot.slane %v3757, %v3773
    %v3775 = vsel %vm394, %v3774, %v3770
    %v3776 = vsel %vm405, %v3775, %v3766
    %v3778 = vsel %vm408, %v3776, 0.0
    %3779 = vadd.xlane.f32.xlu0 %v3778
    %v3780 = vpop.xlane.xlu0 %3779
    %v3781 = vrcp.pop %v3780
    %v3783 = vlaneseq
    %v3784 = vshrl.u32 %v3783, 7
    %v3785 = vsub.s32 0, %v3784
    %v3786 = vrot.slane %v3781, %v3785
    %v3787 = vlaneseq
    %v3788 = vshrl.u32 %v3787, 7
    %v3789 = vsub.s32 1, %v3788
    %v3790 = vrot.slane %v3781, %v3789
    %v3793 = vmul.f32 %v3735, %v3786
    %v3794 = vmul.f32 %v3737, %v3786
    %v3795 = vmul.f32 %v3739, %v3790
    %v3796 = vmul.f32 %v3741, %v3790
    %v3797 = vld [vmem:[#allocation5] sm:$0xff]
    %v3798 = vld [vmem:[#allocation5 + $0x8] sm:$0xff]
    %v3799 = vld [vmem:[#allocation5 + $0x10] sm:$0xff]
    %v3800 = vld [vmem:[#allocation5 + $0x18] sm:$0xff]
    %3803 = vset.pattern.permute.xlu0 0
    %3804 = vperm.xlu0 %3803, %v3793
    %v3805 = vpop.permute.xlu0 %3804
    %3806 = vset.pattern.permute.xlu0 0
    %3807 = vperm.xlu0 %3806, %v3794
    %v3808 = vpop.permute.xlu0 %3807
    %v3809 = vlaneseq
    %v3810 = vshrl.u32 %v3809, 7
    %v3811 = vsub.s32 %v384, %v3810
    %v3812 = vrot.slane %v3805, %v3811
    %v3813 = vlaneseq
    %v3814 = vshrl.u32 %v3813, 7
    %v3815 = vsub.s32 %v389, %v3814
    %v3816 = vrot.slane %v3808, %v3815
    %v3817 = vsel %vm394, %v3816, %v3812
    %v3818 = vsel %vm511, %v3817, 0
    %3820 = vmatprep.subr.mxu0 0.0
    %3821 = vmatpush1.msra.mxu0 0.0
    %3822 = vmatprep.subr.mxu0 0.0
    %3823 = vmatpush1.msra.mxu0 0.0
    %3824 = vmatprep.subr.mxu0 0.0
    %3825 = vmatpush1.msra.mxu0 0.0
    %3826 = vmatprep.subr.mxu0 0.0
    %3827 = vmatpush1.msra.mxu0 0.0
    %3828 = vmatprep.subr.mxu0 0.0
    %3829 = vmatpush1.msra.mxu0 0.0
    %3830 = vmatprep.subr.mxu0 0.0
    %3831 = vmatpush1.msra.mxu0 0.0
    %3832 = vmatprep.subr.mxu0 0.0
    %3833 = vmatpush1.msra.mxu0 0.0
    %3834 = vmatprep.subr.mxu0 0.0
    %3835 = vmatpush1.msra.mxu0 0.0
    %3836 = vmatprep.subr.mxu0 0.0
    %3837 = vmatpush1.msra.mxu0 0.0
    %3838 = vmatprep.subr.mxu0 0.0
    %3839 = vmatpush1.msra.mxu0 0.0
    %3840 = vmatprep.subr.mxu0 0.0
    %3841 = vmatpush1.msra.mxu0 0.0
    %3842 = vmatprep.subr.mxu0 0.0
    %3843 = vmatpush1.msra.mxu0 0.0
    %3844 = vmatprep.subr.mxu0 0.0
    %3845 = vmatpush1.msra.mxu0 0.0
    %3846 = vmatprep.subr.mxu0 0.0
    %3847 = vmatpush1.msra.mxu0 0.0
    %3848 = vmatprep.subr.mxu0 0.0
    %3849 = vmatpush1.msra.mxu0 %v3798
    %3850 = vmatprep.subr.mxu0 0.0
    %3851 = vmatpush1.msra.mxu0 %v3797
    %3852 = vmatprep.subr.mxu0 0.0
    %3853 = vmatpush2.msra.mxu0 0.0
    %3854 = vmatprep.subr.mxu0 0.0
    %3855 = vmatpush2.msra.mxu0 0.0
    %3856 = vmatprep.subr.mxu0 0.0
    %3857 = vmatpush2.msra.mxu0 0.0
    %3858 = vmatprep.subr.mxu0 0.0
    %3859 = vmatpush2.msra.mxu0 0.0
    %3860 = vmatprep.subr.mxu0 0.0
    %3861 = vmatpush2.msra.mxu0 0.0
    %3862 = vmatprep.subr.mxu0 0.0
    %3863 = vmatpush2.msra.mxu0 0.0
    %3864 = vmatprep.subr.mxu0 0.0
    %3865 = vmatpush2.msra.mxu0 0.0
    %3866 = vmatprep.subr.mxu0 0.0
    %3867 = vmatpush2.msra.mxu0 0.0
    %3868 = vmatprep.subr.mxu0 0.0
    %3869 = vmatpush2.msra.mxu0 0.0
    %3870 = vmatprep.subr.mxu0 0.0
    %3871 = vmatpush2.msra.mxu0 0.0
    %3872 = vmatprep.subr.mxu0 0.0
    %3873 = vmatpush2.msra.mxu0 0.0
    %3874 = vmatprep.subr.mxu0 0.0
    %3875 = vmatpush2.msra.mxu0 0.0
    %3876 = vmatprep.subr.mxu0 0.0
    %3877 = vmatpush2.msra.mxu0 0.0
    %3878 = vmatprep.subr.mxu0 0.0
    %3879 = vmatpush2.msra.mxu0 0.0
    %3880 = vmatprep.subr.mxu0 0.0
    %3881 = vmatpush2.msra.mxu0 0.0
    %3882 = vmatprep.subr.mxu0 0.0
    %3883 = vmatpush2.msra.mxu0 0.0
    %3884 = vmatprep.mubr.f32.mxu0 0.0
    %3885 = vmatmul.mubr.f32.gmra.mxu0 %v3818
    %v3886 = vpop.f32.mrf.mxu0
    %v3887 = vadd.f32 0.0, %v3886
    %v3888 = vpop.f32.mrf.mxu0
    %3889 = vdwg.mxu0
    %3892 = vset.pattern.permute.xlu0 0
    %3893 = vperm.xlu0 %3892, %v3795
    %v3894 = vpop.permute.xlu0 %3893
    %3895 = vset.pattern.permute.xlu0 0
    %3896 = vperm.xlu0 %3895, %v3796
    %v3897 = vpop.permute.xlu0 %3896
    %v3898 = vlaneseq
    %v3899 = vshrl.u32 %v3898, 7
    %v3900 = vsub.s32 %v384, %v3899
    %v3901 = vrot.slane %v3894, %v3900
    %v3902 = vlaneseq
    %v3903 = vshrl.u32 %v3902, 7
    %v3904 = vsub.s32 %v389, %v3903
    %v3905 = vrot.slane %v3897, %v3904
    %v3906 = vsel %vm394, %v3905, %v3901
    %v3907 = vsel %vm511, %v3906, 0
    %3909 = vmatprep.subr.mxu0 0.0
    %3910 = vmatpush1.msra.mxu0 0.0
    %3911 = vmatprep.subr.mxu0 0.0
    %3912 = vmatpush1.msra.mxu0 0.0
    %3913 = vmatprep.subr.mxu0 0.0
    %3914 = vmatpush1.msra.mxu0 0.0
    %3915 = vmatprep.subr.mxu0 0.0
    %3916 = vmatpush1.msra.mxu0 0.0
    %3917 = vmatprep.subr.mxu0 0.0
    %3918 = vmatpush1.msra.mxu0 0.0
    %3919 = vmatprep.subr.mxu0 0.0
    %3920 = vmatpush1.msra.mxu0 0.0
    %3921 = vmatprep.subr.mxu0 0.0
    %3922 = vmatpush1.msra.mxu0 0.0
    %3923 = vmatprep.subr.mxu0 0.0
    %3924 = vmatpush1.msra.mxu0 0.0
    %3925 = vmatprep.subr.mxu0 0.0
    %3926 = vmatpush1.msra.mxu0 0.0
    %3927 = vmatprep.subr.mxu0 0.0
    %3928 = vmatpush1.msra.mxu0 0.0
    %3929 = vmatprep.subr.mxu0 0.0
    %3930 = vmatpush1.msra.mxu0 0.0
    %3931 = vmatprep.subr.mxu0 0.0
    %3932 = vmatpush1.msra.mxu0 0.0
    %3933 = vmatprep.subr.mxu0 0.0
    %3934 = vmatpush1.msra.mxu0 0.0
    %3935 = vmatprep.subr.mxu0 0.0
    %3936 = vmatpush1.msra.mxu0 0.0
    %3937 = vmatprep.subr.mxu0 0.0
    %3938 = vmatpush1.msra.mxu0 %v3800
    %3939 = vmatprep.subr.mxu0 0.0
    %3940 = vmatpush1.msra.mxu0 %v3799
    %3941 = vmatprep.subr.mxu0 0.0
    %3942 = vmatpush2.msra.mxu0 0.0
    %3943 = vmatprep.subr.mxu0 0.0
    %3944 = vmatpush2.msra.mxu0 0.0
    %3945 = vmatprep.subr.mxu0 0.0
    %3946 = vmatpush2.msra.mxu0 0.0
    %3947 = vmatprep.subr.mxu0 0.0
    %3948 = vmatpush2.msra.mxu0 0.0
    %3949 = vmatprep.subr.mxu0 0.0
    %3950 = vmatpush2.msra.mxu0 0.0
    %3951 = vmatprep.subr.mxu0 0.0
    %3952 = vmatpush2.msra.mxu0 0.0
    %3953 = vmatprep.subr.mxu0 0.0
    %3954 = vmatpush2.msra.mxu0 0.0
    %3955 = vmatprep.subr.mxu0 0.0
    %3956 = vmatpush2.msra.mxu0 0.0
    %3957 = vmatprep.subr.mxu0 0.0
    %3958 = vmatpush2.msra.mxu0 0.0
    %3959 = vmatprep.subr.mxu0 0.0
    %3960 = vmatpush2.msra.mxu0 0.0
    %3961 = vmatprep.subr.mxu0 0.0
    %3962 = vmatpush2.msra.mxu0 0.0
    %3963 = vmatprep.subr.mxu0 0.0
    %3964 = vmatpush2.msra.mxu0 0.0
    %3965 = vmatprep.subr.mxu0 0.0
    %3966 = vmatpush2.msra.mxu0 0.0
    %3967 = vmatprep.subr.mxu0 0.0
    %3968 = vmatpush2.msra.mxu0 0.0
    %3969 = vmatprep.subr.mxu0 0.0
    %3970 = vmatpush2.msra.mxu0 0.0
    %3971 = vmatprep.subr.mxu0 0.0
    %3972 = vmatpush2.msra.mxu0 0.0
    %3973 = vmatprep.mubr.f32.mxu0 0.0
    %3974 = vmatmul.mubr.f32.gmra.mxu0 %v3907
    %v3975 = vpop.f32.mrf.mxu0
    %v3976 = vadd.f32 0.0, %v3975
    %v3977 = vpop.f32.mrf.mxu0
    %3978 = vdwg.mxu0
    %v3979 = vadd.f32 %v3887, 0.0
    %v3980 = vadd.f32 %v3976, 0.0
    %s3981 = scalar_lea.vmem [#allocation7], 14
    %v3982 = vld [vmem:[%s3981] sm:$0x3]
    %v3985 = vrot.slane %v3980, 7
    %v3986 = vsel %vm405, %v3985, %v3979
    %v3988 = vadd.f32 %v3982, %v3986
    %v3989 = vld [vmem:[#allocation10] sm:$0xff]
    %v3990 = vld [vmem:[#allocation10 + $0x8] sm:$0xff]
    %v3991 = vld [vmem:[#allocation10 + $0x10] sm:$0xff]
    %v3992 = vld [vmem:[#allocation10 + $0x18] sm:$0xff]
    %3993 = vmatprep.subr.mxu0 0.0
    %3994 = vmatpush1.msra.mxu0 0.0
    %3995 = vmatprep.subr.mxu0 0.0
    %3996 = vmatpush1.msra.mxu0 0.0
    %3997 = vmatprep.subr.mxu0 0.0
    %3998 = vmatpush1.msra.mxu0 0.0
    %3999 = vmatprep.subr.mxu0 0.0
    %4000 = vmatpush1.msra.mxu0 0.0
    %4001 = vmatprep.subr.mxu0 0.0
    %4002 = vmatpush1.msra.mxu0 0.0
    %4003 = vmatprep.subr.mxu0 0.0
    %4004 = vmatpush1.msra.mxu0 0.0
    %4005 = vmatprep.subr.mxu0 0.0
    %4006 = vmatpush1.msra.mxu0 0.0
    %4007 = vmatprep.subr.mxu0 0.0
    %4008 = vmatpush1.msra.mxu0 0.0
    %4009 = vmatprep.subr.mxu0 0.0
    %4010 = vmatpush1.msra.mxu0 0.0
    %4011 = vmatprep.subr.mxu0 0.0
    %4012 = vmatpush1.msra.mxu0 0.0
    %4013 = vmatprep.subr.mxu0 0.0
    %4014 = vmatpush1.msra.mxu0 0.0
    %4015 = vmatprep.subr.mxu0 0.0
    %4016 = vmatpush1.msra.mxu0 0.0
    %4017 = vmatprep.subr.mxu0 0.0
    %4018 = vmatpush1.msra.mxu0 %v3992
    %4019 = vmatprep.subr.mxu0 0.0
    %4020 = vmatpush1.msra.mxu0 %v3991
    %4021 = vmatprep.subr.mxu0 0.0
    %4022 = vmatpush1.msra.mxu0 %v3990
    %4023 = vmatprep.subr.mxu0 0.0
    %4024 = vmatpush1.msra.mxu0 %v3989
    %4025 = vmatprep.subr.mxu0 0.0
    %4026 = vmatpush2.msra.mxu0 0.0
    %4027 = vmatprep.subr.mxu0 0.0
    %4028 = vmatpush2.msra.mxu0 0.0
    %4029 = vmatprep.subr.mxu0 0.0
    %4030 = vmatpush2.msra.mxu0 0.0
    %4031 = vmatprep.subr.mxu0 0.0
    %4032 = vmatpush2.msra.mxu0 0.0
    %4033 = vmatprep.subr.mxu0 0.0
    %4034 = vmatpush2.msra.mxu0 0.0
    %4035 = vmatprep.subr.mxu0 0.0
    %4036 = vmatpush2.msra.mxu0 0.0
    %4037 = vmatprep.subr.mxu0 0.0
    %4038 = vmatpush2.msra.mxu0 0.0
    %4039 = vmatprep.subr.mxu0 0.0
    %4040 = vmatpush2.msra.mxu0 0.0
    %4041 = vmatprep.subr.mxu0 0.0
    %4042 = vmatpush2.msra.mxu0 0.0
    %4043 = vmatprep.subr.mxu0 0.0
    %4044 = vmatpush2.msra.mxu0 0.0
    %4045 = vmatprep.subr.mxu0 0.0
    %4046 = vmatpush2.msra.mxu0 0.0
    %4047 = vmatprep.subr.mxu0 0.0
    %4048 = vmatpush2.msra.mxu0 0.0
    %4049 = vmatprep.subr.mxu0 0.0
    %4050 = vmatpush2.msra.mxu0 0.0
    %4051 = vmatprep.subr.mxu0 0.0
    %4052 = vmatpush2.msra.mxu0 0.0
    %4053 = vmatprep.subr.mxu0 0.0
    %4054 = vmatpush2.msra.mxu0 0.0
    %4055 = vmatprep.subr.mxu0 0.0
    %4056 = vmatpush2.msra.mxu0 0.0
    %4057 = vmatprep.mubr.f32.mxu0 0.0
    %4058 = vmatmul.mubr.f32.gmra.mxu0 %v3552
    %v4059 = vpop.f32.mrf.mxu0
    %v4060 = vadd.f32 0.0, %v4059
    %v4061 = vpop.f32.mrf.mxu0
    %4062 = vdwg.mxu0
    %v4063 = vadd.f32 %v3988, %v4060
    %v4064 = vld [vmem:[%s7] sm:$0x1]
    %v4066 = vlaneseq
    %v4067 = vshrl.u32 %v4066, 7
    %v4068 = vsub.s32 0, %v4067
    %v4069 = vrot.slane %v4064, %v4068
    %v4071 = vadd.f32 %v4063, %v4069
    %v4072 = vxor.u32 %v4071, 2147483648
    %v4073 = vmul.f32 %v4072, 1.442695
    %v4074 = vpow.pop %v4073
    %v4075 = vadd.f32 %v4074, 1.0
    %v4076 = vrcp.pop %v4075
    %v4077 = vmul.f32 1.0, %v4076
    %v4078 = vtanh.pop %v4071
    %v4079 = vmul.f32 %v4077, %v3538
    %4081 = vrot.lane.b32.xlu0 %v4078, 64
    %v4082 = vpop.permute.xlu0 %4081
    %v4084 = vmul.f32 %v4077, %v4082
    %4086 = vrot.lane.b32.xlu0 %v4084, 32
    %v4087 = vpop.permute.xlu0 %4086
    %v4089 = vadd.f32 %v4079, %v4087
    %v4090 = vtanh.pop %v4089
    %4092 = vrot.lane.b32.xlu0 %v4090, 64
    %v4093 = vpop.permute.xlu0 %4092
    %v4095 = vmul.f32 %v4077, %v4093
    %v4096 = vrot.slane %v789, 6
    %v4098 = vrot.slane %v1340, 4
    %v4100 = vrot.slane %v1891, 2
    %v4102 = vrot.slane %v2993, 6
    %v4104 = vrot.slane %v3544, 4
    %v4107 = vrot.slane %v4095, 2
    %vm4109 = vcmask 1041408
    %v4110 = vsel %vm4109, %v231, %v4096
    %vm4111 = vcmask 1043456
    %v4112 = vsel %vm4111, %v4110, %v4098
    %vm4113 = vcmask 1045504
    %v4114 = vsel %vm4113, %v4112, %v4100
    %v4115 = vsel %vm4109, %v2442, %v4102
    %v4116 = vsel %vm4111, %v4115, %v4104
    %v4117 = vsel %vm4113, %v4116, %v4107
    %v4118 = vld [vmem:[#allocation11] sm:$0xff]
    %v4119 = vld [vmem:[#allocation11 + $0x8] sm:$0xff]
    %v4120 = vld [vmem:[#allocation11 + $0x10] sm:$0xff]
    %v4121 = vld [vmem:[#allocation11 + $0x18] sm:$0xff]
    %v4122 = vld [vmem:[%s9] sm:$0x1]
    %v4124 = vlaneseq
    %v4125 = vshrl.u32 %v4124, 7
    %v4126 = vsub.s32 0, %v4125
    %v4127 = vrot.slane %v4122, %v4126
    %4131 = vrot.lane.b32.xlu0 %v4114, 32
    %v4132 = vpop.permute.xlu0 %4131
    %4133 = vrot.lane.b32.xlu0 %v4117, 32
    %v4134 = vpop.permute.xlu0 %4133
    %v4135 = vsel %vm125, %v4132, 0
    %v4137 = vsel %vm125, %v4134, 0
    %4139 = vmatprep.subr.mxu0 0.0
    %4140 = vmatpush1.msra.mxu0 0.0
    %4141 = vmatprep.subr.mxu0 0.0
    %4142 = vmatpush1.msra.mxu0 0.0
    %4143 = vmatprep.subr.mxu0 0.0
    %4144 = vmatpush1.msra.mxu0 0.0
    %4145 = vmatprep.subr.mxu0 0.0
    %4146 = vmatpush1.msra.mxu0 0.0
    %4147 = vmatprep.subr.mxu0 0.0
    %4148 = vmatpush1.msra.mxu0 0.0
    %4149 = vmatprep.subr.mxu0 0.0
    %4150 = vmatpush1.msra.mxu0 0.0
    %4151 = vmatprep.subr.mxu0 0.0
    %4152 = vmatpush1.msra.mxu0 0.0
    %4153 = vmatprep.subr.mxu0 0.0
    %4154 = vmatpush1.msra.mxu0 0.0
    %4155 = vmatprep.subr.mxu0 0.0
    %4156 = vmatpush1.msra.mxu0 0.0
    %4157 = vmatprep.subr.mxu0 0.0
    %4158 = vmatpush1.msra.mxu0 0.0
    %4159 = vmatprep.subr.mxu0 0.0
    %4160 = vmatpush1.msra.mxu0 0.0
    %4161 = vmatprep.subr.mxu0 0.0
    %4162 = vmatpush1.msra.mxu0 0.0
    %4163 = vmatprep.subr.mxu0 0.0
    %4164 = vmatpush1.msra.mxu0 %v4121
    %4165 = vmatprep.subr.mxu0 0.0
    %4166 = vmatpush1.msra.mxu0 %v4120
    %4167 = vmatprep.subr.mxu0 0.0
    %4168 = vmatpush1.msra.mxu0 %v4119
    %4169 = vmatprep.subr.mxu0 0.0
    %4170 = vmatpush1.msra.mxu0 %v4118
    %4171 = vmatprep.subr.mxu0 0.0
    %4172 = vmatpush2.msra.mxu0 0.0
    %4173 = vmatprep.subr.mxu0 0.0
    %4174 = vmatpush2.msra.mxu0 0.0
    %4175 = vmatprep.subr.mxu0 0.0
    %4176 = vmatpush2.msra.mxu0 0.0
    %4177 = vmatprep.subr.mxu0 0.0
    %4178 = vmatpush2.msra.mxu0 0.0
    %4179 = vmatprep.subr.mxu0 0.0
    %4180 = vmatpush2.msra.mxu0 0.0
    %4181 = vmatprep.subr.mxu0 0.0
    %4182 = vmatpush2.msra.mxu0 0.0
    %4183 = vmatprep.subr.mxu0 0.0
    %4184 = vmatpush2.msra.mxu0 0.0
    %4185 = vmatprep.subr.mxu0 0.0
    %4186 = vmatpush2.msra.mxu0 0.0
    %4187 = vmatprep.subr.mxu0 0.0
    %4188 = vmatpush2.msra.mxu0 0.0
    %4189 = vmatprep.subr.mxu0 0.0
    %4190 = vmatpush2.msra.mxu0 0.0
    %4191 = vmatprep.subr.mxu0 0.0
    %4192 = vmatpush2.msra.mxu0 0.0
    %4193 = vmatprep.subr.mxu0 0.0
    %4194 = vmatpush2.msra.mxu0 0.0
    %4195 = vmatprep.subr.mxu0 0.0
    %4196 = vmatpush2.msra.mxu0 0.0
    %4197 = vmatprep.subr.mxu0 0.0
    %4198 = vmatpush2.msra.mxu0 0.0
    %4199 = vmatprep.subr.mxu0 0.0
    %4200 = vmatpush2.msra.mxu0 0.0
    %4201 = vmatprep.subr.mxu0 0.0
    %4202 = vmatpush2.msra.mxu0 0.0
    %4203 = vmatprep.mubr.f32.mxu0 0.0
    %4204 = vmatmul.mubr.f32.gmra.mxu0 %v4135
    %v4205 = vpop.f32.mrf.mxu0
    %v4206 = vadd.f32 %v4127, %v4205
    %v4207 = vpop.f32.mrf.mxu0
    %4208 = vmatprep.mubr.f32.mxu0 0.0
    %4209 = vmatmul.mubr.f32.gmra.mxu0 %v4137
    %v4210 = vpop.f32.mrf.mxu0
    %v4211 = vadd.f32 %v4127, %v4210
    %v4212 = vpop.f32.mrf.mxu0
    %4213 = vdwg.mxu0
    %vm4214 = vcmask 523264
    %4215 = vst.msk [vmem:[#allocation13] sm:$0xff] %vm4214, %v4206
    %4216 = vst.msk [vmem:[#allocation13 + $0x8] sm:$0xff] %vm4214, %v4211
    // Predicated region
    $region66: #{tpu_custom_call.1} parent=1 // pred_check
      _
    $region67: #{tpu_custom_call.1} parent=1 // pred_check_branch
      %4218 = sbr.rel (0) target = $region69
    $region68: #{tpu_custom_call.1} parent=1 // pred_region
      %s4220 = ssub.s32 256, 256
      %4221 = vsyncadd [#allocation4], %s4220
      %s4222 = sshll.u32 [#allocation13], 4
      %s4223 = int_to_ptr.vmem [resolvable:$true] %s4222
      %4228 = dma.vmem_to_hbm [thread:$0]  %s4223, 256, %s10, [#allocation4], 128, 128, 8
    $region69: #{tpu_custom_call.1} parent=1 // pred_fallthru
      _
    // Predicated region
    $region70: #{tpu_custom_call.1} parent=1 // pred_check
      _
    $region71: #{tpu_custom_call.1} parent=1 // pred_check_branch
      %4230 = sbr.rel (0) target = $region73
    $region72: #{tpu_custom_call.1} parent=1 // pred_region
      %4231 = dma.done [#allocation4], 256
    $region73: #{tpu_custom_call.1} parent=1 // pred_fallthru
      _
    %4232 = vsyncpa [#allocation3], 1
    %4233 = vsyncpa [#allocation6], 1
    %4234 = vsyncpa [#allocation9], 1
    %4235 = vsyncpa [#allocation12], 1
    %4236 = vsyncpa [#allocation4], 1

</llo_original>
